<compile_context>
chip_gen: v6e
topology: v6e:2x2x1
jax: 0.10.0
libtpu: 0.0.40
codegen_flags: <defaults>
</compile_context>

<pallas_src>
import functools

import jax
import jax.numpy as jnp
from jax.experimental import pallas as pl
from jax.experimental.pallas import tpu as pltpu

LANE = 128
SUB = 8

_VMEM_LIMIT = None


def _round_up(x, m):
    return ((x + m - 1) // m) * m


def _vmem_limit_bytes():
    """~3/4 of this generation's VMEM (96 MiB v5e/v6e, 48 MiB v7x)."""
    global _VMEM_LIMIT
    if _VMEM_LIMIT is None:
        cap = None
        try:
            cap = getattr(pltpu.get_tpu_info(), "vmem_capacity_bytes", None)
        except Exception:
            cap = None
        if not cap:
            cap = 64 * 1024 * 1024          # conservative (v7x per-TC VMEM)
        _VMEM_LIMIT = int(cap) * 3 // 4
    return _VMEM_LIMIT


# ---------------------------------------------------------------------------
# Pallas kernel: assemble stacked shifted windows once, then one big-K matmul
# per output phase, fused bias (+residual) (+relu), lane-dense stores.
# ---------------------------------------------------------------------------
def _stacked_conv_kernel(*refs, offsets, cin, m_tile, n_dots, relu, has_res):
    """offsets: tuple of (row_start, flat_offset) -- one entry per distinct
    shifted window (= per K_stack slab of cin rows).  All slices are static.

        xs[s*cin:(s+1)*cin, :] = x[row_s : row_s+cin, off_s : off_s+m_tile]
        y_d = W[d] @ xs + bias (+ residual_d) (+ relu)      d in [0, n_dots)
    """
    if has_res:
        x_ref, w_ref, b_ref, r_ref, o_ref, xs_ref = refs
    else:
        x_ref, w_ref, b_ref, o_ref, xs_ref = refs
        r_ref = None

    # One relayout per distinct shifted window (dedup'd across taps/phases).
    for s, (row, off) in enumerate(offsets):
        xs_ref[s * cin:(s + 1) * cin, :] = x_ref[0, row:row + cin,
                                                 off:off + m_tile]

    xs = xs_ref[...]                       # (K_stack, m_tile) bf16
    bias = b_ref[...]                      # (Couto, 1) f32

    for d in range(n_dots):
        y = jnp.dot(w_ref[0, d], xs,
                    preferred_element_type=jnp.float32) + bias
        if has_res:
            y = y + r_ref[0, :, d * m_tile:(d + 1) * m_tile].astype(jnp.float32)
        if relu:
            y = jnp.maximum(y, 0.0)
        o_ref[0, :, d * m_tile:(d + 1) * m_tile] = y      # dense (Couto, m) vst


def _choose_split(batch, n_phase):
    """Split the phase axis into groups so a single-sample call still exposes
    >=2 parallel grid steps (v7x has 2 TensorCores).  Gated on batch size:
    on 1-TC chips the extra step costs ~0.35us + one redundant scratch fill."""
    if n_phase > 1 and batch == 1 and n_phase % 2 == 0:
        return 2
    return 1


def _run_stacked_conv(x_flat, w_stack, b_col, offsets, cin, m_out, relu,
                      residual=None):
    """x_flat: (N, C_all, L) bf16 flattened (parity-folded, tail-padded) input.
    w_stack: (n_phase, Couto, K_stack) bf16 per-phase stacked weights.
    b_col:   (Couto, 1) f32 fused BN bias.
    residual: (N, Couto, n_phase*m_out) bf16 or None.
    Returns (N, Couto, n_phase*m_out) f32, lane-dense."""
    N, C_all, L = x_flat.shape
    n_phase, Couto, K = w_stack.shape
    n_groups = _choose_split(N, n_phase)
    n_dots = n_phase // n_groups
    cb = n_dots * m_out                      # output columns per grid step
    m_total = n_phase * m_out
    w_blocks = w_stack.reshape(n_groups, n_dots, Couto, K)

    kernel = functools.partial(
        _stacked_conv_kernel, offsets=tuple(offsets), cin=cin, m_tile=m_out,
        n_dots=n_dots, relu=relu, has_res=residual is not None)

    in_specs = [
        pl.BlockSpec((1, C_all, L), lambda n, g: (n, 0, 0)),       # per-sample x
        pl.BlockSpec((1, n_dots, Couto, K), lambda n, g: (g, 0, 0, 0)),
        pl.BlockSpec((Couto, 1), lambda n, g: (0, 0)),             # fused bias
    ]
    args = [x_flat, w_blocks, b_col]
    if residual is not None:
        in_specs.append(pl.BlockSpec((1, Couto, cb), lambda n, g: (n, 0, g)))
        args.append(residual)

    n_slabs = len(offsets)
    flops = 2 * N * n_groups * n_dots * Couto * K * m_out
    out_bytes = N * Couto * m_total * 4
    bytes_accessed = (x_flat.size * 2 + w_blocks.size * 2 + Couto * 4
                      + out_bytes
                      # in-kernel scratch assembly (vst + re-vld) per grid step
                      + 2 * N * n_groups * n_slabs * cin * m_out * 2
                      + (residual.size * 2 if residual is not None else 0))

    return pl.pallas_call(
        kernel,
        out_shape=jax.ShapeDtypeStruct((N, Couto, m_total), jnp.float32),
        grid=(N, n_groups),
        in_specs=in_specs,
        out_specs=pl.BlockSpec((1, Couto, cb), lambda n, g: (n, 0, g)),
        scratch_shapes=[pltpu.VMEM((n_slabs * cin, m_out), jnp.bfloat16)],
        compiler_params=pltpu.CompilerParams(
            dimension_semantics=("parallel", "parallel"),
            vmem_limit_bytes=_vmem_limit_bytes()),
        cost_estimate=pl.CostEstimate(flops=int(flops), transcendentals=0,
                                      bytes_accessed=int(bytes_accessed)),
    )(*args)


# ---------------------------------------------------------------------------
# Wrapper-side layout work (never 27x-inflated; batch-major throughout).
# ---------------------------------------------------------------------------
def _parity_split_channels(xpad):
    """(N, C, Dp, Hp, Wp) with even Dp/Hp/Wp -> (N, 8*C, Dp/2, Hp/2, Wp/2),
    parity-major along channels (parity p occupies rows [p*C, (p+1)*C))."""
    parts = []
    for pd in (0, 1):
        for ph in (0, 1):
            for pw in (0, 1):
                parts.append(xpad[:, :, pd::2, ph::2, pw::2])
    return jnp.concatenate(parts, axis=1)


def conv3d_bn(x, weight, scale, bias, stride, relu, residual=None):
    """3x3x3 Conv3d (padding=1, bias-free) + folded eval-mode BN (+res)(+relu).
    x: (N, Cin, D, H, W) f32 NCDHW; weight: PyTorch layout (Cout, Cin, 3, 3, 3)."""
    N, Cin, D, H, W = x.shape
    Cout = weight.shape[0]
    Couto = _round_up(Cout, SUB)

    # Fold BN scale; stack taps along the contraction dim: (Cout, 27*Cin).
    w_scaled = weight * scale[:, None, None, None, None]
    w_taps = jnp.transpose(w_scaled, (2, 3, 4, 0, 1)).reshape(27, Cout, Cin)
    w_stack = jnp.transpose(w_taps, (1, 0, 2)).reshape(Cout, 27 * Cin)
    w_stack = jnp.pad(w_stack, ((0, Couto - Cout), (0, 0)))
    w_stack = w_stack[None].astype(jnp.bfloat16)              # (1, Couto, K)
    b_col = jnp.pad(bias.reshape(Cout, 1),
                    ((0, Couto - Cout), (0, 0))).astype(jnp.float32)

    xpad = jnp.pad(x, ((0, 0), (0, 0), (1, 1), (1, 1), (1, 1))).astype(jnp.bfloat16)

    if stride == 1:
        Do, Ho, Wo = D, H, W
        Dq, Hq, Wq = D + 2, H + 2, W + 2
        x_vol = xpad                                          # (N, Cin, Dq, Hq, Wq)
    else:
        assert stride == 2 and D % 2 == 0 and H % 2 == 0 and W % 2 == 0
        Do, Ho, Wo = D // 2, H // 2, W // 2
        Dq, Hq, Wq = Do + 1, Ho + 1, Wo + 1
        x_vol = _parity_split_channels(xpad)                  # (N, 8*Cin, Dq, Hq, Wq)

    plane = Hq * Wq
    m_out = _round_up(Do * plane, LANE)

    # One (row_start, flat_offset) slab per tap; order matches w_stack columns.
    offsets = []
    for kd in range(3):
        for kh in range(3):
            for kw in range(3):
                if stride == 1:
                    row, off = 0, kd * plane + kh * Wq + kw
                else:
                    pd, qd = kd % 2, kd // 2
                    ph, qh = kh % 2, kh // 2
                    pw, qw = kw % 2, kw // 2
                    row = (pd * 4 + ph * 2 + pw) * Cin
                    off = qd * plane + qh * Wq + qw
                offsets.append((row, off))

    max_off = max(off for _, off in offsets)
    L = _round_up(max(Dq * plane, m_out + max_off), LANE)
    C_all = x_vol.shape[1]
    x_flat = x_vol.reshape(N, C_all, Dq * plane)
    x_flat = jnp.pad(x_flat, ((0, 0), (0, 0), (0, L - Dq * plane)))

    res_flat = None
    if residual is not None:                                  # (N, Cout, Do, Ho, Wo)
        r = jnp.pad(residual, ((0, 0), (0, Couto - Cout), (0, 0),
                               (0, Hq - Ho), (0, Wq - Wo)))
        r = r.reshape(N, Couto, Do * plane)
        r = jnp.pad(r, ((0, 0), (0, 0), (0, m_out - Do * plane)))
        res_flat = r.astype(jnp.bfloat16)

    out = _run_stacked_conv(x_flat, w_stack, b_col, offsets, Cin, m_out, relu,
                            res_flat)                          # (N, Couto, m_out)
    out = out[:, :Cout, :Do * plane].reshape(N, Cout, Do, Hq, Wq)
    return out[:, :, :, :Ho, :Wo]                              # batch-major, no transpose


def deconv3d_bn(x, weight, scale, bias, relu, residual=None):
    """3x3x3 ConvTranspose3d (stride=2, pad=1, output_pad=1, bias-free) +
    folded eval-mode BN (+res)(+relu) via subpixel/phase decomposition.
    x: (N, Cin, D, H, W); weight: PyTorch layout (Cin, Cout, 3, 3, 3);
    output: (N, Cout, 2D, 2H, 2W)."""
    N, Cin, D, H, W = x.shape
    Cout = weight.shape[1]
    Couto = _round_up(Cout, SUB)

    w_scaled = weight * scale[None, :, None, None, None]
    w_k = jnp.transpose(w_scaled, (2, 3, 4, 1, 0))             # (3,3,3,Cout,Cin)

    xpad = jnp.pad(x, ((0, 0), (0, 0), (0, 1), (0, 1), (0, 1))).astype(jnp.bfloat16)
    Dq, Hq, Wq = D + 1, H + 1, W + 1
    plane = Hq * Wq
    m_out = _round_up(D * plane, LANE)

    # 8 distinct shifted windows shared by all 27 taps across the 8 phases.
    offsets = [(0, qd * plane + qh * Wq + qw)
               for qd in (0, 1) for qh in (0, 1) for qw in (0, 1)]

    # Per-phase stacked weights (8, Couto, 8*Cin); unused window slots -> 0.
    # even output phase (e=0): uses shift q=0 with kernel index 1
    # odd  output phase (e=1): uses q=0 with k=2 and q=1 with k=0
    def dim_k(e, q):
        if e == 0:
            return 1 if q == 0 else None
        return 2 if q == 0 else 0

    zero_blk = jnp.zeros((Cout, Cin), w_k.dtype)
    w_phases = []
    for ed in (0, 1):
        for eh in (0, 1):
            for ew in (0, 1):
                cols = []
                for qd in (0, 1):
                    for qh in (0, 1):
                        for qw in (0, 1):
                            kd, kh, kw = dim_k(ed, qd), dim_k(eh, qh), dim_k(ew, qw)
                            if kd is None or kh is None or kw is None:
                                cols.append(zero_blk)
                            else:
                                cols.append(w_k[kd, kh, kw])
                w_phases.append(jnp.concatenate(cols, axis=1))  # (Cout, 8*Cin)
    w_stack = jnp.stack(w_phases)                               # (8, Cout, 8*Cin)
    w_stack = jnp.pad(w_stack, ((0, 0), (0, Couto - Cout), (0, 0))).astype(jnp.bfloat16)
    b_col = jnp.pad(bias.reshape(Cout, 1),
                    ((0, Couto - Cout), (0, 0))).astype(jnp.float32)

    max_off = max(off for _, off in offsets)
    L = _round_up(max(Dq * plane, m_out + max_off), LANE)
    x_flat = xpad.reshape(N, Cin, Dq * plane)
    x_flat = jnp.pad(x_flat, ((0, 0), (0, 0), (0, L - Dq * plane)))

    res_flat = None
    if residual is not None:                                    # (N, Cout, 2D, 2H, 2W)
        r = residual.reshape(N, Cout, D, 2, H, 2, W, 2)
        r = jnp.transpose(r, (0, 1, 3, 5, 7, 2, 4, 6))          # (N,Cout,ed,eh,ew,D,H,W)
        r = jnp.pad(r, ((0, 0), (0, Couto - Cout), (0, 0), (0, 0), (0, 0),
                        (0, 0), (0, 1), (0, 1)))
        r = r.reshape(N, Couto, 8, D * plane)
        r = jnp.pad(r, ((0, 0), (0, 0), (0, 0), (0, m_out - D * plane)))
        res_flat = r.reshape(N, Couto, 8 * m_out).astype(jnp.bfloat16)

    out = _run_stacked_conv(x_flat, w_stack, b_col, offsets, Cin, m_out, relu,
                            res_flat)                           # (N, Couto, 8*m_out)
    out = out[:, :Cout].reshape(N, Cout, 8, m_out)[..., :D * plane]
    out = out.reshape(N, Cout, 2, 2, 2, D, Hq, Wq)[..., :H, :W]
    out = jnp.transpose(out, (0, 1, 5, 2, 6, 3, 7, 4))          # (N,Cout,D,ed,H,eh,W,ew)
    return out.reshape(N, Cout, 2 * D, 2 * H, 2 * W)


# ---------------------------------------------------------------------------
# Parameters (deterministic synthetic init; eval-mode BN with identity running
# stats folded to scale/bias, matching the reference semantics).
# ---------------------------------------------------------------------------
def init_hourglass_params(key, in_planes):
    c = in_planes
    eps = 1e-5

    def conv_w(k, cout, cin):
        return jax.random.normal(k, (cout, cin, 3, 3, 3), jnp.float32) * 0.05

    def deconv_w(k, cin, cout):
        return jax.random.normal(k, (cin, cout, 3, 3, 3), jnp.float32) * 0.05

    def bn(k, ch):
        k1, k2 = jax.random.split(k)
        gamma = 1.0 + 0.1 * jax.random.normal(k1, (ch,), jnp.float32)
        beta = 0.1 * jax.random.normal(k2, (ch,), jnp.float32)
        running_mean = jnp.zeros((ch,), jnp.float32)
        running_var = jnp.ones((ch,), jnp.float32)
        scale = gamma / jnp.sqrt(running_var + eps)
        bias = beta - running_mean * scale
        return scale, bias

    ks = jax.random.split(key, 12)
    p = {}
    p['w1'] = conv_w(ks[0], 2 * c, c);       p['s1'], p['b1'] = bn(ks[1], 2 * c)
    p['w2'] = conv_w(ks[2], 2 * c, 2 * c);   p['s2'], p['b2'] = bn(ks[3], 2 * c)
    p['w3'] = conv_w(ks[4], 2 * c, 2 * c);   p['s3'], p['b3'] = bn(ks[5], 2 * c)
    p['w4'] = conv_w(ks[6], 2 * c, 2 * c);   p['s4'], p['b4'] = bn(ks[7], 2 * c)
    p['w5'] = deconv_w(ks[8], 2 * c, 2 * c); p['s5'], p['b5'] = bn(ks[9], 2 * c)
    p['w6'] = deconv_w(ks[10], 2 * c, c);    p['s6'], p['b6'] = bn(ks[11], c)
    return p


# ---------------------------------------------------------------------------
# Hourglass forward (matches the PyTorch module's semantics), all NCDHW.
# ---------------------------------------------------------------------------
def hourglass_forward(params, x, presqu=None, postsqu=None):
    p = params
    # conv1: stride-2 conv + BN + ReLU
    out = conv3d_bn(x, p['w1'], p['s1'], p['b1'], stride=2, relu=True)
    # conv2: conv + BN, then relu(. + postsqu) or relu(.)
    pre = conv3d_bn(out, p['w2'], p['s2'], p['b2'], stride=1, relu=True,
                    residual=postsqu)
    # conv3 / conv4: stride-2 and stride-1 conv + BN + ReLU
    out = conv3d_bn(pre, p['w3'], p['s3'], p['b3'], stride=2, relu=True)
    out = conv3d_bn(out, p['w4'], p['s4'], p['b4'], stride=1, relu=True)
    # conv5: deconv + BN, then relu(. + presqu) or relu(. + pre)
    res5 = presqu if presqu is not None else pre
    post = deconv3d_bn(out, p['w5'], p['s5'], p['b5'], relu=True, residual=res5)
    # conv6: deconv + BN (no relu)
    out = deconv3d_bn(post, p['w6'], p['s6'], p['b6'], relu=False)
    return out, pre, post


if __name__ == "__main__":
    key = jax.random.PRNGKey(0)
    kx, kp = jax.random.split(key)
    in_planes = 4
    # NCDHW cost-volume style input: (N=1, C=4, D=8, H=16, W=16)
    x = jax.random.normal(kx, (1, in_planes, 8, 16, 16), jnp.float32)
    params = init_hourglass_params(kp, in_planes)

    fwd = jax.jit(hourglass_forward)
    out, pre, post = fwd(params, x)
    out, pre, post = jax.block_until_ready((out, pre, post))

    assert out.shape == (1, in_planes, 8, 16, 16)
    assert pre.shape == (1, 2 * in_planes, 4, 8, 8)
    assert post.shape == (1, 2 * in_planes, 4, 8, 8)
    assert bool(jnp.all(jnp.isfinite(out)))
    assert bool(jnp.all(jnp.isfinite(pre)))
    assert bool(jnp.all(jnp.isfinite(post)))
    print("KERNEL_OK")
</pallas_src>

<mosaic_0001>
module attributes {stable_mosaic.version = 11 : i64} {
  func.func @_stacked_conv_kernel(%arg0: i32, %arg1: i32, %arg2: memref<1x32x512xbf16, #tpu.memory_space<vmem>>, %arg3: memref<1x1x8x108xbf16, #tpu.memory_space<vmem>>, %arg4: memref<8x1xf32, #tpu.memory_space<vmem>>, %arg5: memref<1x8x384xf32, #tpu.memory_space<vmem>>, %arg6: memref<108x384xbf16, #tpu.memory_space<vmem>>) attributes {dimension_semantics = [#tpu.dimension_semantics<parallel>, #tpu.dimension_semantics<parallel>], iteration_bounds = array<i64: 1, 1>, scalar_prefetch = 0 : i64, scratch_operands = 1 : i64, tpu.core_type = #tpu.core_type<tc>, window_params = [{transform_indices = @transform_0, window_bounds = array<i64: 1, 32, 512>}, {transform_indices = @transform_1, window_bounds = array<i64: 1, 1, 8, 108>}, {pipeline_mode = #tpu.pipeline_mode<synchronous>, transform_indices = @transform_2, window_bounds = array<i64: 8, 1>}, {transform_indices = @transform_3, window_bounds = array<i64: 1, 8, 384>}]} {
    %c0 = arith.constant 0 : index
    %c0_0 = arith.constant 0 : index
    %c0_1 = arith.constant 0 : index
    %0 = vector.load %arg2[%c0, %c0_0, %c0_1] : memref<1x32x512xbf16, #tpu.memory_space<vmem>>, vector<1x4x384xbf16>
    %1 = vector.shape_cast %0 : vector<1x4x384xbf16> to vector<4x384xbf16>
    %c0_2 = arith.constant 0 : index
    %c0_3 = arith.constant 0 : index
    %2 = vector.load %arg6[%c0_2, %c0_3] : memref<108x384xbf16, #tpu.memory_space<vmem>>, vector<4x384xbf16>
    tpu.vector_store %arg6[%c0_2, %c0_3], %1 {strides = array<i32>} : memref<108x384xbf16, #tpu.memory_space<vmem>>, vector<4x384xbf16>,
    %c0_4 = arith.constant 0 : index
    %c4 = arith.constant 4 : index
    %c0_5 = arith.constant 0 : index
    %3 = vector.load %arg2[%c0_4, %c4, %c0_5] : memref<1x32x512xbf16, #tpu.memory_space<vmem>>, vector<1x4x384xbf16>
    %4 = vector.shape_cast %3 : vector<1x4x384xbf16> to vector<4x384xbf16>
    %c4_6 = arith.constant 4 : index
    %c0_7 = arith.constant 0 : index
    %5 = vector.load %arg6[%c4_6, %c0_7] : memref<108x384xbf16, #tpu.memory_space<vmem>>, vector<4x384xbf16>
    tpu.vector_store %arg6[%c4_6, %c0_7], %4 {strides = array<i32>} : memref<108x384xbf16, #tpu.memory_space<vmem>>, vector<4x384xbf16>,
    %c0_8 = arith.constant 0 : index
    %c0_9 = arith.constant 0 : index
    %c1 = arith.constant 1 : index
    %6 = vector.load %arg2[%c0_8, %c0_9, %c1] : memref<1x32x512xbf16, #tpu.memory_space<vmem>>, vector<1x4x384xbf16>
    %7 = vector.shape_cast %6 : vector<1x4x384xbf16> to vector<4x384xbf16>
    %c8 = arith.constant 8 : index
    %c0_10 = arith.constant 0 : index
    %8 = vector.load %arg6[%c8, %c0_10] : memref<108x384xbf16, #tpu.memory_space<vmem>>, vector<4x384xbf16>
    tpu.vector_store %arg6[%c8, %c0_10], %7 {strides = array<i32>} : memref<108x384xbf16, #tpu.memory_space<vmem>>, vector<4x384xbf16>,
    %c0_11 = arith.constant 0 : index
    %c8_12 = arith.constant 8 : index
    %c0_13 = arith.constant 0 : index
    %9 = vector.load %arg2[%c0_11, %c8_12, %c0_13] : memref<1x32x512xbf16, #tpu.memory_space<vmem>>, vector<1x4x384xbf16>
    %10 = vector.shape_cast %9 : vector<1x4x384xbf16> to vector<4x384xbf16>
    %c12 = arith.constant 12 : index
    %c0_14 = arith.constant 0 : index
    %11 = vector.load %arg6[%c12, %c0_14] : memref<108x384xbf16, #tpu.memory_space<vmem>>, vector<4x384xbf16>
    tpu.vector_store %arg6[%c12, %c0_14], %10 {strides = array<i32>} : memref<108x384xbf16, #tpu.memory_space<vmem>>, vector<4x384xbf16>,
    %c0_15 = arith.constant 0 : index
    %c12_16 = arith.constant 12 : index
    %c0_17 = arith.constant 0 : index
    %12 = vector.load %arg2[%c0_15, %c12_16, %c0_17] : memref<1x32x512xbf16, #tpu.memory_space<vmem>>, vector<1x4x384xbf16>
    %13 = vector.shape_cast %12 : vector<1x4x384xbf16> to vector<4x384xbf16>
    %c16 = arith.constant 16 : index
    %c0_18 = arith.constant 0 : index
    %14 = vector.load %arg6[%c16, %c0_18] : memref<108x384xbf16, #tpu.memory_space<vmem>>, vector<4x384xbf16>
    tpu.vector_store %arg6[%c16, %c0_18], %13 {strides = array<i32>} : memref<108x384xbf16, #tpu.memory_space<vmem>>, vector<4x384xbf16>,
    %c0_19 = arith.constant 0 : index
    %c8_20 = arith.constant 8 : index
    %c1_21 = arith.constant 1 : index
    %15 = vector.load %arg2[%c0_19, %c8_20, %c1_21] : memref<1x32x512xbf16, #tpu.memory_space<vmem>>, vector<1x4x384xbf16>
    %16 = vector.shape_cast %15 : vector<1x4x384xbf16> to vector<4x384xbf16>
    %c20 = arith.constant 20 : index
    %c0_22 = arith.constant 0 : index
    %17 = vector.load %arg6[%c20, %c0_22] : memref<108x384xbf16, #tpu.memory_space<vmem>>, vector<4x384xbf16>
    tpu.vector_store %arg6[%c20, %c0_22], %16 {strides = array<i32>} : memref<108x384xbf16, #tpu.memory_space<vmem>>, vector<4x384xbf16>,
    %c0_23 = arith.constant 0 : index
    %c0_24 = arith.constant 0 : index
    %c9 = arith.constant 9 : index
    %18 = vector.load %arg2[%c0_23, %c0_24, %c9] : memref<1x32x512xbf16, #tpu.memory_space<vmem>>, vector<1x4x384xbf16>
    %19 = vector.shape_cast %18 : vector<1x4x384xbf16> to vector<4x384xbf16>
    %c24 = arith.constant 24 : index
    %c0_25 = arith.constant 0 : index
    %20 = vector.load %arg6[%c24, %c0_25] : memref<108x384xbf16, #tpu.memory_space<vmem>>, vector<4x384xbf16>
    tpu.vector_store %arg6[%c24, %c0_25], %19 {strides = array<i32>} : memref<108x384xbf16, #tpu.memory_space<vmem>>, vector<4x384xbf16>,
    %c0_26 = arith.constant 0 : index
    %c4_27 = arith.constant 4 : index
    %c9_28 = arith.constant 9 : index
    %21 = vector.load %arg2[%c0_26, %c4_27, %c9_28] : memref<1x32x512xbf16, #tpu.memory_space<vmem>>, vector<1x4x384xbf16>
    %22 = vector.shape_cast %21 : vector<1x4x384xbf16> to vector<4x384xbf16>
    %c28 = arith.constant 28 : index
    %c0_29 = arith.constant 0 : index
    %23 = vector.load %arg6[%c28, %c0_29] : memref<108x384xbf16, #tpu.memory_space<vmem>>, vector<4x384xbf16>
    tpu.vector_store %arg6[%c28, %c0_29], %22 {strides = array<i32>} : memref<108x384xbf16, #tpu.memory_space<vmem>>, vector<4x384xbf16>,
    %c0_30 = arith.constant 0 : index
    %c0_31 = arith.constant 0 : index
    %c10 = arith.constant 10 : index
    %24 = vector.load %arg2[%c0_30, %c0_31, %c10] : memref<1x32x512xbf16, #tpu.memory_space<vmem>>, vector<1x4x384xbf16>
    %25 = vector.shape_cast %24 : vector<1x4x384xbf16> to vector<4x384xbf16>
    %c32 = arith.constant 32 : index
    %c0_32 = arith.constant 0 : index
    %26 = vector.load %arg6[%c32, %c0_32] : memref<108x384xbf16, #tpu.memory_space<vmem>>, vector<4x384xbf16>
    tpu.vector_store %arg6[%c32, %c0_32], %25 {strides = array<i32>} : memref<108x384xbf16, #tpu.memory_space<vmem>>, vector<4x384xbf16>,
    %c0_33 = arith.constant 0 : index
    %c16_34 = arith.constant 16 : index
    %c0_35 = arith.constant 0 : index
    %27 = vector.load %arg2[%c0_33, %c16_34, %c0_35] : memref<1x32x512xbf16, #tpu.memory_space<vmem>>, vector<1x4x384xbf16>
    %28 = vector.shape_cast %27 : vector<1x4x384xbf16> to vector<4x384xbf16>
    %c36 = arith.constant 36 : index
    %c0_36 = arith.constant 0 : index
    %29 = vector.load %arg6[%c36, %c0_36] : memref<108x384xbf16, #tpu.memory_space<vmem>>, vector<4x384xbf16>
    tpu.vector_store %arg6[%c36, %c0_36], %28 {strides = array<i32>} : memref<108x384xbf16, #tpu.memory_space<vmem>>, vector<4x384xbf16>,
    %c0_37 = arith.constant 0 : index
    %c20_38 = arith.constant 20 : index
    %c0_39 = arith.constant 0 : index
    %30 = vector.load %arg2[%c0_37, %c20_38, %c0_39] : memref<1x32x512xbf16, #tpu.memory_space<vmem>>, vector<1x4x384xbf16>
    %31 = vector.shape_cast %30 : vector<1x4x384xbf16> to vector<4x384xbf16>
    %c40 = arith.constant 40 : index
    %c0_40 = arith.constant 0 : index
    %32 = vector.load %arg6[%c40, %c0_40] : memref<108x384xbf16, #tpu.memory_space<vmem>>, vector<4x384xbf16>
    tpu.vector_store %arg6[%c40, %c0_40], %31 {strides = array<i32>} : memref<108x384xbf16, #tpu.memory_space<vmem>>, vector<4x384xbf16>,
    %c0_41 = arith.constant 0 : index
    %c16_42 = arith.constant 16 : index
    %c1_43 = arith.constant 1 : index
    %33 = vector.load %arg2[%c0_41, %c16_42, %c1_43] : memref<1x32x512xbf16, #tpu.memory_space<vmem>>, vector<1x4x384xbf16>
    %34 = vector.shape_cast %33 : vector<1x4x384xbf16> to vector<4x384xbf16>
    %c44 = arith.constant 44 : index
    %c0_44 = arith.constant 0 : index
    %35 = vector.load %arg6[%c44, %c0_44] : memref<108x384xbf16, #tpu.memory_space<vmem>>, vector<4x384xbf16>
    tpu.vector_store %arg6[%c44, %c0_44], %34 {strides = array<i32>} : memref<108x384xbf16, #tpu.memory_space<vmem>>, vector<4x384xbf16>,
    %c0_45 = arith.constant 0 : index
    %c24_46 = arith.constant 24 : index
    %c0_47 = arith.constant 0 : index
    %36 = vector.load %arg2[%c0_45, %c24_46, %c0_47] : memref<1x32x512xbf16, #tpu.memory_space<vmem>>, vector<1x4x384xbf16>
    %37 = vector.shape_cast %36 : vector<1x4x384xbf16> to vector<4x384xbf16>
    %c48 = arith.constant 48 : index
    %c0_48 = arith.constant 0 : index
    %38 = vector.load %arg6[%c48, %c0_48] : memref<108x384xbf16, #tpu.memory_space<vmem>>, vector<4x384xbf16>
    tpu.vector_store %arg6[%c48, %c0_48], %37 {strides = array<i32>} : memref<108x384xbf16, #tpu.memory_space<vmem>>, vector<4x384xbf16>,
    %c0_49 = arith.constant 0 : index
    %c28_50 = arith.constant 28 : index
    %c0_51 = arith.constant 0 : index
    %39 = vector.load %arg2[%c0_49, %c28_50, %c0_51] : memref<1x32x512xbf16, #tpu.memory_space<vmem>>, vector<1x4x384xbf16>
    %40 = vector.shape_cast %39 : vector<1x4x384xbf16> to vector<4x384xbf16>
    %c52 = arith.constant 52 : index
    %c0_52 = arith.constant 0 : index
    %41 = vector.load %arg6[%c52, %c0_52] : memref<108x384xbf16, #tpu.memory_space<vmem>>, vector<4x384xbf16>
    tpu.vector_store %arg6[%c52, %c0_52], %40 {strides = array<i32>} : memref<108x384xbf16, #tpu.memory_space<vmem>>, vector<4x384xbf16>,
    %c0_53 = arith.constant 0 : index
    %c24_54 = arith.constant 24 : index
    %c1_55 = arith.constant 1 : index
    %42 = vector.load %arg2[%c0_53, %c24_54, %c1_55] : memref<1x32x512xbf16, #tpu.memory_space<vmem>>, vector<1x4x384xbf16>
    %43 = vector.shape_cast %42 : vector<1x4x384xbf16> to vector<4x384xbf16>
    %c56 = arith.constant 56 : index
    %c0_56 = arith.constant 0 : index
    %44 = vector.load %arg6[%c56, %c0_56] : memref<108x384xbf16, #tpu.memory_space<vmem>>, vector<4x384xbf16>
    tpu.vector_store %arg6[%c56, %c0_56], %43 {strides = array<i32>} : memref<108x384xbf16, #tpu.memory_space<vmem>>, vector<4x384xbf16>,
    %c0_57 = arith.constant 0 : index
    %c16_58 = arith.constant 16 : index
    %c9_59 = arith.constant 9 : index
    %45 = vector.load %arg2[%c0_57, %c16_58, %c9_59] : memref<1x32x512xbf16, #tpu.memory_space<vmem>>, vector<1x4x384xbf16>
    %46 = vector.shape_cast %45 : vector<1x4x384xbf16> to vector<4x384xbf16>
    %c60 = arith.constant 60 : index
    %c0_60 = arith.constant 0 : index
    %47 = vector.load %arg6[%c60, %c0_60] : memref<108x384xbf16, #tpu.memory_space<vmem>>, vector<4x384xbf16>
    tpu.vector_store %arg6[%c60, %c0_60], %46 {strides = array<i32>} : memref<108x384xbf16, #tpu.memory_space<vmem>>, vector<4x384xbf16>,
    %c0_61 = arith.constant 0 : index
    %c20_62 = arith.constant 20 : index
    %c9_63 = arith.constant 9 : index
    %48 = vector.load %arg2[%c0_61, %c20_62, %c9_63] : memref<1x32x512xbf16, #tpu.memory_space<vmem>>, vector<1x4x384xbf16>
    %49 = vector.shape_cast %48 : vector<1x4x384xbf16> to vector<4x384xbf16>
    %c64 = arith.constant 64 : index
    %c0_64 = arith.constant 0 : index
    %50 = vector.load %arg6[%c64, %c0_64] : memref<108x384xbf16, #tpu.memory_space<vmem>>, vector<4x384xbf16>
    tpu.vector_store %arg6[%c64, %c0_64], %49 {strides = array<i32>} : memref<108x384xbf16, #tpu.memory_space<vmem>>, vector<4x384xbf16>,
    %c0_65 = arith.constant 0 : index
    %c16_66 = arith.constant 16 : index
    %c10_67 = arith.constant 10 : index
    %51 = vector.load %arg2[%c0_65, %c16_66, %c10_67] : memref<1x32x512xbf16, #tpu.memory_space<vmem>>, vector<1x4x384xbf16>
    %52 = vector.shape_cast %51 : vector<1x4x384xbf16> to vector<4x384xbf16>
    %c68 = arith.constant 68 : index
    %c0_68 = arith.constant 0 : index
    %53 = vector.load %arg6[%c68, %c0_68] : memref<108x384xbf16, #tpu.memory_space<vmem>>, vector<4x384xbf16>
    tpu.vector_store %arg6[%c68, %c0_68], %52 {strides = array<i32>} : memref<108x384xbf16, #tpu.memory_space<vmem>>, vector<4x384xbf16>,
    %c0_69 = arith.constant 0 : index
    %c0_70 = arith.constant 0 : index
    %c81 = arith.constant 81 : index
    %54 = vector.load %arg2[%c0_69, %c0_70, %c81] : memref<1x32x512xbf16, #tpu.memory_space<vmem>>, vector<1x4x384xbf16>
    %55 = vector.shape_cast %54 : vector<1x4x384xbf16> to vector<4x384xbf16>
    %c72 = arith.constant 72 : index
    %c0_71 = arith.constant 0 : index
    %56 = vector.load %arg6[%c72, %c0_71] : memref<108x384xbf16, #tpu.memory_space<vmem>>, vector<4x384xbf16>
    tpu.vector_store %arg6[%c72, %c0_71], %55 {strides = array<i32>} : memref<108x384xbf16, #tpu.memory_space<vmem>>, vector<4x384xbf16>,
    %c0_72 = arith.constant 0 : index
    %c4_73 = arith.constant 4 : index
    %c81_74 = arith.constant 81 : index
    %57 = vector.load %arg2[%c0_72, %c4_73, %c81_74] : memref<1x32x512xbf16, #tpu.memory_space<vmem>>, vector<1x4x384xbf16>
    %58 = vector.shape_cast %57 : vector<1x4x384xbf16> to vector<4x384xbf16>
    %c76 = arith.constant 76 : index
    %c0_75 = arith.constant 0 : index
    %59 = vector.load %arg6[%c76, %c0_75] : memref<108x384xbf16, #tpu.memory_space<vmem>>, vector<4x384xbf16>
    tpu.vector_store %arg6[%c76, %c0_75], %58 {strides = array<i32>} : memref<108x384xbf16, #tpu.memory_space<vmem>>, vector<4x384xbf16>,
    %c0_76 = arith.constant 0 : index
    %c0_77 = arith.constant 0 : index
    %c82 = arith.constant 82 : index
    %60 = vector.load %arg2[%c0_76, %c0_77, %c82] : memref<1x32x512xbf16, #tpu.memory_space<vmem>>, vector<1x4x384xbf16>
    %61 = vector.shape_cast %60 : vector<1x4x384xbf16> to vector<4x384xbf16>
    %c80 = arith.constant 80 : index
    %c0_78 = arith.constant 0 : index
    %62 = vector.load %arg6[%c80, %c0_78] : memref<108x384xbf16, #tpu.memory_space<vmem>>, vector<4x384xbf16>
    tpu.vector_store %arg6[%c80, %c0_78], %61 {strides = array<i32>} : memref<108x384xbf16, #tpu.memory_space<vmem>>, vector<4x384xbf16>,
    %c0_79 = arith.constant 0 : index
    %c8_80 = arith.constant 8 : index
    %c81_81 = arith.constant 81 : index
    %63 = vector.load %arg2[%c0_79, %c8_80, %c81_81] : memref<1x32x512xbf16, #tpu.memory_space<vmem>>, vector<1x4x384xbf16>
    %64 = vector.shape_cast %63 : vector<1x4x384xbf16> to vector<4x384xbf16>
    %c84 = arith.constant 84 : index
    %c0_82 = arith.constant 0 : index
    %65 = vector.load %arg6[%c84, %c0_82] : memref<108x384xbf16, #tpu.memory_space<vmem>>, vector<4x384xbf16>
    tpu.vector_store %arg6[%c84, %c0_82], %64 {strides = array<i32>} : memref<108x384xbf16, #tpu.memory_space<vmem>>, vector<4x384xbf16>,
    %c0_83 = arith.constant 0 : index
    %c12_84 = arith.constant 12 : index
    %c81_85 = arith.constant 81 : index
    %66 = vector.load %arg2[%c0_83, %c12_84, %c81_85] : memref<1x32x512xbf16, #tpu.memory_space<vmem>>, vector<1x4x384xbf16>
    %67 = vector.shape_cast %66 : vector<1x4x384xbf16> to vector<4x384xbf16>
    %c88 = arith.constant 88 : index
    %c0_86 = arith.constant 0 : index
    %68 = vector.load %arg6[%c88, %c0_86] : memref<108x384xbf16, #tpu.memory_space<vmem>>, vector<4x384xbf16>
    tpu.vector_store %arg6[%c88, %c0_86], %67 {strides = array<i32>} : memref<108x384xbf16, #tpu.memory_space<vmem>>, vector<4x384xbf16>,
    %c0_87 = arith.constant 0 : index
    %c8_88 = arith.constant 8 : index
    %c82_89 = arith.constant 82 : index
    %69 = vector.load %arg2[%c0_87, %c8_88, %c82_89] : memref<1x32x512xbf16, #tpu.memory_space<vmem>>, vector<1x4x384xbf16>
    %70 = vector.shape_cast %69 : vector<1x4x384xbf16> to vector<4x384xbf16>
    %c92 = arith.constant 92 : index
    %c0_90 = arith.constant 0 : index
    %71 = vector.load %arg6[%c92, %c0_90] : memref<108x384xbf16, #tpu.memory_space<vmem>>, vector<4x384xbf16>
    tpu.vector_store %arg6[%c92, %c0_90], %70 {strides = array<i32>} : memref<108x384xbf16, #tpu.memory_space<vmem>>, vector<4x384xbf16>,
    %c0_91 = arith.constant 0 : index
    %c0_92 = arith.constant 0 : index
    %c90 = arith.constant 90 : index
    %72 = vector.load %arg2[%c0_91, %c0_92, %c90] : memref<1x32x512xbf16, #tpu.memory_space<vmem>>, vector<1x4x384xbf16>
    %73 = vector.shape_cast %72 : vector<1x4x384xbf16> to vector<4x384xbf16>
    %c96 = arith.constant 96 : index
    %c0_93 = arith.constant 0 : index
    %74 = vector.load %arg6[%c96, %c0_93] : memref<108x384xbf16, #tpu.memory_space<vmem>>, vector<4x384xbf16>
    tpu.vector_store %arg6[%c96, %c0_93], %73 {strides = array<i32>} : memref<108x384xbf16, #tpu.memory_space<vmem>>, vector<4x384xbf16>,
    %c0_94 = arith.constant 0 : index
    %c4_95 = arith.constant 4 : index
    %c90_96 = arith.constant 90 : index
    %75 = vector.load %arg2[%c0_94, %c4_95, %c90_96] : memref<1x32x512xbf16, #tpu.memory_space<vmem>>, vector<1x4x384xbf16>
    %76 = vector.shape_cast %75 : vector<1x4x384xbf16> to vector<4x384xbf16>
    %c100 = arith.constant 100 : index
    %c0_97 = arith.constant 0 : index
    %77 = vector.load %arg6[%c100, %c0_97] : memref<108x384xbf16, #tpu.memory_space<vmem>>, vector<4x384xbf16>
    tpu.vector_store %arg6[%c100, %c0_97], %76 {strides = array<i32>} : memref<108x384xbf16, #tpu.memory_space<vmem>>, vector<4x384xbf16>,
    %c0_98 = arith.constant 0 : index
    %c0_99 = arith.constant 0 : index
    %c91 = arith.constant 91 : index
    %78 = vector.load %arg2[%c0_98, %c0_99, %c91] : memref<1x32x512xbf16, #tpu.memory_space<vmem>>, vector<1x4x384xbf16>
    %79 = vector.shape_cast %78 : vector<1x4x384xbf16> to vector<4x384xbf16>
    %c104 = arith.constant 104 : index
    %c0_100 = arith.constant 0 : index
    %80 = vector.load %arg6[%c104, %c0_100] : memref<108x384xbf16, #tpu.memory_space<vmem>>, vector<4x384xbf16>
    tpu.vector_store %arg6[%c104, %c0_100], %79 {strides = array<i32>} : memref<108x384xbf16, #tpu.memory_space<vmem>>, vector<4x384xbf16>,
    %c0_101 = arith.constant 0 : index
    %c0_102 = arith.constant 0 : index
    %81 = vector.load %arg6[%c0_101, %c0_102] : memref<108x384xbf16, #tpu.memory_space<vmem>>, vector<108x384xbf16>
    %c0_103 = arith.constant 0 : index
    %c0_104 = arith.constant 0 : index
    %82 = vector.load %arg4[%c0_103, %c0_104] : memref<8x1xf32, #tpu.memory_space<vmem>>, vector<8x1xf32>
    %c0_105 = arith.constant 0 : index
    %c0_106 = arith.constant 0 : index
    %c0_107 = arith.constant 0 : index
    %c0_108 = arith.constant 0 : index
    %83 = vector.load %arg3[%c0_105, %c0_106, %c0_107, %c0_108] : memref<1x1x8x108xbf16, #tpu.memory_space<vmem>>, vector<1x1x8x108xbf16>
    %84 = vector.shape_cast %83 : vector<1x1x8x108xbf16> to vector<8x108xbf16>
    %cst = arith.constant dense<0.000000e+00> : vector<8x384xf32>
    %85 = tpu.matmul %84, %81, %cst {dimension_numbers = #tpu.dot_dimension_numbers<[1], [0], [0], [1], [0, 0, 1, 1], [], []>} : vector<8x108xbf16>, vector<108x384xbf16>, vector<8x384xf32> -> vector<8x384xf32>
    %86 = vector.broadcast %82 : vector<8x1xf32> to vector<8x384xf32>
    %87 = arith.addf %85, %86 : vector<8x384xf32>
    %cst_109 = arith.constant 0.000000e+00 : f32
    %88 = vector.broadcast %cst_109 : f32 to vector<8x384xf32>
    %89 = arith.maximumf %87, %88 : vector<8x384xf32>
    %c0_110 = arith.constant 0 : index
    %c0_111 = arith.constant 0 : index
    %c0_112 = arith.constant 0 : index
    %90 = vector.load %arg5[%c0_110, %c0_111, %c0_112] : memref<1x8x384xf32, #tpu.memory_space<vmem>>, vector<1x8x384xf32>
    %91 = vector.shape_cast %90 : vector<1x8x384xf32> to vector<8x384xf32>
    %92 = vector.shape_cast %89 : vector<8x384xf32> to vector<1x8x384xf32>
    tpu.vector_store %arg5[%c0_110, %c0_111, %c0_112], %92 {strides = array<i32>} : memref<1x8x384xf32, #tpu.memory_space<vmem>>, vector<1x8x384xf32>,
    return
  }
  func.func @transform_0(%arg0: i32, %arg1: i32) -> (i32, i32, i32) {
    %c0_i32 = arith.constant 0 : i32
    %c0_i32_0 = arith.constant 0 : i32
    %c0_i32_1 = arith.constant 0 : i32
    return %arg0, %c0_i32, %c0_i32_0 : i32, i32, i32
  }
  func.func @transform_1(%arg0: i32, %arg1: i32) -> (i32, i32, i32, i32) {
    %c0_i32 = arith.constant 0 : i32
    %c0_i32_0 = arith.constant 0 : i32
    %c0_i32_1 = arith.constant 0 : i32
    %c0_i32_2 = arith.constant 0 : i32
    return %arg1, %c0_i32, %c0_i32_0, %c0_i32_1 : i32, i32, i32, i32
  }
  func.func @transform_2(%arg0: i32, %arg1: i32) -> (i32, i32) {
    %c0_i32 = arith.constant 0 : i32
    %c0_i32_0 = arith.constant 0 : i32
    %c0_i32_1 = arith.constant 0 : i32
    return %c0_i32, %c0_i32_0 : i32, i32
  }
  func.func @transform_3(%arg0: i32, %arg1: i32) -> (i32, i32, i32) {
    %c0_i32 = arith.constant 0 : i32
    %c0_i32_0 = arith.constant 0 : i32
    return %arg0, %c0_i32, %arg1 : i32, i32, i32
  }
}

module attributes {stable_mosaic.version = 11 : i64} {
  func.func @_stacked_conv_kernel(%arg0: i32, %arg1: i32, %arg2: memref<1x8x768xbf16, #tpu.memory_space<vmem>>, %arg3: memref<1x1x8x216xbf16, #tpu.memory_space<vmem>>, %arg4: memref<8x1xf32, #tpu.memory_space<vmem>>, %arg5: memref<1x8x512xf32, #tpu.memory_space<vmem>>, %arg6: memref<216x512xbf16, #tpu.memory_space<vmem>>) attributes {dimension_semantics = [#tpu.dimension_semantics<parallel>, #tpu.dimension_semantics<parallel>], iteration_bounds = array<i64: 1, 1>, scalar_prefetch = 0 : i64, scratch_operands = 1 : i64, tpu.core_type = #tpu.core_type<tc>, window_params = [{transform_indices = @transform_0, window_bounds = array<i64: 1, 8, 768>}, {transform_indices = @transform_1, window_bounds = array<i64: 1, 1, 8, 216>}, {pipeline_mode = #tpu.pipeline_mode<synchronous>, transform_indices = @transform_2, window_bounds = array<i64: 8, 1>}, {transform_indices = @transform_3, window_bounds = array<i64: 1, 8, 512>}]} {
    %c0 = arith.constant 0 : index
    %c0_0 = arith.constant 0 : index
    %c0_1 = arith.constant 0 : index
    %0 = vector.load %arg2[%c0, %c0_0, %c0_1] : memref<1x8x768xbf16, #tpu.memory_space<vmem>>, vector<1x8x512xbf16>
    %1 = vector.shape_cast %0 : vector<1x8x512xbf16> to vector<8x512xbf16>
    %c0_2 = arith.constant 0 : index
    %c0_3 = arith.constant 0 : index
    %2 = vector.load %arg6[%c0_2, %c0_3] : memref<216x512xbf16, #tpu.memory_space<vmem>>, vector<8x512xbf16>
    tpu.vector_store %arg6[%c0_2, %c0_3], %1 {strides = array<i32>} : memref<216x512xbf16, #tpu.memory_space<vmem>>, vector<8x512xbf16>,
    %c0_4 = arith.constant 0 : index
    %c0_5 = arith.constant 0 : index
    %c1 = arith.constant 1 : index
    %3 = vector.load %arg2[%c0_4, %c0_5, %c1] : memref<1x8x768xbf16, #tpu.memory_space<vmem>>, vector<1x8x512xbf16>
    %4 = vector.shape_cast %3 : vector<1x8x512xbf16> to vector<8x512xbf16>
    %c8 = arith.constant 8 : index
    %c0_6 = arith.constant 0 : index
    %5 = vector.load %arg6[%c8, %c0_6] : memref<216x512xbf16, #tpu.memory_space<vmem>>, vector<8x512xbf16>
    tpu.vector_store %arg6[%c8, %c0_6], %4 {strides = array<i32>} : memref<216x512xbf16, #tpu.memory_space<vmem>>, vector<8x512xbf16>,
    %c0_7 = arith.constant 0 : index
    %c0_8 = arith.constant 0 : index
    %c2 = arith.constant 2 : index
    %6 = vector.load %arg2[%c0_7, %c0_8, %c2] : memref<1x8x768xbf16, #tpu.memory_space<vmem>>, vector<1x8x512xbf16>
    %7 = vector.shape_cast %6 : vector<1x8x512xbf16> to vector<8x512xbf16>
    %c16 = arith.constant 16 : index
    %c0_9 = arith.constant 0 : index
    %8 = vector.load %arg6[%c16, %c0_9] : memref<216x512xbf16, #tpu.memory_space<vmem>>, vector<8x512xbf16>
    tpu.vector_store %arg6[%c16, %c0_9], %7 {strides = array<i32>} : memref<216x512xbf16, #tpu.memory_space<vmem>>, vector<8x512xbf16>,
    %c0_10 = arith.constant 0 : index
    %c0_11 = arith.constant 0 : index
    %c10 = arith.constant 10 : index
    %9 = vector.load %arg2[%c0_10, %c0_11, %c10] : memref<1x8x768xbf16, #tpu.memory_space<vmem>>, vector<1x8x512xbf16>
    %10 = vector.shape_cast %9 : vector<1x8x512xbf16> to vector<8x512xbf16>
    %c24 = arith.constant 24 : index
    %c0_12 = arith.constant 0 : index
    %11 = vector.load %arg6[%c24, %c0_12] : memref<216x512xbf16, #tpu.memory_space<vmem>>, vector<8x512xbf16>
    tpu.vector_store %arg6[%c24, %c0_12], %10 {strides = array<i32>} : memref<216x512xbf16, #tpu.memory_space<vmem>>, vector<8x512xbf16>,
    %c0_13 = arith.constant 0 : index
    %c0_14 = arith.constant 0 : index
    %c11 = arith.constant 11 : index
    %12 = vector.load %arg2[%c0_13, %c0_14, %c11] : memref<1x8x768xbf16, #tpu.memory_space<vmem>>, vector<1x8x512xbf16>
    %13 = vector.shape_cast %12 : vector<1x8x512xbf16> to vector<8x512xbf16>
    %c32 = arith.constant 32 : index
    %c0_15 = arith.constant 0 : index
    %14 = vector.load %arg6[%c32, %c0_15] : memref<216x512xbf16, #tpu.memory_space<vmem>>, vector<8x512xbf16>
    tpu.vector_store %arg6[%c32, %c0_15], %13 {strides = array<i32>} : memref<216x512xbf16, #tpu.memory_space<vmem>>, vector<8x512xbf16>,
    %c0_16 = arith.constant 0 : index
    %c0_17 = arith.constant 0 : index
    %c12 = arith.constant 12 : index
    %15 = vector.load %arg2[%c0_16, %c0_17, %c12] : memref<1x8x768xbf16, #tpu.memory_space<vmem>>, vector<1x8x512xbf16>
    %16 = vector.shape_cast %15 : vector<1x8x512xbf16> to vector<8x512xbf16>
    %c40 = arith.constant 40 : index
    %c0_18 = arith.constant 0 : index
    %17 = vector.load %arg6[%c40, %c0_18] : memref<216x512xbf16, #tpu.memory_space<vmem>>, vector<8x512xbf16>
    tpu.vector_store %arg6[%c40, %c0_18], %16 {strides = array<i32>} : memref<216x512xbf16, #tpu.memory_space<vmem>>, vector<8x512xbf16>,
    %c0_19 = arith.constant 0 : index
    %c0_20 = arith.constant 0 : index
    %c20 = arith.constant 20 : index
    %18 = vector.load %arg2[%c0_19, %c0_20, %c20] : memref<1x8x768xbf16, #tpu.memory_space<vmem>>, vector<1x8x512xbf16>
    %19 = vector.shape_cast %18 : vector<1x8x512xbf16> to vector<8x512xbf16>
    %c48 = arith.constant 48 : index
    %c0_21 = arith.constant 0 : index
    %20 = vector.load %arg6[%c48, %c0_21] : memref<216x512xbf16, #tpu.memory_space<vmem>>, vector<8x512xbf16>
    tpu.vector_store %arg6[%c48, %c0_21], %19 {strides = array<i32>} : memref<216x512xbf16, #tpu.memory_space<vmem>>, vector<8x512xbf16>,
    %c0_22 = arith.constant 0 : index
    %c0_23 = arith.constant 0 : index
    %c21 = arith.constant 21 : index
    %21 = vector.load %arg2[%c0_22, %c0_23, %c21] : memref<1x8x768xbf16, #tpu.memory_space<vmem>>, vector<1x8x512xbf16>
    %22 = vector.shape_cast %21 : vector<1x8x512xbf16> to vector<8x512xbf16>
    %c56 = arith.constant 56 : index
    %c0_24 = arith.constant 0 : index
    %23 = vector.load %arg6[%c56, %c0_24] : memref<216x512xbf16, #tpu.memory_space<vmem>>, vector<8x512xbf16>
    tpu.vector_store %arg6[%c56, %c0_24], %22 {strides = array<i32>} : memref<216x512xbf16, #tpu.memory_space<vmem>>, vector<8x512xbf16>,
    %c0_25 = arith.constant 0 : index
    %c0_26 = arith.constant 0 : index
    %c22 = arith.constant 22 : index
    %24 = vector.load %arg2[%c0_25, %c0_26, %c22] : memref<1x8x768xbf16, #tpu.memory_space<vmem>>, vector<1x8x512xbf16>
    %25 = vector.shape_cast %24 : vector<1x8x512xbf16> to vector<8x512xbf16>
    %c64 = arith.constant 64 : index
    %c0_27 = arith.constant 0 : index
    %26 = vector.load %arg6[%c64, %c0_27] : memref<216x512xbf16, #tpu.memory_space<vmem>>, vector<8x512xbf16>
    tpu.vector_store %arg6[%c64, %c0_27], %25 {strides = array<i32>} : memref<216x512xbf16, #tpu.memory_space<vmem>>, vector<8x512xbf16>,
    %c0_28 = arith.constant 0 : index
    %c0_29 = arith.constant 0 : index
    %c100 = arith.constant 100 : index
    %27 = vector.load %arg2[%c0_28, %c0_29, %c100] : memref<1x8x768xbf16, #tpu.memory_space<vmem>>, vector<1x8x512xbf16>
    %28 = vector.shape_cast %27 : vector<1x8x512xbf16> to vector<8x512xbf16>
    %c72 = arith.constant 72 : index
    %c0_30 = arith.constant 0 : index
    %29 = vector.load %arg6[%c72, %c0_30] : memref<216x512xbf16, #tpu.memory_space<vmem>>, vector<8x512xbf16>
    tpu.vector_store %arg6[%c72, %c0_30], %28 {strides = array<i32>} : memref<216x512xbf16, #tpu.memory_space<vmem>>, vector<8x512xbf16>,
    %c0_31 = arith.constant 0 : index
    %c0_32 = arith.constant 0 : index
    %c101 = arith.constant 101 : index
    %30 = vector.load %arg2[%c0_31, %c0_32, %c101] : memref<1x8x768xbf16, #tpu.memory_space<vmem>>, vector<1x8x512xbf16>
    %31 = vector.shape_cast %30 : vector<1x8x512xbf16> to vector<8x512xbf16>
    %c80 = arith.constant 80 : index
    %c0_33 = arith.constant 0 : index
    %32 = vector.load %arg6[%c80, %c0_33] : memref<216x512xbf16, #tpu.memory_space<vmem>>, vector<8x512xbf16>
    tpu.vector_store %arg6[%c80, %c0_33], %31 {strides = array<i32>} : memref<216x512xbf16, #tpu.memory_space<vmem>>, vector<8x512xbf16>,
    %c0_34 = arith.constant 0 : index
    %c0_35 = arith.constant 0 : index
    %c102 = arith.constant 102 : index
    %33 = vector.load %arg2[%c0_34, %c0_35, %c102] : memref<1x8x768xbf16, #tpu.memory_space<vmem>>, vector<1x8x512xbf16>
    %34 = vector.shape_cast %33 : vector<1x8x512xbf16> to vector<8x512xbf16>
    %c88 = arith.constant 88 : index
    %c0_36 = arith.constant 0 : index
    %35 = vector.load %arg6[%c88, %c0_36] : memref<216x512xbf16, #tpu.memory_space<vmem>>, vector<8x512xbf16>
    tpu.vector_store %arg6[%c88, %c0_36], %34 {strides = array<i32>} : memref<216x512xbf16, #tpu.memory_space<vmem>>, vector<8x512xbf16>,
    %c0_37 = arith.constant 0 : index
    %c0_38 = arith.constant 0 : index
    %c110 = arith.constant 110 : index
    %36 = vector.load %arg2[%c0_37, %c0_38, %c110] : memref<1x8x768xbf16, #tpu.memory_space<vmem>>, vector<1x8x512xbf16>
    %37 = vector.shape_cast %36 : vector<1x8x512xbf16> to vector<8x512xbf16>
    %c96 = arith.constant 96 : index
    %c0_39 = arith.constant 0 : index
    %38 = vector.load %arg6[%c96, %c0_39] : memref<216x512xbf16, #tpu.memory_space<vmem>>, vector<8x512xbf16>
    tpu.vector_store %arg6[%c96, %c0_39], %37 {strides = array<i32>} : memref<216x512xbf16, #tpu.memory_space<vmem>>, vector<8x512xbf16>,
    %c0_40 = arith.constant 0 : index
    %c0_41 = arith.constant 0 : index
    %c111 = arith.constant 111 : index
    %39 = vector.load %arg2[%c0_40, %c0_41, %c111] : memref<1x8x768xbf16, #tpu.memory_space<vmem>>, vector<1x8x512xbf16>
    %40 = vector.shape_cast %39 : vector<1x8x512xbf16> to vector<8x512xbf16>
    %c104 = arith.constant 104 : index
    %c0_42 = arith.constant 0 : index
    %41 = vector.load %arg6[%c104, %c0_42] : memref<216x512xbf16, #tpu.memory_space<vmem>>, vector<8x512xbf16>
    tpu.vector_store %arg6[%c104, %c0_42], %40 {strides = array<i32>} : memref<216x512xbf16, #tpu.memory_space<vmem>>, vector<8x512xbf16>,
    %c0_43 = arith.constant 0 : index
    %c0_44 = arith.constant 0 : index
    %c112 = arith.constant 112 : index
    %42 = vector.load %arg2[%c0_43, %c0_44, %c112] : memref<1x8x768xbf16, #tpu.memory_space<vmem>>, vector<1x8x512xbf16>
    %43 = vector.shape_cast %42 : vector<1x8x512xbf16> to vector<8x512xbf16>
    %c112_45 = arith.constant 112 : index
    %c0_46 = arith.constant 0 : index
    %44 = vector.load %arg6[%c112_45, %c0_46] : memref<216x512xbf16, #tpu.memory_space<vmem>>, vector<8x512xbf16>
    tpu.vector_store %arg6[%c112_45, %c0_46], %43 {strides = array<i32>} : memref<216x512xbf16, #tpu.memory_space<vmem>>, vector<8x512xbf16>,
    %c0_47 = arith.constant 0 : index
    %c0_48 = arith.constant 0 : index
    %c120 = arith.constant 120 : index
    %45 = vector.load %arg2[%c0_47, %c0_48, %c120] : memref<1x8x768xbf16, #tpu.memory_space<vmem>>, vector<1x8x512xbf16>
    %46 = vector.shape_cast %45 : vector<1x8x512xbf16> to vector<8x512xbf16>
    %c120_49 = arith.constant 120 : index
    %c0_50 = arith.constant 0 : index
    %47 = vector.load %arg6[%c120_49, %c0_50] : memref<216x512xbf16, #tpu.memory_space<vmem>>, vector<8x512xbf16>
    tpu.vector_store %arg6[%c120_49, %c0_50], %46 {strides = array<i32>} : memref<216x512xbf16, #tpu.memory_space<vmem>>, vector<8x512xbf16>,
    %c0_51 = arith.constant 0 : index
    %c0_52 = arith.constant 0 : index
    %c121 = arith.constant 121 : index
    %48 = vector.load %arg2[%c0_51, %c0_52, %c121] : memref<1x8x768xbf16, #tpu.memory_space<vmem>>, vector<1x8x512xbf16>
    %49 = vector.shape_cast %48 : vector<1x8x512xbf16> to vector<8x512xbf16>
    %c128 = arith.constant 128 : index
    %c0_53 = arith.constant 0 : index
    %50 = vector.load %arg6[%c128, %c0_53] : memref<216x512xbf16, #tpu.memory_space<vmem>>, vector<8x512xbf16>
    tpu.vector_store %arg6[%c128, %c0_53], %49 {strides = array<i32>} : memref<216x512xbf16, #tpu.memory_space<vmem>>, vector<8x512xbf16>,
    %c0_54 = arith.constant 0 : index
    %c0_55 = arith.constant 0 : index
    %c122 = arith.constant 122 : index
    %51 = vector.load %arg2[%c0_54, %c0_55, %c122] : memref<1x8x768xbf16, #tpu.memory_space<vmem>>, vector<1x8x512xbf16>
    %52 = vector.shape_cast %51 : vector<1x8x512xbf16> to vector<8x512xbf16>
    %c136 = arith.constant 136 : index
    %c0_56 = arith.constant 0 : index
    %53 = vector.load %arg6[%c136, %c0_56] : memref<216x512xbf16, #tpu.memory_space<vmem>>, vector<8x512xbf16>
    tpu.vector_store %arg6[%c136, %c0_56], %52 {strides = array<i32>} : memref<216x512xbf16, #tpu.memory_space<vmem>>, vector<8x512xbf16>,
    %c0_57 = arith.constant 0 : index
    %c0_58 = arith.constant 0 : index
    %c200 = arith.constant 200 : index
    %54 = vector.load %arg2[%c0_57, %c0_58, %c200] : memref<1x8x768xbf16, #tpu.memory_space<vmem>>, vector<1x8x512xbf16>
    %55 = vector.shape_cast %54 : vector<1x8x512xbf16> to vector<8x512xbf16>
    %c144 = arith.constant 144 : index
    %c0_59 = arith.constant 0 : index
    %56 = vector.load %arg6[%c144, %c0_59] : memref<216x512xbf16, #tpu.memory_space<vmem>>, vector<8x512xbf16>
    tpu.vector_store %arg6[%c144, %c0_59], %55 {strides = array<i32>} : memref<216x512xbf16, #tpu.memory_space<vmem>>, vector<8x512xbf16>,
    %c0_60 = arith.constant 0 : index
    %c0_61 = arith.constant 0 : index
    %c201 = arith.constant 201 : index
    %57 = vector.load %arg2[%c0_60, %c0_61, %c201] : memref<1x8x768xbf16, #tpu.memory_space<vmem>>, vector<1x8x512xbf16>
    %58 = vector.shape_cast %57 : vector<1x8x512xbf16> to vector<8x512xbf16>
    %c152 = arith.constant 152 : index
    %c0_62 = arith.constant 0 : index
    %59 = vector.load %arg6[%c152, %c0_62] : memref<216x512xbf16, #tpu.memory_space<vmem>>, vector<8x512xbf16>
    tpu.vector_store %arg6[%c152, %c0_62], %58 {strides = array<i32>} : memref<216x512xbf16, #tpu.memory_space<vmem>>, vector<8x512xbf16>,
    %c0_63 = arith.constant 0 : index
    %c0_64 = arith.constant 0 : index
    %c202 = arith.constant 202 : index
    %60 = vector.load %arg2[%c0_63, %c0_64, %c202] : memref<1x8x768xbf16, #tpu.memory_space<vmem>>, vector<1x8x512xbf16>
    %61 = vector.shape_cast %60 : vector<1x8x512xbf16> to vector<8x512xbf16>
    %c160 = arith.constant 160 : index
    %c0_65 = arith.constant 0 : index
    %62 = vector.load %arg6[%c160, %c0_65] : memref<216x512xbf16, #tpu.memory_space<vmem>>, vector<8x512xbf16>
    tpu.vector_store %arg6[%c160, %c0_65], %61 {strides = array<i32>} : memref<216x512xbf16, #tpu.memory_space<vmem>>, vector<8x512xbf16>,
    %c0_66 = arith.constant 0 : index
    %c0_67 = arith.constant 0 : index
    %c210 = arith.constant 210 : index
    %63 = vector.load %arg2[%c0_66, %c0_67, %c210] : memref<1x8x768xbf16, #tpu.memory_space<vmem>>, vector<1x8x512xbf16>
    %64 = vector.shape_cast %63 : vector<1x8x512xbf16> to vector<8x512xbf16>
    %c168 = arith.constant 168 : index
    %c0_68 = arith.constant 0 : index
    %65 = vector.load %arg6[%c168, %c0_68] : memref<216x512xbf16, #tpu.memory_space<vmem>>, vector<8x512xbf16>
    tpu.vector_store %arg6[%c168, %c0_68], %64 {strides = array<i32>} : memref<216x512xbf16, #tpu.memory_space<vmem>>, vector<8x512xbf16>,
    %c0_69 = arith.constant 0 : index
    %c0_70 = arith.constant 0 : index
    %c211 = arith.constant 211 : index
    %66 = vector.load %arg2[%c0_69, %c0_70, %c211] : memref<1x8x768xbf16, #tpu.memory_space<vmem>>, vector<1x8x512xbf16>
    %67 = vector.shape_cast %66 : vector<1x8x512xbf16> to vector<8x512xbf16>
    %c176 = arith.constant 176 : index
    %c0_71 = arith.constant 0 : index
    %68 = vector.load %arg6[%c176, %c0_71] : memref<216x512xbf16, #tpu.memory_space<vmem>>, vector<8x512xbf16>
    tpu.vector_store %arg6[%c176, %c0_71], %67 {strides = array<i32>} : memref<216x512xbf16, #tpu.memory_space<vmem>>, vector<8x512xbf16>,
    %c0_72 = arith.constant 0 : index
    %c0_73 = arith.constant 0 : index
    %c212 = arith.constant 212 : index
    %69 = vector.load %arg2[%c0_72, %c0_73, %c212] : memref<1x8x768xbf16, #tpu.memory_space<vmem>>, vector<1x8x512xbf16>
    %70 = vector.shape_cast %69 : vector<1x8x512xbf16> to vector<8x512xbf16>
    %c184 = arith.constant 184 : index
    %c0_74 = arith.constant 0 : index
    %71 = vector.load %arg6[%c184, %c0_74] : memref<216x512xbf16, #tpu.memory_space<vmem>>, vector<8x512xbf16>
    tpu.vector_store %arg6[%c184, %c0_74], %70 {strides = array<i32>} : memref<216x512xbf16, #tpu.memory_space<vmem>>, vector<8x512xbf16>,
    %c0_75 = arith.constant 0 : index
    %c0_76 = arith.constant 0 : index
    %c220 = arith.constant 220 : index
    %72 = vector.load %arg2[%c0_75, %c0_76, %c220] : memref<1x8x768xbf16, #tpu.memory_space<vmem>>, vector<1x8x512xbf16>
    %73 = vector.shape_cast %72 : vector<1x8x512xbf16> to vector<8x512xbf16>
    %c192 = arith.constant 192 : index
    %c0_77 = arith.constant 0 : index
    %74 = vector.load %arg6[%c192, %c0_77] : memref<216x512xbf16, #tpu.memory_space<vmem>>, vector<8x512xbf16>
    tpu.vector_store %arg6[%c192, %c0_77], %73 {strides = array<i32>} : memref<216x512xbf16, #tpu.memory_space<vmem>>, vector<8x512xbf16>,
    %c0_78 = arith.constant 0 : index
    %c0_79 = arith.constant 0 : index
    %c221 = arith.constant 221 : index
    %75 = vector.load %arg2[%c0_78, %c0_79, %c221] : memref<1x8x768xbf16, #tpu.memory_space<vmem>>, vector<1x8x512xbf16>
    %76 = vector.shape_cast %75 : vector<1x8x512xbf16> to vector<8x512xbf16>
    %c200_80 = arith.constant 200 : index
    %c0_81 = arith.constant 0 : index
    %77 = vector.load %arg6[%c200_80, %c0_81] : memref<216x512xbf16, #tpu.memory_space<vmem>>, vector<8x512xbf16>
    tpu.vector_store %arg6[%c200_80, %c0_81], %76 {strides = array<i32>} : memref<216x512xbf16, #tpu.memory_space<vmem>>, vector<8x512xbf16>,
    %c0_82 = arith.constant 0 : index
    %c0_83 = arith.constant 0 : index
    %c222 = arith.constant 222 : index
    %78 = vector.load %arg2[%c0_82, %c0_83, %c222] : memref<1x8x768xbf16, #tpu.memory_space<vmem>>, vector<1x8x512xbf16>
    %79 = vector.shape_cast %78 : vector<1x8x512xbf16> to vector<8x512xbf16>
    %c208 = arith.constant 208 : index
    %c0_84 = arith.constant 0 : index
    %80 = vector.load %arg6[%c208, %c0_84] : memref<216x512xbf16, #tpu.memory_space<vmem>>, vector<8x512xbf16>
    tpu.vector_store %arg6[%c208, %c0_84], %79 {strides = array<i32>} : memref<216x512xbf16, #tpu.memory_space<vmem>>, vector<8x512xbf16>,
    %c0_85 = arith.constant 0 : index
    %c0_86 = arith.constant 0 : index
    %81 = vector.load %arg6[%c0_85, %c0_86] : memref<216x512xbf16, #tpu.memory_space<vmem>>, vector<216x512xbf16>
    %c0_87 = arith.constant 0 : index
    %c0_88 = arith.constant 0 : index
    %82 = vector.load %arg4[%c0_87, %c0_88] : memref<8x1xf32, #tpu.memory_space<vmem>>, vector<8x1xf32>
    %c0_89 = arith.constant 0 : index
    %c0_90 = arith.constant 0 : index
    %c0_91 = arith.constant 0 : index
    %c0_92 = arith.constant 0 : index
    %83 = vector.load %arg3[%c0_89, %c0_90, %c0_91, %c0_92] : memref<1x1x8x216xbf16, #tpu.memory_space<vmem>>, vector<1x1x8x216xbf16>
    %84 = vector.shape_cast %83 : vector<1x1x8x216xbf16> to vector<8x216xbf16>
    %cst = arith.constant dense<0.000000e+00> : vector<8x512xf32>
    %85 = tpu.matmul %84, %81, %cst {dimension_numbers = #tpu.dot_dimension_numbers<[1], [0], [0], [1], [0, 0, 1, 1], [], []>} : vector<8x216xbf16>, vector<216x512xbf16>, vector<8x512xf32> -> vector<8x512xf32>
    %86 = vector.broadcast %82 : vector<8x1xf32> to vector<8x512xf32>
    %87 = arith.addf %85, %86 : vector<8x512xf32>
    %cst_93 = arith.constant 0.000000e+00 : f32
    %88 = vector.broadcast %cst_93 : f32 to vector<8x512xf32>
    %89 = arith.maximumf %87, %88 : vector<8x512xf32>
    %c0_94 = arith.constant 0 : index
    %c0_95 = arith.constant 0 : index
    %c0_96 = arith.constant 0 : index
    %90 = vector.load %arg5[%c0_94, %c0_95, %c0_96] : memref<1x8x512xf32, #tpu.memory_space<vmem>>, vector<1x8x512xf32>
    %91 = vector.shape_cast %90 : vector<1x8x512xf32> to vector<8x512xf32>
    %92 = vector.shape_cast %89 : vector<8x512xf32> to vector<1x8x512xf32>
    tpu.vector_store %arg5[%c0_94, %c0_95, %c0_96], %92 {strides = array<i32>} : memref<1x8x512xf32, #tpu.memory_space<vmem>>, vector<1x8x512xf32>,
    return
  }
  func.func @transform_0(%arg0: i32, %arg1: i32) -> (i32, i32, i32) {
    %c0_i32 = arith.constant 0 : i32
    %c0_i32_0 = arith.constant 0 : i32
    %c0_i32_1 = arith.constant 0 : i32
    return %arg0, %c0_i32, %c0_i32_0 : i32, i32, i32
  }
  func.func @transform_1(%arg0: i32, %arg1: i32) -> (i32, i32, i32, i32) {
    %c0_i32 = arith.constant 0 : i32
    %c0_i32_0 = arith.constant 0 : i32
    %c0_i32_1 = arith.constant 0 : i32
    %c0_i32_2 = arith.constant 0 : i32
    return %arg1, %c0_i32, %c0_i32_0, %c0_i32_1 : i32, i32, i32, i32
  }
  func.func @transform_2(%arg0: i32, %arg1: i32) -> (i32, i32) {
    %c0_i32 = arith.constant 0 : i32
    %c0_i32_0 = arith.constant 0 : i32
    %c0_i32_1 = arith.constant 0 : i32
    return %c0_i32, %c0_i32_0 : i32, i32
  }
  func.func @transform_3(%arg0: i32, %arg1: i32) -> (i32, i32, i32) {
    %c0_i32 = arith.constant 0 : i32
    %c0_i32_0 = arith.constant 0 : i32
    return %arg0, %c0_i32, %arg1 : i32, i32, i32
  }
}

module attributes {stable_mosaic.version = 11 : i64} {
  func.func @_stacked_conv_kernel(%arg0: i32, %arg1: i32, %arg2: memref<1x64x256xbf16, #tpu.memory_space<vmem>>, %arg3: memref<1x1x8x216xbf16, #tpu.memory_space<vmem>>, %arg4: memref<8x1xf32, #tpu.memory_space<vmem>>, %arg5: memref<1x8x128xf32, #tpu.memory_space<vmem>>, %arg6: memref<216x128xbf16, #tpu.memory_space<vmem>>) attributes {dimension_semantics = [#tpu.dimension_semantics<parallel>, #tpu.dimension_semantics<parallel>], iteration_bounds = array<i64: 1, 1>, scalar_prefetch = 0 : i64, scratch_operands = 1 : i64, tpu.core_type = #tpu.core_type<tc>, window_params = [{transform_indices = @transform_0, window_bounds = array<i64: 1, 64, 256>}, {transform_indices = @transform_1, window_bounds = array<i64: 1, 1, 8, 216>}, {pipeline_mode = #tpu.pipeline_mode<synchronous>, transform_indices = @transform_2, window_bounds = array<i64: 8, 1>}, {transform_indices = @transform_3, window_bounds = array<i64: 1, 8, 128>}]} {
    %c0 = arith.constant 0 : index
    %c0_0 = arith.constant 0 : index
    %c0_1 = arith.constant 0 : index
    %0 = vector.load %arg2[%c0, %c0_0, %c0_1] : memref<1x64x256xbf16, #tpu.memory_space<vmem>>, vector<1x8x128xbf16>
    %1 = vector.shape_cast %0 : vector<1x8x128xbf16> to vector<8x128xbf16>
    %c0_2 = arith.constant 0 : index
    %c0_3 = arith.constant 0 : index
    %2 = vector.load %arg6[%c0_2, %c0_3] : memref<216x128xbf16, #tpu.memory_space<vmem>>, vector<8x128xbf16>
    tpu.vector_store %arg6[%c0_2, %c0_3], %1 {strides = array<i32>} : memref<216x128xbf16, #tpu.memory_space<vmem>>, vector<8x128xbf16>,
    %c0_4 = arith.constant 0 : index
    %c8 = arith.constant 8 : index
    %c0_5 = arith.constant 0 : index
    %3 = vector.load %arg2[%c0_4, %c8, %c0_5] : memref<1x64x256xbf16, #tpu.memory_space<vmem>>, vector<1x8x128xbf16>
    %4 = vector.shape_cast %3 : vector<1x8x128xbf16> to vector<8x128xbf16>
    %c8_6 = arith.constant 8 : index
    %c0_7 = arith.constant 0 : index
    %5 = vector.load %arg6[%c8_6, %c0_7] : memref<216x128xbf16, #tpu.memory_space<vmem>>, vector<8x128xbf16>
    tpu.vector_store %arg6[%c8_6, %c0_7], %4 {strides = array<i32>} : memref<216x128xbf16, #tpu.memory_space<vmem>>, vector<8x128xbf16>,
    %c0_8 = arith.constant 0 : index
    %c0_9 = arith.constant 0 : index
    %c1 = arith.constant 1 : index
    %6 = vector.load %arg2[%c0_8, %c0_9, %c1] : memref<1x64x256xbf16, #tpu.memory_space<vmem>>, vector<1x8x128xbf16>
    %7 = vector.shape_cast %6 : vector<1x8x128xbf16> to vector<8x128xbf16>
    %c16 = arith.constant 16 : index
    %c0_10 = arith.constant 0 : index
    %8 = vector.load %arg6[%c16, %c0_10] : memref<216x128xbf16, #tpu.memory_space<vmem>>, vector<8x128xbf16>
    tpu.vector_store %arg6[%c16, %c0_10], %7 {strides = array<i32>} : memref<216x128xbf16, #tpu.memory_space<vmem>>, vector<8x128xbf16>,
    %c0_11 = arith.constant 0 : index
    %c16_12 = arith.constant 16 : index
    %c0_13 = arith.constant 0 : index
    %9 = vector.load %arg2[%c0_11, %c16_12, %c0_13] : memref<1x64x256xbf16, #tpu.memory_space<vmem>>, vector<1x8x128xbf16>
    %10 = vector.shape_cast %9 : vector<1x8x128xbf16> to vector<8x128xbf16>
    %c24 = arith.constant 24 : index
    %c0_14 = arith.constant 0 : index
    %11 = vector.load %arg6[%c24, %c0_14] : memref<216x128xbf16, #tpu.memory_space<vmem>>, vector<8x128xbf16>
    tpu.vector_store %arg6[%c24, %c0_14], %10 {strides = array<i32>} : memref<216x128xbf16, #tpu.memory_space<vmem>>, vector<8x128xbf16>,
    %c0_15 = arith.constant 0 : index
    %c24_16 = arith.constant 24 : index
    %c0_17 = arith.constant 0 : index
    %12 = vector.load %arg2[%c0_15, %c24_16, %c0_17] : memref<1x64x256xbf16, #tpu.memory_space<vmem>>, vector<1x8x128xbf16>
    %13 = vector.shape_cast %12 : vector<1x8x128xbf16> to vector<8x128xbf16>
    %c32 = arith.constant 32 : index
    %c0_18 = arith.constant 0 : index
    %14 = vector.load %arg6[%c32, %c0_18] : memref<216x128xbf16, #tpu.memory_space<vmem>>, vector<8x128xbf16>
    tpu.vector_store %arg6[%c32, %c0_18], %13 {strides = array<i32>} : memref<216x128xbf16, #tpu.memory_space<vmem>>, vector<8x128xbf16>,
    %c0_19 = arith.constant 0 : index
    %c16_20 = arith.constant 16 : index
    %c1_21 = arith.constant 1 : index
    %15 = vector.load %arg2[%c0_19, %c16_20, %c1_21] : memref<1x64x256xbf16, #tpu.memory_space<vmem>>, vector<1x8x128xbf16>
    %16 = vector.shape_cast %15 : vector<1x8x128xbf16> to vector<8x128xbf16>
    %c40 = arith.constant 40 : index
    %c0_22 = arith.constant 0 : index
    %17 = vector.load %arg6[%c40, %c0_22] : memref<216x128xbf16, #tpu.memory_space<vmem>>, vector<8x128xbf16>
    tpu.vector_store %arg6[%c40, %c0_22], %16 {strides = array<i32>} : memref<216x128xbf16, #tpu.memory_space<vmem>>, vector<8x128xbf16>,
    %c0_23 = arith.constant 0 : index
    %c0_24 = arith.constant 0 : index
    %c5 = arith.constant 5 : index
    %18 = vector.load %arg2[%c0_23, %c0_24, %c5] : memref<1x64x256xbf16, #tpu.memory_space<vmem>>, vector<1x8x128xbf16>
    %19 = vector.shape_cast %18 : vector<1x8x128xbf16> to vector<8x128xbf16>
    %c48 = arith.constant 48 : index
    %c0_25 = arith.constant 0 : index
    %20 = vector.load %arg6[%c48, %c0_25] : memref<216x128xbf16, #tpu.memory_space<vmem>>, vector<8x128xbf16>
    tpu.vector_store %arg6[%c48, %c0_25], %19 {strides = array<i32>} : memref<216x128xbf16, #tpu.memory_space<vmem>>, vector<8x128xbf16>,
    %c0_26 = arith.constant 0 : index
    %c8_27 = arith.constant 8 : index
    %c5_28 = arith.constant 5 : index
    %21 = vector.load %arg2[%c0_26, %c8_27, %c5_28] : memref<1x64x256xbf16, #tpu.memory_space<vmem>>, vector<1x8x128xbf16>
    %22 = vector.shape_cast %21 : vector<1x8x128xbf16> to vector<8x128xbf16>
    %c56 = arith.constant 56 : index
    %c0_29 = arith.constant 0 : index
    %23 = vector.load %arg6[%c56, %c0_29] : memref<216x128xbf16, #tpu.memory_space<vmem>>, vector<8x128xbf16>
    tpu.vector_store %arg6[%c56, %c0_29], %22 {strides = array<i32>} : memref<216x128xbf16, #tpu.memory_space<vmem>>, vector<8x128xbf16>,
    %c0_30 = arith.constant 0 : index
    %c0_31 = arith.constant 0 : index
    %c6 = arith.constant 6 : index
    %24 = vector.load %arg2[%c0_30, %c0_31, %c6] : memref<1x64x256xbf16, #tpu.memory_space<vmem>>, vector<1x8x128xbf16>
    %25 = vector.shape_cast %24 : vector<1x8x128xbf16> to vector<8x128xbf16>
    %c64 = arith.constant 64 : index
    %c0_32 = arith.constant 0 : index
    %26 = vector.load %arg6[%c64, %c0_32] : memref<216x128xbf16, #tpu.memory_space<vmem>>, vector<8x128xbf16>
    tpu.vector_store %arg6[%c64, %c0_32], %25 {strides = array<i32>} : memref<216x128xbf16, #tpu.memory_space<vmem>>, vector<8x128xbf16>,
    %c0_33 = arith.constant 0 : index
    %c32_34 = arith.constant 32 : index
    %c0_35 = arith.constant 0 : index
    %27 = vector.load %arg2[%c0_33, %c32_34, %c0_35] : memref<1x64x256xbf16, #tpu.memory_space<vmem>>, vector<1x8x128xbf16>
    %28 = vector.shape_cast %27 : vector<1x8x128xbf16> to vector<8x128xbf16>
    %c72 = arith.constant 72 : index
    %c0_36 = arith.constant 0 : index
    %29 = vector.load %arg6[%c72, %c0_36] : memref<216x128xbf16, #tpu.memory_space<vmem>>, vector<8x128xbf16>
    tpu.vector_store %arg6[%c72, %c0_36], %28 {strides = array<i32>} : memref<216x128xbf16, #tpu.memory_space<vmem>>, vector<8x128xbf16>,
    %c0_37 = arith.constant 0 : index
    %c40_38 = arith.constant 40 : index
    %c0_39 = arith.constant 0 : index
    %30 = vector.load %arg2[%c0_37, %c40_38, %c0_39] : memref<1x64x256xbf16, #tpu.memory_space<vmem>>, vector<1x8x128xbf16>
    %31 = vector.shape_cast %30 : vector<1x8x128xbf16> to vector<8x128xbf16>
    %c80 = arith.constant 80 : index
    %c0_40 = arith.constant 0 : index
    %32 = vector.load %arg6[%c80, %c0_40] : memref<216x128xbf16, #tpu.memory_space<vmem>>, vector<8x128xbf16>
    tpu.vector_store %arg6[%c80, %c0_40], %31 {strides = array<i32>} : memref<216x128xbf16, #tpu.memory_space<vmem>>, vector<8x128xbf16>,
    %c0_41 = arith.constant 0 : index
    %c32_42 = arith.constant 32 : index
    %c1_43 = arith.constant 1 : index
    %33 = vector.load %arg2[%c0_41, %c32_42, %c1_43] : memref<1x64x256xbf16, #tpu.memory_space<vmem>>, vector<1x8x128xbf16>
    %34 = vector.shape_cast %33 : vector<1x8x128xbf16> to vector<8x128xbf16>
    %c88 = arith.constant 88 : index
    %c0_44 = arith.constant 0 : index
    %35 = vector.load %arg6[%c88, %c0_44] : memref<216x128xbf16, #tpu.memory_space<vmem>>, vector<8x128xbf16>
    tpu.vector_store %arg6[%c88, %c0_44], %34 {strides = array<i32>} : memref<216x128xbf16, #tpu.memory_space<vmem>>, vector<8x128xbf16>,
    %c0_45 = arith.constant 0 : index
    %c48_46 = arith.constant 48 : index
    %c0_47 = arith.constant 0 : index
    %36 = vector.load %arg2[%c0_45, %c48_46, %c0_47] : memref<1x64x256xbf16, #tpu.memory_space<vmem>>, vector<1x8x128xbf16>
    %37 = vector.shape_cast %36 : vector<1x8x128xbf16> to vector<8x128xbf16>
    %c96 = arith.constant 96 : index
    %c0_48 = arith.constant 0 : index
    %38 = vector.load %arg6[%c96, %c0_48] : memref<216x128xbf16, #tpu.memory_space<vmem>>, vector<8x128xbf16>
    tpu.vector_store %arg6[%c96, %c0_48], %37 {strides = array<i32>} : memref<216x128xbf16, #tpu.memory_space<vmem>>, vector<8x128xbf16>,
    %c0_49 = arith.constant 0 : index
    %c56_50 = arith.constant 56 : index
    %c0_51 = arith.constant 0 : index
    %39 = vector.load %arg2[%c0_49, %c56_50, %c0_51] : memref<1x64x256xbf16, #tpu.memory_space<vmem>>, vector<1x8x128xbf16>
    %40 = vector.shape_cast %39 : vector<1x8x128xbf16> to vector<8x128xbf16>
    %c104 = arith.constant 104 : index
    %c0_52 = arith.constant 0 : index
    %41 = vector.load %arg6[%c104, %c0_52] : memref<216x128xbf16, #tpu.memory_space<vmem>>, vector<8x128xbf16>
    tpu.vector_store %arg6[%c104, %c0_52], %40 {strides = array<i32>} : memref<216x128xbf16, #tpu.memory_space<vmem>>, vector<8x128xbf16>,
    %c0_53 = arith.constant 0 : index
    %c48_54 = arith.constant 48 : index
    %c1_55 = arith.constant 1 : index
    %42 = vector.load %arg2[%c0_53, %c48_54, %c1_55] : memref<1x64x256xbf16, #tpu.memory_space<vmem>>, vector<1x8x128xbf16>
    %43 = vector.shape_cast %42 : vector<1x8x128xbf16> to vector<8x128xbf16>
    %c112 = arith.constant 112 : index
    %c0_56 = arith.constant 0 : index
    %44 = vector.load %arg6[%c112, %c0_56] : memref<216x128xbf16, #tpu.memory_space<vmem>>, vector<8x128xbf16>
    tpu.vector_store %arg6[%c112, %c0_56], %43 {strides = array<i32>} : memref<216x128xbf16, #tpu.memory_space<vmem>>, vector<8x128xbf16>,
    %c0_57 = arith.constant 0 : index
    %c32_58 = arith.constant 32 : index
    %c5_59 = arith.constant 5 : index
    %45 = vector.load %arg2[%c0_57, %c32_58, %c5_59] : memref<1x64x256xbf16, #tpu.memory_space<vmem>>, vector<1x8x128xbf16>
    %46 = vector.shape_cast %45 : vector<1x8x128xbf16> to vector<8x128xbf16>
    %c120 = arith.constant 120 : index
    %c0_60 = arith.constant 0 : index
    %47 = vector.load %arg6[%c120, %c0_60] : memref<216x128xbf16, #tpu.memory_space<vmem>>, vector<8x128xbf16>
    tpu.vector_store %arg6[%c120, %c0_60], %46 {strides = array<i32>} : memref<216x128xbf16, #tpu.memory_space<vmem>>, vector<8x128xbf16>,
    %c0_61 = arith.constant 0 : index
    %c40_62 = arith.constant 40 : index
    %c5_63 = arith.constant 5 : index
    %48 = vector.load %arg2[%c0_61, %c40_62, %c5_63] : memref<1x64x256xbf16, #tpu.memory_space<vmem>>, vector<1x8x128xbf16>
    %49 = vector.shape_cast %48 : vector<1x8x128xbf16> to vector<8x128xbf16>
    %c128 = arith.constant 128 : index
    %c0_64 = arith.constant 0 : index
    %50 = vector.load %arg6[%c128, %c0_64] : memref<216x128xbf16, #tpu.memory_space<vmem>>, vector<8x128xbf16>
    tpu.vector_store %arg6[%c128, %c0_64], %49 {strides = array<i32>} : memref<216x128xbf16, #tpu.memory_space<vmem>>, vector<8x128xbf16>,
    %c0_65 = arith.constant 0 : index
    %c32_66 = arith.constant 32 : index
    %c6_67 = arith.constant 6 : index
    %51 = vector.load %arg2[%c0_65, %c32_66, %c6_67] : memref<1x64x256xbf16, #tpu.memory_space<vmem>>, vector<1x8x128xbf16>
    %52 = vector.shape_cast %51 : vector<1x8x128xbf16> to vector<8x128xbf16>
    %c136 = arith.constant 136 : index
    %c0_68 = arith.constant 0 : index
    %53 = vector.load %arg6[%c136, %c0_68] : memref<216x128xbf16, #tpu.memory_space<vmem>>, vector<8x128xbf16>
    tpu.vector_store %arg6[%c136, %c0_68], %52 {strides = array<i32>} : memref<216x128xbf16, #tpu.memory_space<vmem>>, vector<8x128xbf16>,
    %c0_69 = arith.constant 0 : index
    %c0_70 = arith.constant 0 : index
    %c25 = arith.constant 25 : index
    %54 = vector.load %arg2[%c0_69, %c0_70, %c25] : memref<1x64x256xbf16, #tpu.memory_space<vmem>>, vector<1x8x128xbf16>
    %55 = vector.shape_cast %54 : vector<1x8x128xbf16> to vector<8x128xbf16>
    %c144 = arith.constant 144 : index
    %c0_71 = arith.constant 0 : index
    %56 = vector.load %arg6[%c144, %c0_71] : memref<216x128xbf16, #tpu.memory_space<vmem>>, vector<8x128xbf16>
    tpu.vector_store %arg6[%c144, %c0_71], %55 {strides = array<i32>} : memref<216x128xbf16, #tpu.memory_space<vmem>>, vector<8x128xbf16>,
    %c0_72 = arith.constant 0 : index
    %c8_73 = arith.constant 8 : index
    %c25_74 = arith.constant 25 : index
    %57 = vector.load %arg2[%c0_72, %c8_73, %c25_74] : memref<1x64x256xbf16, #tpu.memory_space<vmem>>, vector<1x8x128xbf16>
    %58 = vector.shape_cast %57 : vector<1x8x128xbf16> to vector<8x128xbf16>
    %c152 = arith.constant 152 : index
    %c0_75 = arith.constant 0 : index
    %59 = vector.load %arg6[%c152, %c0_75] : memref<216x128xbf16, #tpu.memory_space<vmem>>, vector<8x128xbf16>
    tpu.vector_store %arg6[%c152, %c0_75], %58 {strides = array<i32>} : memref<216x128xbf16, #tpu.memory_space<vmem>>, vector<8x128xbf16>,
    %c0_76 = arith.constant 0 : index
    %c0_77 = arith.constant 0 : index
    %c26 = arith.constant 26 : index
    %60 = vector.load %arg2[%c0_76, %c0_77, %c26] : memref<1x64x256xbf16, #tpu.memory_space<vmem>>, vector<1x8x128xbf16>
    %61 = vector.shape_cast %60 : vector<1x8x128xbf16> to vector<8x128xbf16>
    %c160 = arith.constant 160 : index
    %c0_78 = arith.constant 0 : index
    %62 = vector.load %arg6[%c160, %c0_78] : memref<216x128xbf16, #tpu.memory_space<vmem>>, vector<8x128xbf16>
    tpu.vector_store %arg6[%c160, %c0_78], %61 {strides = array<i32>} : memref<216x128xbf16, #tpu.memory_space<vmem>>, vector<8x128xbf16>,
    %c0_79 = arith.constant 0 : index
    %c16_80 = arith.constant 16 : index
    %c25_81 = arith.constant 25 : index
    %63 = vector.load %arg2[%c0_79, %c16_80, %c25_81] : memref<1x64x256xbf16, #tpu.memory_space<vmem>>, vector<1x8x128xbf16>
    %64 = vector.shape_cast %63 : vector<1x8x128xbf16> to vector<8x128xbf16>
    %c168 = arith.constant 168 : index
    %c0_82 = arith.constant 0 : index
    %65 = vector.load %arg6[%c168, %c0_82] : memref<216x128xbf16, #tpu.memory_space<vmem>>, vector<8x128xbf16>
    tpu.vector_store %arg6[%c168, %c0_82], %64 {strides = array<i32>} : memref<216x128xbf16, #tpu.memory_space<vmem>>, vector<8x128xbf16>,
    %c0_83 = arith.constant 0 : index
    %c24_84 = arith.constant 24 : index
    %c25_85 = arith.constant 25 : index
    %66 = vector.load %arg2[%c0_83, %c24_84, %c25_85] : memref<1x64x256xbf16, #tpu.memory_space<vmem>>, vector<1x8x128xbf16>
    %67 = vector.shape_cast %66 : vector<1x8x128xbf16> to vector<8x128xbf16>
    %c176 = arith.constant 176 : index
    %c0_86 = arith.constant 0 : index
    %68 = vector.load %arg6[%c176, %c0_86] : memref<216x128xbf16, #tpu.memory_space<vmem>>, vector<8x128xbf16>
    tpu.vector_store %arg6[%c176, %c0_86], %67 {strides = array<i32>} : memref<216x128xbf16, #tpu.memory_space<vmem>>, vector<8x128xbf16>,
    %c0_87 = arith.constant 0 : index
    %c16_88 = arith.constant 16 : index
    %c26_89 = arith.constant 26 : index
    %69 = vector.load %arg2[%c0_87, %c16_88, %c26_89] : memref<1x64x256xbf16, #tpu.memory_space<vmem>>, vector<1x8x128xbf16>
    %70 = vector.shape_cast %69 : vector<1x8x128xbf16> to vector<8x128xbf16>
    %c184 = arith.constant 184 : index
    %c0_90 = arith.constant 0 : index
    %71 = vector.load %arg6[%c184, %c0_90] : memref<216x128xbf16, #tpu.memory_space<vmem>>, vector<8x128xbf16>
    tpu.vector_store %arg6[%c184, %c0_90], %70 {strides = array<i32>} : memref<216x128xbf16, #tpu.memory_space<vmem>>, vector<8x128xbf16>,
    %c0_91 = arith.constant 0 : index
    %c0_92 = arith.constant 0 : index
    %c30 = arith.constant 30 : index
    %72 = vector.load %arg2[%c0_91, %c0_92, %c30] : memref<1x64x256xbf16, #tpu.memory_space<vmem>>, vector<1x8x128xbf16>
    %73 = vector.shape_cast %72 : vector<1x8x128xbf16> to vector<8x128xbf16>
    %c192 = arith.constant 192 : index
    %c0_93 = arith.constant 0 : index
    %74 = vector.load %arg6[%c192, %c0_93] : memref<216x128xbf16, #tpu.memory_space<vmem>>, vector<8x128xbf16>
    tpu.vector_store %arg6[%c192, %c0_93], %73 {strides = array<i32>} : memref<216x128xbf16, #tpu.memory_space<vmem>>, vector<8x128xbf16>,
    %c0_94 = arith.constant 0 : index
    %c8_95 = arith.constant 8 : index
    %c30_96 = arith.constant 30 : index
    %75 = vector.load %arg2[%c0_94, %c8_95, %c30_96] : memref<1x64x256xbf16, #tpu.memory_space<vmem>>, vector<1x8x128xbf16>
    %76 = vector.shape_cast %75 : vector<1x8x128xbf16> to vector<8x128xbf16>
    %c200 = arith.constant 200 : index
    %c0_97 = arith.constant 0 : index
    %77 = vector.load %arg6[%c200, %c0_97] : memref<216x128xbf16, #tpu.memory_space<vmem>>, vector<8x128xbf16>
    tpu.vector_store %arg6[%c200, %c0_97], %76 {strides = array<i32>} : memref<216x128xbf16, #tpu.memory_space<vmem>>, vector<8x128xbf16>,
    %c0_98 = arith.constant 0 : index
    %c0_99 = arith.constant 0 : index
    %c31 = arith.constant 31 : index
    %78 = vector.load %arg2[%c0_98, %c0_99, %c31] : memref<1x64x256xbf16, #tpu.memory_space<vmem>>, vector<1x8x128xbf16>
    %79 = vector.shape_cast %78 : vector<1x8x128xbf16> to vector<8x128xbf16>
    %c208 = arith.constant 208 : index
    %c0_100 = arith.constant 0 : index
    %80 = vector.load %arg6[%c208, %c0_100] : memref<216x128xbf16, #tpu.memory_space<vmem>>, vector<8x128xbf16>
    tpu.vector_store %arg6[%c208, %c0_100], %79 {strides = array<i32>} : memref<216x128xbf16, #tpu.memory_space<vmem>>, vector<8x128xbf16>,
    %c0_101 = arith.constant 0 : index
    %c0_102 = arith.constant 0 : index
    %81 = vector.load %arg6[%c0_101, %c0_102] : memref<216x128xbf16, #tpu.memory_space<vmem>>, vector<216x128xbf16>
    %c0_103 = arith.constant 0 : index
    %c0_104 = arith.constant 0 : index
    %82 = vector.load %arg4[%c0_103, %c0_104] : memref<8x1xf32, #tpu.memory_space<vmem>>, vector<8x1xf32>
    %c0_105 = arith.constant 0 : index
    %c0_106 = arith.constant 0 : index
    %c0_107 = arith.constant 0 : index
    %c0_108 = arith.constant 0 : index
    %83 = vector.load %arg3[%c0_105, %c0_106, %c0_107, %c0_108] : memref<1x1x8x216xbf16, #tpu.memory_space<vmem>>, vector<1x1x8x216xbf16>
    %84 = vector.shape_cast %83 : vector<1x1x8x216xbf16> to vector<8x216xbf16>
    %cst = arith.constant dense<0.000000e+00> : vector<8x128xf32>
    %85 = tpu.matmul %84, %81, %cst {dimension_numbers = #tpu.dot_dimension_numbers<[1], [0], [0], [1], [0, 0, 1, 1], [], []>} : vector<8x216xbf16>, vector<216x128xbf16>, vector<8x128xf32> -> vector<8x128xf32>
    %86 = vector.broadcast %82 : vector<8x1xf32> to vector<8x128xf32>
    %87 = arith.addf %85, %86 : vector<8x128xf32>
    %cst_109 = arith.constant 0.000000e+00 : f32
    %88 = vector.broadcast %cst_109 : f32 to vector<8x128xf32>
    %89 = arith.maximumf %87, %88 : vector<8x128xf32>
    %c0_110 = arith.constant 0 : index
    %c0_111 = arith.constant 0 : index
    %c0_112 = arith.constant 0 : index
    %90 = vector.load %arg5[%c0_110, %c0_111, %c0_112] : memref<1x8x128xf32, #tpu.memory_space<vmem>>, vector<1x8x128xf32>
    %91 = vector.shape_cast %90 : vector<1x8x128xf32> to vector<8x128xf32>
    %92 = vector.shape_cast %89 : vector<8x128xf32> to vector<1x8x128xf32>
    tpu.vector_store %arg5[%c0_110, %c0_111, %c0_112], %92 {strides = array<i32>} : memref<1x8x128xf32, #tpu.memory_space<vmem>>, vector<1x8x128xf32>,
    return
  }
  func.func @transform_0(%arg0: i32, %arg1: i32) -> (i32, i32, i32) {
    %c0_i32 = arith.constant 0 : i32
    %c0_i32_0 = arith.constant 0 : i32
    %c0_i32_1 = arith.constant 0 : i32
    return %arg0, %c0_i32, %c0_i32_0 : i32, i32, i32
  }
  func.func @transform_1(%arg0: i32, %arg1: i32) -> (i32, i32, i32, i32) {
    %c0_i32 = arith.constant 0 : i32
    %c0_i32_0 = arith.constant 0 : i32
    %c0_i32_1 = arith.constant 0 : i32
    %c0_i32_2 = arith.constant 0 : i32
    return %arg1, %c0_i32, %c0_i32_0, %c0_i32_1 : i32, i32, i32, i32
  }
  func.func @transform_2(%arg0: i32, %arg1: i32) -> (i32, i32) {
    %c0_i32 = arith.constant 0 : i32
    %c0_i32_0 = arith.constant 0 : i32
    %c0_i32_1 = arith.constant 0 : i32
    return %c0_i32, %c0_i32_0 : i32, i32
  }
  func.func @transform_3(%arg0: i32, %arg1: i32) -> (i32, i32, i32) {
    %c0_i32 = arith.constant 0 : i32
    %c0_i32_0 = arith.constant 0 : i32
    return %arg0, %c0_i32, %arg1 : i32, i32, i32
  }
}

module attributes {stable_mosaic.version = 11 : i64} {
  func.func @_stacked_conv_kernel(%arg0: i32, %arg1: i32, %arg2: memref<1x8x256xbf16, #tpu.memory_space<vmem>>, %arg3: memref<1x1x8x216xbf16, #tpu.memory_space<vmem>>, %arg4: memref<8x1xf32, #tpu.memory_space<vmem>>, %arg5: memref<1x8x128xf32, #tpu.memory_space<vmem>>, %arg6: memref<216x128xbf16, #tpu.memory_space<vmem>>) attributes {dimension_semantics = [#tpu.dimension_semantics<parallel>, #tpu.dimension_semantics<parallel>], iteration_bounds = array<i64: 1, 1>, scalar_prefetch = 0 : i64, scratch_operands = 1 : i64, tpu.core_type = #tpu.core_type<tc>, window_params = [{transform_indices = @transform_0, window_bounds = array<i64: 1, 8, 256>}, {transform_indices = @transform_1, window_bounds = array<i64: 1, 1, 8, 216>}, {pipeline_mode = #tpu.pipeline_mode<synchronous>, transform_indices = @transform_2, window_bounds = array<i64: 8, 1>}, {transform_indices = @transform_3, window_bounds = array<i64: 1, 8, 128>}]} {
    %c0 = arith.constant 0 : index
    %c0_0 = arith.constant 0 : index
    %c0_1 = arith.constant 0 : index
    %0 = vector.load %arg2[%c0, %c0_0, %c0_1] : memref<1x8x256xbf16, #tpu.memory_space<vmem>>, vector<1x8x128xbf16>
    %1 = vector.shape_cast %0 : vector<1x8x128xbf16> to vector<8x128xbf16>
    %c0_2 = arith.constant 0 : index
    %c0_3 = arith.constant 0 : index
    %2 = vector.load %arg6[%c0_2, %c0_3] : memref<216x128xbf16, #tpu.memory_space<vmem>>, vector<8x128xbf16>
    tpu.vector_store %arg6[%c0_2, %c0_3], %1 {strides = array<i32>} : memref<216x128xbf16, #tpu.memory_space<vmem>>, vector<8x128xbf16>,
    %c0_4 = arith.constant 0 : index
    %c0_5 = arith.constant 0 : index
    %c1 = arith.constant 1 : index
    %3 = vector.load %arg2[%c0_4, %c0_5, %c1] : memref<1x8x256xbf16, #tpu.memory_space<vmem>>, vector<1x8x128xbf16>
    %4 = vector.shape_cast %3 : vector<1x8x128xbf16> to vector<8x128xbf16>
    %c8 = arith.constant 8 : index
    %c0_6 = arith.constant 0 : index
    %5 = vector.load %arg6[%c8, %c0_6] : memref<216x128xbf16, #tpu.memory_space<vmem>>, vector<8x128xbf16>
    tpu.vector_store %arg6[%c8, %c0_6], %4 {strides = array<i32>} : memref<216x128xbf16, #tpu.memory_space<vmem>>, vector<8x128xbf16>,
    %c0_7 = arith.constant 0 : index
    %c0_8 = arith.constant 0 : index
    %c2 = arith.constant 2 : index
    %6 = vector.load %arg2[%c0_7, %c0_8, %c2] : memref<1x8x256xbf16, #tpu.memory_space<vmem>>, vector<1x8x128xbf16>
    %7 = vector.shape_cast %6 : vector<1x8x128xbf16> to vector<8x128xbf16>
    %c16 = arith.constant 16 : index
    %c0_9 = arith.constant 0 : index
    %8 = vector.load %arg6[%c16, %c0_9] : memref<216x128xbf16, #tpu.memory_space<vmem>>, vector<8x128xbf16>
    tpu.vector_store %arg6[%c16, %c0_9], %7 {strides = array<i32>} : memref<216x128xbf16, #tpu.memory_space<vmem>>, vector<8x128xbf16>,
    %c0_10 = arith.constant 0 : index
    %c0_11 = arith.constant 0 : index
    %c6 = arith.constant 6 : index
    %9 = vector.load %arg2[%c0_10, %c0_11, %c6] : memref<1x8x256xbf16, #tpu.memory_space<vmem>>, vector<1x8x128xbf16>
    %10 = vector.shape_cast %9 : vector<1x8x128xbf16> to vector<8x128xbf16>
    %c24 = arith.constant 24 : index
    %c0_12 = arith.constant 0 : index
    %11 = vector.load %arg6[%c24, %c0_12] : memref<216x128xbf16, #tpu.memory_space<vmem>>, vector<8x128xbf16>
    tpu.vector_store %arg6[%c24, %c0_12], %10 {strides = array<i32>} : memref<216x128xbf16, #tpu.memory_space<vmem>>, vector<8x128xbf16>,
    %c0_13 = arith.constant 0 : index
    %c0_14 = arith.constant 0 : index
    %c7 = arith.constant 7 : index
    %12 = vector.load %arg2[%c0_13, %c0_14, %c7] : memref<1x8x256xbf16, #tpu.memory_space<vmem>>, vector<1x8x128xbf16>
    %13 = vector.shape_cast %12 : vector<1x8x128xbf16> to vector<8x128xbf16>
    %c32 = arith.constant 32 : index
    %c0_15 = arith.constant 0 : index
    %14 = vector.load %arg6[%c32, %c0_15] : memref<216x128xbf16, #tpu.memory_space<vmem>>, vector<8x128xbf16>
    tpu.vector_store %arg6[%c32, %c0_15], %13 {strides = array<i32>} : memref<216x128xbf16, #tpu.memory_space<vmem>>, vector<8x128xbf16>,
    %c0_16 = arith.constant 0 : index
    %c0_17 = arith.constant 0 : index
    %c8_18 = arith.constant 8 : index
    %15 = vector.load %arg2[%c0_16, %c0_17, %c8_18] : memref<1x8x256xbf16, #tpu.memory_space<vmem>>, vector<1x8x128xbf16>
    %16 = vector.shape_cast %15 : vector<1x8x128xbf16> to vector<8x128xbf16>
    %c40 = arith.constant 40 : index
    %c0_19 = arith.constant 0 : index
    %17 = vector.load %arg6[%c40, %c0_19] : memref<216x128xbf16, #tpu.memory_space<vmem>>, vector<8x128xbf16>
    tpu.vector_store %arg6[%c40, %c0_19], %16 {strides = array<i32>} : memref<216x128xbf16, #tpu.memory_space<vmem>>, vector<8x128xbf16>,
    %c0_20 = arith.constant 0 : index
    %c0_21 = arith.constant 0 : index
    %c12 = arith.constant 12 : index
    %18 = vector.load %arg2[%c0_20, %c0_21, %c12] : memref<1x8x256xbf16, #tpu.memory_space<vmem>>, vector<1x8x128xbf16>
    %19 = vector.shape_cast %18 : vector<1x8x128xbf16> to vector<8x128xbf16>
    %c48 = arith.constant 48 : index
    %c0_22 = arith.constant 0 : index
    %20 = vector.load %arg6[%c48, %c0_22] : memref<216x128xbf16, #tpu.memory_space<vmem>>, vector<8x128xbf16>
    tpu.vector_store %arg6[%c48, %c0_22], %19 {strides = array<i32>} : memref<216x128xbf16, #tpu.memory_space<vmem>>, vector<8x128xbf16>,
    %c0_23 = arith.constant 0 : index
    %c0_24 = arith.constant 0 : index
    %c13 = arith.constant 13 : index
    %21 = vector.load %arg2[%c0_23, %c0_24, %c13] : memref<1x8x256xbf16, #tpu.memory_space<vmem>>, vector<1x8x128xbf16>
    %22 = vector.shape_cast %21 : vector<1x8x128xbf16> to vector<8x128xbf16>
    %c56 = arith.constant 56 : index
    %c0_25 = arith.constant 0 : index
    %23 = vector.load %arg6[%c56, %c0_25] : memref<216x128xbf16, #tpu.memory_space<vmem>>, vector<8x128xbf16>
    tpu.vector_store %arg6[%c56, %c0_25], %22 {strides = array<i32>} : memref<216x128xbf16, #tpu.memory_space<vmem>>, vector<8x128xbf16>,
    %c0_26 = arith.constant 0 : index
    %c0_27 = arith.constant 0 : index
    %c14 = arith.constant 14 : index
    %24 = vector.load %arg2[%c0_26, %c0_27, %c14] : memref<1x8x256xbf16, #tpu.memory_space<vmem>>, vector<1x8x128xbf16>
    %25 = vector.shape_cast %24 : vector<1x8x128xbf16> to vector<8x128xbf16>
    %c64 = arith.constant 64 : index
    %c0_28 = arith.constant 0 : index
    %26 = vector.load %arg6[%c64, %c0_28] : memref<216x128xbf16, #tpu.memory_space<vmem>>, vector<8x128xbf16>
    tpu.vector_store %arg6[%c64, %c0_28], %25 {strides = array<i32>} : memref<216x128xbf16, #tpu.memory_space<vmem>>, vector<8x128xbf16>,
    %c0_29 = arith.constant 0 : index
    %c0_30 = arith.constant 0 : index
    %c36 = arith.constant 36 : index
    %27 = vector.load %arg2[%c0_29, %c0_30, %c36] : memref<1x8x256xbf16, #tpu.memory_space<vmem>>, vector<1x8x128xbf16>
    %28 = vector.shape_cast %27 : vector<1x8x128xbf16> to vector<8x128xbf16>
    %c72 = arith.constant 72 : index
    %c0_31 = arith.constant 0 : index
    %29 = vector.load %arg6[%c72, %c0_31] : memref<216x128xbf16, #tpu.memory_space<vmem>>, vector<8x128xbf16>
    tpu.vector_store %arg6[%c72, %c0_31], %28 {strides = array<i32>} : memref<216x128xbf16, #tpu.memory_space<vmem>>, vector<8x128xbf16>,
    %c0_32 = arith.constant 0 : index
    %c0_33 = arith.constant 0 : index
    %c37 = arith.constant 37 : index
    %30 = vector.load %arg2[%c0_32, %c0_33, %c37] : memref<1x8x256xbf16, #tpu.memory_space<vmem>>, vector<1x8x128xbf16>
    %31 = vector.shape_cast %30 : vector<1x8x128xbf16> to vector<8x128xbf16>
    %c80 = arith.constant 80 : index
    %c0_34 = arith.constant 0 : index
    %32 = vector.load %arg6[%c80, %c0_34] : memref<216x128xbf16, #tpu.memory_space<vmem>>, vector<8x128xbf16>
    tpu.vector_store %arg6[%c80, %c0_34], %31 {strides = array<i32>} : memref<216x128xbf16, #tpu.memory_space<vmem>>, vector<8x128xbf16>,
    %c0_35 = arith.constant 0 : index
    %c0_36 = arith.constant 0 : index
    %c38 = arith.constant 38 : index
    %33 = vector.load %arg2[%c0_35, %c0_36, %c38] : memref<1x8x256xbf16, #tpu.memory_space<vmem>>, vector<1x8x128xbf16>
    %34 = vector.shape_cast %33 : vector<1x8x128xbf16> to vector<8x128xbf16>
    %c88 = arith.constant 88 : index
    %c0_37 = arith.constant 0 : index
    %35 = vector.load %arg6[%c88, %c0_37] : memref<216x128xbf16, #tpu.memory_space<vmem>>, vector<8x128xbf16>
    tpu.vector_store %arg6[%c88, %c0_37], %34 {strides = array<i32>} : memref<216x128xbf16, #tpu.memory_space<vmem>>, vector<8x128xbf16>,
    %c0_38 = arith.constant 0 : index
    %c0_39 = arith.constant 0 : index
    %c42 = arith.constant 42 : index
    %36 = vector.load %arg2[%c0_38, %c0_39, %c42] : memref<1x8x256xbf16, #tpu.memory_space<vmem>>, vector<1x8x128xbf16>
    %37 = vector.shape_cast %36 : vector<1x8x128xbf16> to vector<8x128xbf16>
    %c96 = arith.constant 96 : index
    %c0_40 = arith.constant 0 : index
    %38 = vector.load %arg6[%c96, %c0_40] : memref<216x128xbf16, #tpu.memory_space<vmem>>, vector<8x128xbf16>
    tpu.vector_store %arg6[%c96, %c0_40], %37 {strides = array<i32>} : memref<216x128xbf16, #tpu.memory_space<vmem>>, vector<8x128xbf16>,
    %c0_41 = arith.constant 0 : index
    %c0_42 = arith.constant 0 : index
    %c43 = arith.constant 43 : index
    %39 = vector.load %arg2[%c0_41, %c0_42, %c43] : memref<1x8x256xbf16, #tpu.memory_space<vmem>>, vector<1x8x128xbf16>
    %40 = vector.shape_cast %39 : vector<1x8x128xbf16> to vector<8x128xbf16>
    %c104 = arith.constant 104 : index
    %c0_43 = arith.constant 0 : index
    %41 = vector.load %arg6[%c104, %c0_43] : memref<216x128xbf16, #tpu.memory_space<vmem>>, vector<8x128xbf16>
    tpu.vector_store %arg6[%c104, %c0_43], %40 {strides = array<i32>} : memref<216x128xbf16, #tpu.memory_space<vmem>>, vector<8x128xbf16>,
    %c0_44 = arith.constant 0 : index
    %c0_45 = arith.constant 0 : index
    %c44 = arith.constant 44 : index
    %42 = vector.load %arg2[%c0_44, %c0_45, %c44] : memref<1x8x256xbf16, #tpu.memory_space<vmem>>, vector<1x8x128xbf16>
    %43 = vector.shape_cast %42 : vector<1x8x128xbf16> to vector<8x128xbf16>
    %c112 = arith.constant 112 : index
    %c0_46 = arith.constant 0 : index
    %44 = vector.load %arg6[%c112, %c0_46] : memref<216x128xbf16, #tpu.memory_space<vmem>>, vector<8x128xbf16>
    tpu.vector_store %arg6[%c112, %c0_46], %43 {strides = array<i32>} : memref<216x128xbf16, #tpu.memory_space<vmem>>, vector<8x128xbf16>,
    %c0_47 = arith.constant 0 : index
    %c0_48 = arith.constant 0 : index
    %c48_49 = arith.constant 48 : index
    %45 = vector.load %arg2[%c0_47, %c0_48, %c48_49] : memref<1x8x256xbf16, #tpu.memory_space<vmem>>, vector<1x8x128xbf16>
    %46 = vector.shape_cast %45 : vector<1x8x128xbf16> to vector<8x128xbf16>
    %c120 = arith.constant 120 : index
    %c0_50 = arith.constant 0 : index
    %47 = vector.load %arg6[%c120, %c0_50] : memref<216x128xbf16, #tpu.memory_space<vmem>>, vector<8x128xbf16>
    tpu.vector_store %arg6[%c120, %c0_50], %46 {strides = array<i32>} : memref<216x128xbf16, #tpu.memory_space<vmem>>, vector<8x128xbf16>,
    %c0_51 = arith.constant 0 : index
    %c0_52 = arith.constant 0 : index
    %c49 = arith.constant 49 : index
    %48 = vector.load %arg2[%c0_51, %c0_52, %c49] : memref<1x8x256xbf16, #tpu.memory_space<vmem>>, vector<1x8x128xbf16>
    %49 = vector.shape_cast %48 : vector<1x8x128xbf16> to vector<8x128xbf16>
    %c128 = arith.constant 128 : index
    %c0_53 = arith.constant 0 : index
    %50 = vector.load %arg6[%c128, %c0_53] : memref<216x128xbf16, #tpu.memory_space<vmem>>, vector<8x128xbf16>
    tpu.vector_store %arg6[%c128, %c0_53], %49 {strides = array<i32>} : memref<216x128xbf16, #tpu.memory_space<vmem>>, vector<8x128xbf16>,
    %c0_54 = arith.constant 0 : index
    %c0_55 = arith.constant 0 : index
    %c50 = arith.constant 50 : index
    %51 = vector.load %arg2[%c0_54, %c0_55, %c50] : memref<1x8x256xbf16, #tpu.memory_space<vmem>>, vector<1x8x128xbf16>
    %52 = vector.shape_cast %51 : vector<1x8x128xbf16> to vector<8x128xbf16>
    %c136 = arith.constant 136 : index
    %c0_56 = arith.constant 0 : index
    %53 = vector.load %arg6[%c136, %c0_56] : memref<216x128xbf16, #tpu.memory_space<vmem>>, vector<8x128xbf16>
    tpu.vector_store %arg6[%c136, %c0_56], %52 {strides = array<i32>} : memref<216x128xbf16, #tpu.memory_space<vmem>>, vector<8x128xbf16>,
    %c0_57 = arith.constant 0 : index
    %c0_58 = arith.constant 0 : index
    %c72_59 = arith.constant 72 : index
    %54 = vector.load %arg2[%c0_57, %c0_58, %c72_59] : memref<1x8x256xbf16, #tpu.memory_space<vmem>>, vector<1x8x128xbf16>
    %55 = vector.shape_cast %54 : vector<1x8x128xbf16> to vector<8x128xbf16>
    %c144 = arith.constant 144 : index
    %c0_60 = arith.constant 0 : index
    %56 = vector.load %arg6[%c144, %c0_60] : memref<216x128xbf16, #tpu.memory_space<vmem>>, vector<8x128xbf16>
    tpu.vector_store %arg6[%c144, %c0_60], %55 {strides = array<i32>} : memref<216x128xbf16, #tpu.memory_space<vmem>>, vector<8x128xbf16>,
    %c0_61 = arith.constant 0 : index
    %c0_62 = arith.constant 0 : index
    %c73 = arith.constant 73 : index
    %57 = vector.load %arg2[%c0_61, %c0_62, %c73] : memref<1x8x256xbf16, #tpu.memory_space<vmem>>, vector<1x8x128xbf16>
    %58 = vector.shape_cast %57 : vector<1x8x128xbf16> to vector<8x128xbf16>
    %c152 = arith.constant 152 : index
    %c0_63 = arith.constant 0 : index
    %59 = vector.load %arg6[%c152, %c0_63] : memref<216x128xbf16, #tpu.memory_space<vmem>>, vector<8x128xbf16>
    tpu.vector_store %arg6[%c152, %c0_63], %58 {strides = array<i32>} : memref<216x128xbf16, #tpu.memory_space<vmem>>, vector<8x128xbf16>,
    %c0_64 = arith.constant 0 : index
    %c0_65 = arith.constant 0 : index
    %c74 = arith.constant 74 : index
    %60 = vector.load %arg2[%c0_64, %c0_65, %c74] : memref<1x8x256xbf16, #tpu.memory_space<vmem>>, vector<1x8x128xbf16>
    %61 = vector.shape_cast %60 : vector<1x8x128xbf16> to vector<8x128xbf16>
    %c160 = arith.constant 160 : index
    %c0_66 = arith.constant 0 : index
    %62 = vector.load %arg6[%c160, %c0_66] : memref<216x128xbf16, #tpu.memory_space<vmem>>, vector<8x128xbf16>
    tpu.vector_store %arg6[%c160, %c0_66], %61 {strides = array<i32>} : memref<216x128xbf16, #tpu.memory_space<vmem>>, vector<8x128xbf16>,
    %c0_67 = arith.constant 0 : index
    %c0_68 = arith.constant 0 : index
    %c78 = arith.constant 78 : index
    %63 = vector.load %arg2[%c0_67, %c0_68, %c78] : memref<1x8x256xbf16, #tpu.memory_space<vmem>>, vector<1x8x128xbf16>
    %64 = vector.shape_cast %63 : vector<1x8x128xbf16> to vector<8x128xbf16>
    %c168 = arith.constant 168 : index
    %c0_69 = arith.constant 0 : index
    %65 = vector.load %arg6[%c168, %c0_69] : memref<216x128xbf16, #tpu.memory_space<vmem>>, vector<8x128xbf16>
    tpu.vector_store %arg6[%c168, %c0_69], %64 {strides = array<i32>} : memref<216x128xbf16, #tpu.memory_space<vmem>>, vector<8x128xbf16>,
    %c0_70 = arith.constant 0 : index
    %c0_71 = arith.constant 0 : index
    %c79 = arith.constant 79 : index
    %66 = vector.load %arg2[%c0_70, %c0_71, %c79] : memref<1x8x256xbf16, #tpu.memory_space<vmem>>, vector<1x8x128xbf16>
    %67 = vector.shape_cast %66 : vector<1x8x128xbf16> to vector<8x128xbf16>
    %c176 = arith.constant 176 : index
    %c0_72 = arith.constant 0 : index
    %68 = vector.load %arg6[%c176, %c0_72] : memref<216x128xbf16, #tpu.memory_space<vmem>>, vector<8x128xbf16>
    tpu.vector_store %arg6[%c176, %c0_72], %67 {strides = array<i32>} : memref<216x128xbf16, #tpu.memory_space<vmem>>, vector<8x128xbf16>,
    %c0_73 = arith.constant 0 : index
    %c0_74 = arith.constant 0 : index
    %c80_75 = arith.constant 80 : index
    %69 = vector.load %arg2[%c0_73, %c0_74, %c80_75] : memref<1x8x256xbf16, #tpu.memory_space<vmem>>, vector<1x8x128xbf16>
    %70 = vector.shape_cast %69 : vector<1x8x128xbf16> to vector<8x128xbf16>
    %c184 = arith.constant 184 : index
    %c0_76 = arith.constant 0 : index
    %71 = vector.load %arg6[%c184, %c0_76] : memref<216x128xbf16, #tpu.memory_space<vmem>>, vector<8x128xbf16>
    tpu.vector_store %arg6[%c184, %c0_76], %70 {strides = array<i32>} : memref<216x128xbf16, #tpu.memory_space<vmem>>, vector<8x128xbf16>,
    %c0_77 = arith.constant 0 : index
    %c0_78 = arith.constant 0 : index
    %c84 = arith.constant 84 : index
    %72 = vector.load %arg2[%c0_77, %c0_78, %c84] : memref<1x8x256xbf16, #tpu.memory_space<vmem>>, vector<1x8x128xbf16>
    %73 = vector.shape_cast %72 : vector<1x8x128xbf16> to vector<8x128xbf16>
    %c192 = arith.constant 192 : index
    %c0_79 = arith.constant 0 : index
    %74 = vector.load %arg6[%c192, %c0_79] : memref<216x128xbf16, #tpu.memory_space<vmem>>, vector<8x128xbf16>
    tpu.vector_store %arg6[%c192, %c0_79], %73 {strides = array<i32>} : memref<216x128xbf16, #tpu.memory_space<vmem>>, vector<8x128xbf16>,
    %c0_80 = arith.constant 0 : index
    %c0_81 = arith.constant 0 : index
    %c85 = arith.constant 85 : index
    %75 = vector.load %arg2[%c0_80, %c0_81, %c85] : memref<1x8x256xbf16, #tpu.memory_space<vmem>>, vector<1x8x128xbf16>
    %76 = vector.shape_cast %75 : vector<1x8x128xbf16> to vector<8x128xbf16>
    %c200 = arith.constant 200 : index
    %c0_82 = arith.constant 0 : index
    %77 = vector.load %arg6[%c200, %c0_82] : memref<216x128xbf16, #tpu.memory_space<vmem>>, vector<8x128xbf16>
    tpu.vector_store %arg6[%c200, %c0_82], %76 {strides = array<i32>} : memref<216x128xbf16, #tpu.memory_space<vmem>>, vector<8x128xbf16>,
    %c0_83 = arith.constant 0 : index
    %c0_84 = arith.constant 0 : index
    %c86 = arith.constant 86 : index
    %78 = vector.load %arg2[%c0_83, %c0_84, %c86] : memref<1x8x256xbf16, #tpu.memory_space<vmem>>, vector<1x8x128xbf16>
    %79 = vector.shape_cast %78 : vector<1x8x128xbf16> to vector<8x128xbf16>
    %c208 = arith.constant 208 : index
    %c0_85 = arith.constant 0 : index
    %80 = vector.load %arg6[%c208, %c0_85] : memref<216x128xbf16, #tpu.memory_space<vmem>>, vector<8x128xbf16>
    tpu.vector_store %arg6[%c208, %c0_85], %79 {strides = array<i32>} : memref<216x128xbf16, #tpu.memory_space<vmem>>, vector<8x128xbf16>,
    %c0_86 = arith.constant 0 : index
    %c0_87 = arith.constant 0 : index
    %81 = vector.load %arg6[%c0_86, %c0_87] : memref<216x128xbf16, #tpu.memory_space<vmem>>, vector<216x128xbf16>
    %c0_88 = arith.constant 0 : index
    %c0_89 = arith.constant 0 : index
    %82 = vector.load %arg4[%c0_88, %c0_89] : memref<8x1xf32, #tpu.memory_space<vmem>>, vector<8x1xf32>
    %c0_90 = arith.constant 0 : index
    %c0_91 = arith.constant 0 : index
    %c0_92 = arith.constant 0 : index
    %c0_93 = arith.constant 0 : index
    %83 = vector.load %arg3[%c0_90, %c0_91, %c0_92, %c0_93] : memref<1x1x8x216xbf16, #tpu.memory_space<vmem>>, vector<1x1x8x216xbf16>
    %84 = vector.shape_cast %83 : vector<1x1x8x216xbf16> to vector<8x216xbf16>
    %cst = arith.constant dense<0.000000e+00> : vector<8x128xf32>
    %85 = tpu.matmul %84, %81, %cst {dimension_numbers = #tpu.dot_dimension_numbers<[1], [0], [0], [1], [0, 0, 1, 1], [], []>} : vector<8x216xbf16>, vector<216x128xbf16>, vector<8x128xf32> -> vector<8x128xf32>
    %86 = vector.broadcast %82 : vector<8x1xf32> to vector<8x128xf32>
    %87 = arith.addf %85, %86 : vector<8x128xf32>
    %cst_94 = arith.constant 0.000000e+00 : f32
    %88 = vector.broadcast %cst_94 : f32 to vector<8x128xf32>
    %89 = arith.maximumf %87, %88 : vector<8x128xf32>
    %c0_95 = arith.constant 0 : index
    %c0_96 = arith.constant 0 : index
    %c0_97 = arith.constant 0 : index
    %90 = vector.load %arg5[%c0_95, %c0_96, %c0_97] : memref<1x8x128xf32, #tpu.memory_space<vmem>>, vector<1x8x128xf32>
    %91 = vector.shape_cast %90 : vector<1x8x128xf32> to vector<8x128xf32>
    %92 = vector.shape_cast %89 : vector<8x128xf32> to vector<1x8x128xf32>
    tpu.vector_store %arg5[%c0_95, %c0_96, %c0_97], %92 {strides = array<i32>} : memref<1x8x128xf32, #tpu.memory_space<vmem>>, vector<1x8x128xf32>,
    return
  }
  func.func @transform_0(%arg0: i32, %arg1: i32) -> (i32, i32, i32) {
    %c0_i32 = arith.constant 0 : i32
    %c0_i32_0 = arith.constant 0 : i32
    %c0_i32_1 = arith.constant 0 : i32
    return %arg0, %c0_i32, %c0_i32_0 : i32, i32, i32
  }
  func.func @transform_1(%arg0: i32, %arg1: i32) -> (i32, i32, i32, i32) {
    %c0_i32 = arith.constant 0 : i32
    %c0_i32_0 = arith.constant 0 : i32
    %c0_i32_1 = arith.constant 0 : i32
    %c0_i32_2 = arith.constant 0 : i32
    return %arg1, %c0_i32, %c0_i32_0, %c0_i32_1 : i32, i32, i32, i32
  }
  func.func @transform_2(%arg0: i32, %arg1: i32) -> (i32, i32) {
    %c0_i32 = arith.constant 0 : i32
    %c0_i32_0 = arith.constant 0 : i32
    %c0_i32_1 = arith.constant 0 : i32
    return %c0_i32, %c0_i32_0 : i32, i32
  }
  func.func @transform_3(%arg0: i32, %arg1: i32) -> (i32, i32, i32) {
    %c0_i32 = arith.constant 0 : i32
    %c0_i32_0 = arith.constant 0 : i32
    return %arg0, %c0_i32, %arg1 : i32, i32, i32
  }
}

module attributes {stable_mosaic.version = 11 : i64} {
  func.func @_stacked_conv_kernel(%arg0: i32, %arg1: i32, %arg2: memref<1x8x256xbf16, #tpu.memory_space<vmem>>, %arg3: memref<1x4x8x64xbf16, #tpu.memory_space<vmem>>, %arg4: memref<8x1xf32, #tpu.memory_space<vmem>>, %arg5: memref<1x8x512xbf16, #tpu.memory_space<vmem>>, %arg6: memref<1x8x512xf32, #tpu.memory_space<vmem>>, %arg7: memref<64x128xbf16, #tpu.memory_space<vmem>>) attributes {dimension_semantics = [#tpu.dimension_semantics<parallel>, #tpu.dimension_semantics<parallel>], iteration_bounds = array<i64: 1, 2>, scalar_prefetch = 0 : i64, scratch_operands = 1 : i64, tpu.core_type = #tpu.core_type<tc>, window_params = [{transform_indices = @transform_0, window_bounds = array<i64: 1, 8, 256>}, {transform_indices = @transform_1, window_bounds = array<i64: 1, 4, 8, 64>}, {pipeline_mode = #tpu.pipeline_mode<synchronous>, transform_indices = @transform_2, window_bounds = array<i64: 8, 1>}, {transform_indices = @transform_3, window_bounds = array<i64: 1, 8, 512>}, {transform_indices = @transform_4, window_bounds = array<i64: 1, 8, 512>}]} {
    %c0 = arith.constant 0 : index
    %c0_0 = arith.constant 0 : index
    %c0_1 = arith.constant 0 : index
    %0 = vector.load %arg2[%c0, %c0_0, %c0_1] : memref<1x8x256xbf16, #tpu.memory_space<vmem>>, vector<1x8x128xbf16>
    %1 = vector.shape_cast %0 : vector<1x8x128xbf16> to vector<8x128xbf16>
    %c0_2 = arith.constant 0 : index
    %c0_3 = arith.constant 0 : index
    %2 = vector.load %arg7[%c0_2, %c0_3] : memref<64x128xbf16, #tpu.memory_space<vmem>>, vector<8x128xbf16>
    tpu.vector_store %arg7[%c0_2, %c0_3], %1 {strides = array<i32>} : memref<64x128xbf16, #tpu.memory_space<vmem>>, vector<8x128xbf16>,
    %c0_4 = arith.constant 0 : index
    %c0_5 = arith.constant 0 : index
    %c1 = arith.constant 1 : index
    %3 = vector.load %arg2[%c0_4, %c0_5, %c1] : memref<1x8x256xbf16, #tpu.memory_space<vmem>>, vector<1x8x128xbf16>
    %4 = vector.shape_cast %3 : vector<1x8x128xbf16> to vector<8x128xbf16>
    %c8 = arith.constant 8 : index
    %c0_6 = arith.constant 0 : index
    %5 = vector.load %arg7[%c8, %c0_6] : memref<64x128xbf16, #tpu.memory_space<vmem>>, vector<8x128xbf16>
    tpu.vector_store %arg7[%c8, %c0_6], %4 {strides = array<i32>} : memref<64x128xbf16, #tpu.memory_space<vmem>>, vector<8x128xbf16>,
    %c0_7 = arith.constant 0 : index
    %c0_8 = arith.constant 0 : index
    %c5 = arith.constant 5 : index
    %6 = vector.load %arg2[%c0_7, %c0_8, %c5] : memref<1x8x256xbf16, #tpu.memory_space<vmem>>, vector<1x8x128xbf16>
    %7 = vector.shape_cast %6 : vector<1x8x128xbf16> to vector<8x128xbf16>
    %c16 = arith.constant 16 : index
    %c0_9 = arith.constant 0 : index
    %8 = vector.load %arg7[%c16, %c0_9] : memref<64x128xbf16, #tpu.memory_space<vmem>>, vector<8x128xbf16>
    tpu.vector_store %arg7[%c16, %c0_9], %7 {strides = array<i32>} : memref<64x128xbf16, #tpu.memory_space<vmem>>, vector<8x128xbf16>,
    %c0_10 = arith.constant 0 : index
    %c0_11 = arith.constant 0 : index
    %c6 = arith.constant 6 : index
    %9 = vector.load %arg2[%c0_10, %c0_11, %c6] : memref<1x8x256xbf16, #tpu.memory_space<vmem>>, vector<1x8x128xbf16>
    %10 = vector.shape_cast %9 : vector<1x8x128xbf16> to vector<8x128xbf16>
    %c24 = arith.constant 24 : index
    %c0_12 = arith.constant 0 : index
    %11 = vector.load %arg7[%c24, %c0_12] : memref<64x128xbf16, #tpu.memory_space<vmem>>, vector<8x128xbf16>
    tpu.vector_store %arg7[%c24, %c0_12], %10 {strides = array<i32>} : memref<64x128xbf16, #tpu.memory_space<vmem>>, vector<8x128xbf16>,
    %c0_13 = arith.constant 0 : index
    %c0_14 = arith.constant 0 : index
    %c25 = arith.constant 25 : index
    %12 = vector.load %arg2[%c0_13, %c0_14, %c25] : memref<1x8x256xbf16, #tpu.memory_space<vmem>>, vector<1x8x128xbf16>
    %13 = vector.shape_cast %12 : vector<1x8x128xbf16> to vector<8x128xbf16>
    %c32 = arith.constant 32 : index
    %c0_15 = arith.constant 0 : index
    %14 = vector.load %arg7[%c32, %c0_15] : memref<64x128xbf16, #tpu.memory_space<vmem>>, vector<8x128xbf16>
    tpu.vector_store %arg7[%c32, %c0_15], %13 {strides = array<i32>} : memref<64x128xbf16, #tpu.memory_space<vmem>>, vector<8x128xbf16>,
    %c0_16 = arith.constant 0 : index
    %c0_17 = arith.constant 0 : index
    %c26 = arith.constant 26 : index
    %15 = vector.load %arg2[%c0_16, %c0_17, %c26] : memref<1x8x256xbf16, #tpu.memory_space<vmem>>, vector<1x8x128xbf16>
    %16 = vector.shape_cast %15 : vector<1x8x128xbf16> to vector<8x128xbf16>
    %c40 = arith.constant 40 : index
    %c0_18 = arith.constant 0 : index
    %17 = vector.load %arg7[%c40, %c0_18] : memref<64x128xbf16, #tpu.memory_space<vmem>>, vector<8x128xbf16>
    tpu.vector_store %arg7[%c40, %c0_18], %16 {strides = array<i32>} : memref<64x128xbf16, #tpu.memory_space<vmem>>, vector<8x128xbf16>,
    %c0_19 = arith.constant 0 : index
    %c0_20 = arith.constant 0 : index
    %c30 = arith.constant 30 : index
    %18 = vector.load %arg2[%c0_19, %c0_20, %c30] : memref<1x8x256xbf16, #tpu.memory_space<vmem>>, vector<1x8x128xbf16>
    %19 = vector.shape_cast %18 : vector<1x8x128xbf16> to vector<8x128xbf16>
    %c48 = arith.constant 48 : index
    %c0_21 = arith.constant 0 : index
    %20 = vector.load %arg7[%c48, %c0_21] : memref<64x128xbf16, #tpu.memory_space<vmem>>, vector<8x128xbf16>
    tpu.vector_store %arg7[%c48, %c0_21], %19 {strides = array<i32>} : memref<64x128xbf16, #tpu.memory_space<vmem>>, vector<8x128xbf16>,
    %c0_22 = arith.constant 0 : index
    %c0_23 = arith.constant 0 : index
    %c31 = arith.constant 31 : index
    %21 = vector.load %arg2[%c0_22, %c0_23, %c31] : memref<1x8x256xbf16, #tpu.memory_space<vmem>>, vector<1x8x128xbf16>
    %22 = vector.shape_cast %21 : vector<1x8x128xbf16> to vector<8x128xbf16>
    %c56 = arith.constant 56 : index
    %c0_24 = arith.constant 0 : index
    %23 = vector.load %arg7[%c56, %c0_24] : memref<64x128xbf16, #tpu.memory_space<vmem>>, vector<8x128xbf16>
    tpu.vector_store %arg7[%c56, %c0_24], %22 {strides = array<i32>} : memref<64x128xbf16, #tpu.memory_space<vmem>>, vector<8x128xbf16>,
    %c0_25 = arith.constant 0 : index
    %c0_26 = arith.constant 0 : index
    %24 = vector.load %arg7[%c0_25, %c0_26] : memref<64x128xbf16, #tpu.memory_space<vmem>>, vector<64x128xbf16>
    %c0_27 = arith.constant 0 : index
    %c0_28 = arith.constant 0 : index
    %25 = vector.load %arg4[%c0_27, %c0_28] : memref<8x1xf32, #tpu.memory_space<vmem>>, vector<8x1xf32>
    %c0_29 = arith.constant 0 : index
    %c0_30 = arith.constant 0 : index
    %c0_31 = arith.constant 0 : index
    %c0_32 = arith.constant 0 : index
    %26 = vector.load %arg3[%c0_29, %c0_30, %c0_31, %c0_32] : memref<1x4x8x64xbf16, #tpu.memory_space<vmem>>, vector<1x1x8x64xbf16>
    %27 = vector.shape_cast %26 : vector<1x1x8x64xbf16> to vector<8x64xbf16>
    %cst = arith.constant dense<0.000000e+00> : vector<8x128xf32>
    %28 = tpu.matmul %27, %24, %cst {dimension_numbers = #tpu.dot_dimension_numbers<[1], [0], [0], [1], [0, 0, 1, 1], [], []>} : vector<8x64xbf16>, vector<64x128xbf16>, vector<8x128xf32> -> vector<8x128xf32>
    %29 = vector.broadcast %25 : vector<8x1xf32> to vector<8x128xf32>
    %30 = arith.addf %28, %29 : vector<8x128xf32>
    %c0_33 = arith.constant 0 : index
    %c0_34 = arith.constant 0 : index
    %c0_35 = arith.constant 0 : index
    %31 = vector.load %arg5[%c0_33, %c0_34, %c0_35] : memref<1x8x512xbf16, #tpu.memory_space<vmem>>, vector<1x8x128xbf16>
    %32 = vector.shape_cast %31 : vector<1x8x128xbf16> to vector<8x128xbf16>
    %33 = arith.extf %32 : vector<8x128xbf16> to vector<8x128xf32>
    %34 = arith.addf %30, %33 : vector<8x128xf32>
    %cst_36 = arith.constant 0.000000e+00 : f32
    %35 = vector.broadcast %cst_36 : f32 to vector<8x128xf32>
    %36 = arith.maximumf %34, %35 : vector<8x128xf32>
    %c0_37 = arith.constant 0 : index
    %c0_38 = arith.constant 0 : index
    %c0_39 = arith.constant 0 : index
    %37 = vector.load %arg6[%c0_37, %c0_38, %c0_39] : memref<1x8x512xf32, #tpu.memory_space<vmem>>, vector<1x8x128xf32>
    %38 = vector.shape_cast %37 : vector<1x8x128xf32> to vector<8x128xf32>
    %39 = vector.shape_cast %36 : vector<8x128xf32> to vector<1x8x128xf32>
    tpu.vector_store %arg6[%c0_37, %c0_38, %c0_39], %39 {strides = array<i32>} : memref<1x8x512xf32, #tpu.memory_space<vmem>>, vector<1x8x128xf32>,
    %c0_40 = arith.constant 0 : index
    %c1_41 = arith.constant 1 : index
    %c0_42 = arith.constant 0 : index
    %c0_43 = arith.constant 0 : index
    %40 = vector.load %arg3[%c0_40, %c1_41, %c0_42, %c0_43] : memref<1x4x8x64xbf16, #tpu.memory_space<vmem>>, vector<1x1x8x64xbf16>
    %41 = vector.shape_cast %40 : vector<1x1x8x64xbf16> to vector<8x64xbf16>
    %cst_44 = arith.constant dense<0.000000e+00> : vector<8x128xf32>
    %42 = tpu.matmul %41, %24, %cst_44 {dimension_numbers = #tpu.dot_dimension_numbers<[1], [0], [0], [1], [0, 0, 1, 1], [], []>} : vector<8x64xbf16>, vector<64x128xbf16>, vector<8x128xf32> -> vector<8x128xf32>
    %43 = vector.broadcast %25 : vector<8x1xf32> to vector<8x128xf32>
    %44 = arith.addf %42, %43 : vector<8x128xf32>
    %c0_45 = arith.constant 0 : index
    %c0_46 = arith.constant 0 : index
    %c128 = arith.constant 128 : index
    %45 = vector.load %arg5[%c0_45, %c0_46, %c128] : memref<1x8x512xbf16, #tpu.memory_space<vmem>>, vector<1x8x128xbf16>
    %46 = vector.shape_cast %45 : vector<1x8x128xbf16> to vector<8x128xbf16>
    %47 = arith.extf %46 : vector<8x128xbf16> to vector<8x128xf32>
    %48 = arith.addf %44, %47 : vector<8x128xf32>
    %cst_47 = arith.constant 0.000000e+00 : f32
    %49 = vector.broadcast %cst_47 : f32 to vector<8x128xf32>
    %50 = arith.maximumf %48, %49 : vector<8x128xf32>
    %c0_48 = arith.constant 0 : index
    %c0_49 = arith.constant 0 : index
    %c128_50 = arith.constant 128 : index
    %51 = vector.load %arg6[%c0_48, %c0_49, %c128_50] : memref<1x8x512xf32, #tpu.memory_space<vmem>>, vector<1x8x128xf32>
    %52 = vector.shape_cast %51 : vector<1x8x128xf32> to vector<8x128xf32>
    %53 = vector.shape_cast %50 : vector<8x128xf32> to vector<1x8x128xf32>
    tpu.vector_store %arg6[%c0_48, %c0_49, %c128_50], %53 {strides = array<i32>} : memref<1x8x512xf32, #tpu.memory_space<vmem>>, vector<1x8x128xf32>,
    %c0_51 = arith.constant 0 : index
    %c2 = arith.constant 2 : index
    %c0_52 = arith.constant 0 : index
    %c0_53 = arith.constant 0 : index
    %54 = vector.load %arg3[%c0_51, %c2, %c0_52, %c0_53] : memref<1x4x8x64xbf16, #tpu.memory_space<vmem>>, vector<1x1x8x64xbf16>
    %55 = vector.shape_cast %54 : vector<1x1x8x64xbf16> to vector<8x64xbf16>
    %cst_54 = arith.constant dense<0.000000e+00> : vector<8x128xf32>
    %56 = tpu.matmul %55, %24, %cst_54 {dimension_numbers = #tpu.dot_dimension_numbers<[1], [0], [0], [1], [0, 0, 1, 1], [], []>} : vector<8x64xbf16>, vector<64x128xbf16>, vector<8x128xf32> -> vector<8x128xf32>
    %57 = vector.broadcast %25 : vector<8x1xf32> to vector<8x128xf32>
    %58 = arith.addf %56, %57 : vector<8x128xf32>
    %c0_55 = arith.constant 0 : index
    %c0_56 = arith.constant 0 : index
    %c256 = arith.constant 256 : index
    %59 = vector.load %arg5[%c0_55, %c0_56, %c256] : memref<1x8x512xbf16, #tpu.memory_space<vmem>>, vector<1x8x128xbf16>
    %60 = vector.shape_cast %59 : vector<1x8x128xbf16> to vector<8x128xbf16>
    %61 = arith.extf %60 : vector<8x128xbf16> to vector<8x128xf32>
    %62 = arith.addf %58, %61 : vector<8x128xf32>
    %cst_57 = arith.constant 0.000000e+00 : f32
    %63 = vector.broadcast %cst_57 : f32 to vector<8x128xf32>
    %64 = arith.maximumf %62, %63 : vector<8x128xf32>
    %c0_58 = arith.constant 0 : index
    %c0_59 = arith.constant 0 : index
    %c256_60 = arith.constant 256 : index
    %65 = vector.load %arg6[%c0_58, %c0_59, %c256_60] : memref<1x8x512xf32, #tpu.memory_space<vmem>>, vector<1x8x128xf32>
    %66 = vector.shape_cast %65 : vector<1x8x128xf32> to vector<8x128xf32>
    %67 = vector.shape_cast %64 : vector<8x128xf32> to vector<1x8x128xf32>
    tpu.vector_store %arg6[%c0_58, %c0_59, %c256_60], %67 {strides = array<i32>} : memref<1x8x512xf32, #tpu.memory_space<vmem>>, vector<1x8x128xf32>,
    %c0_61 = arith.constant 0 : index
    %c3 = arith.constant 3 : index
    %c0_62 = arith.constant 0 : index
    %c0_63 = arith.constant 0 : index
    %68 = vector.load %arg3[%c0_61, %c3, %c0_62, %c0_63] : memref<1x4x8x64xbf16, #tpu.memory_space<vmem>>, vector<1x1x8x64xbf16>
    %69 = vector.shape_cast %68 : vector<1x1x8x64xbf16> to vector<8x64xbf16>
    %cst_64 = arith.constant dense<0.000000e+00> : vector<8x128xf32>
    %70 = tpu.matmul %69, %24, %cst_64 {dimension_numbers = #tpu.dot_dimension_numbers<[1], [0], [0], [1], [0, 0, 1, 1], [], []>} : vector<8x64xbf16>, vector<64x128xbf16>, vector<8x128xf32> -> vector<8x128xf32>
    %71 = vector.broadcast %25 : vector<8x1xf32> to vector<8x128xf32>
    %72 = arith.addf %70, %71 : vector<8x128xf32>
    %c0_65 = arith.constant 0 : index
    %c0_66 = arith.constant 0 : index
    %c384 = arith.constant 384 : index
    %73 = vector.load %arg5[%c0_65, %c0_66, %c384] : memref<1x8x512xbf16, #tpu.memory_space<vmem>>, vector<1x8x128xbf16>
    %74 = vector.shape_cast %73 : vector<1x8x128xbf16> to vector<8x128xbf16>
    %75 = arith.extf %74 : vector<8x128xbf16> to vector<8x128xf32>
    %76 = arith.addf %72, %75 : vector<8x128xf32>
    %cst_67 = arith.constant 0.000000e+00 : f32
    %77 = vector.broadcast %cst_67 : f32 to vector<8x128xf32>
    %78 = arith.maximumf %76, %77 : vector<8x128xf32>
    %c0_68 = arith.constant 0 : index
    %c0_69 = arith.constant 0 : index
    %c384_70 = arith.constant 384 : index
    %79 = vector.load %arg6[%c0_68, %c0_69, %c384_70] : memref<1x8x512xf32, #tpu.memory_space<vmem>>, vector<1x8x128xf32>
    %80 = vector.shape_cast %79 : vector<1x8x128xf32> to vector<8x128xf32>
    %81 = vector.shape_cast %78 : vector<8x128xf32> to vector<1x8x128xf32>
    tpu.vector_store %arg6[%c0_68, %c0_69, %c384_70], %81 {strides = array<i32>} : memref<1x8x512xf32, #tpu.memory_space<vmem>>, vector<1x8x128xf32>,
    return
  }
  func.func @transform_0(%arg0: i32, %arg1: i32) -> (i32, i32, i32) {
    %c0_i32 = arith.constant 0 : i32
    %c0_i32_0 = arith.constant 0 : i32
    %c0_i32_1 = arith.constant 0 : i32
    return %arg0, %c0_i32, %c0_i32_0 : i32, i32, i32
  }
  func.func @transform_1(%arg0: i32, %arg1: i32) -> (i32, i32, i32, i32) {
    %c0_i32 = arith.constant 0 : i32
    %c0_i32_0 = arith.constant 0 : i32
    %c0_i32_1 = arith.constant 0 : i32
    %c0_i32_2 = arith.constant 0 : i32
    return %arg1, %c0_i32, %c0_i32_0, %c0_i32_1 : i32, i32, i32, i32
  }
  func.func @transform_2(%arg0: i32, %arg1: i32) -> (i32, i32) {
    %c0_i32 = arith.constant 0 : i32
    %c0_i32_0 = arith.constant 0 : i32
    %c0_i32_1 = arith.constant 0 : i32
    return %c0_i32, %c0_i32_0 : i32, i32
  }
  func.func @transform_3(%arg0: i32, %arg1: i32) -> (i32, i32, i32) {
    %c0_i32 = arith.constant 0 : i32
    %c0_i32_0 = arith.constant 0 : i32
    return %arg0, %c0_i32, %arg1 : i32, i32, i32
  }
  func.func @transform_4(%arg0: i32, %arg1: i32) -> (i32, i32, i32) {
    %c0_i32 = arith.constant 0 : i32
    %c0_i32_0 = arith.constant 0 : i32
    return %arg0, %c0_i32, %arg1 : i32, i32, i32
  }
}

module attributes {stable_mosaic.version = 11 : i64} {
  func.func @_stacked_conv_kernel(%arg0: i32, %arg1: i32, %arg2: memref<1x8x512xbf16, #tpu.memory_space<vmem>>, %arg3: memref<1x4x8x64xbf16, #tpu.memory_space<vmem>>, %arg4: memref<8x1xf32, #tpu.memory_space<vmem>>, %arg5: memref<1x8x1536xf32, #tpu.memory_space<vmem>>, %arg6: memref<64x384xbf16, #tpu.memory_space<vmem>>) attributes {dimension_semantics = [#tpu.dimension_semantics<parallel>, #tpu.dimension_semantics<parallel>], iteration_bounds = array<i64: 1, 2>, scalar_prefetch = 0 : i64, scratch_operands = 1 : i64, tpu.core_type = #tpu.core_type<tc>, window_params = [{transform_indices = @transform_0, window_bounds = array<i64: 1, 8, 512>}, {transform_indices = @transform_1, window_bounds = array<i64: 1, 4, 8, 64>}, {pipeline_mode = #tpu.pipeline_mode<synchronous>, transform_indices = @transform_2, window_bounds = array<i64: 8, 1>}, {transform_indices = @transform_3, window_bounds = array<i64: 1, 8, 1536>}]} {
    %c0 = arith.constant 0 : index
    %c0_0 = arith.constant 0 : index
    %c0_1 = arith.constant 0 : index
    %0 = vector.load %arg2[%c0, %c0_0, %c0_1] : memref<1x8x512xbf16, #tpu.memory_space<vmem>>, vector<1x8x384xbf16>
    %1 = vector.shape_cast %0 : vector<1x8x384xbf16> to vector<8x384xbf16>
    %c0_2 = arith.constant 0 : index
    %c0_3 = arith.constant 0 : index
    %2 = vector.load %arg6[%c0_2, %c0_3] : memref<64x384xbf16, #tpu.memory_space<vmem>>, vector<8x384xbf16>
    tpu.vector_store %arg6[%c0_2, %c0_3], %1 {strides = array<i32>} : memref<64x384xbf16, #tpu.memory_space<vmem>>, vector<8x384xbf16>,
    %c0_4 = arith.constant 0 : index
    %c0_5 = arith.constant 0 : index
    %c1 = arith.constant 1 : index
    %3 = vector.load %arg2[%c0_4, %c0_5, %c1] : memref<1x8x512xbf16, #tpu.memory_space<vmem>>, vector<1x8x384xbf16>
    %4 = vector.shape_cast %3 : vector<1x8x384xbf16> to vector<8x384xbf16>
    %c8 = arith.constant 8 : index
    %c0_6 = arith.constant 0 : index
    %5 = vector.load %arg6[%c8, %c0_6] : memref<64x384xbf16, #tpu.memory_space<vmem>>, vector<8x384xbf16>
    tpu.vector_store %arg6[%c8, %c0_6], %4 {strides = array<i32>} : memref<64x384xbf16, #tpu.memory_space<vmem>>, vector<8x384xbf16>,
    %c0_7 = arith.constant 0 : index
    %c0_8 = arith.constant 0 : index
    %c9 = arith.constant 9 : index
    %6 = vector.load %arg2[%c0_7, %c0_8, %c9] : memref<1x8x512xbf16, #tpu.memory_space<vmem>>, vector<1x8x384xbf16>
    %7 = vector.shape_cast %6 : vector<1x8x384xbf16> to vector<8x384xbf16>
    %c16 = arith.constant 16 : index
    %c0_9 = arith.constant 0 : index
    %8 = vector.load %arg6[%c16, %c0_9] : memref<64x384xbf16, #tpu.memory_space<vmem>>, vector<8x384xbf16>
    tpu.vector_store %arg6[%c16, %c0_9], %7 {strides = array<i32>} : memref<64x384xbf16, #tpu.memory_space<vmem>>, vector<8x384xbf16>,
    %c0_10 = arith.constant 0 : index
    %c0_11 = arith.constant 0 : index
    %c10 = arith.constant 10 : index
    %9 = vector.load %arg2[%c0_10, %c0_11, %c10] : memref<1x8x512xbf16, #tpu.memory_space<vmem>>, vector<1x8x384xbf16>
    %10 = vector.shape_cast %9 : vector<1x8x384xbf16> to vector<8x384xbf16>
    %c24 = arith.constant 24 : index
    %c0_12 = arith.constant 0 : index
    %11 = vector.load %arg6[%c24, %c0_12] : memref<64x384xbf16, #tpu.memory_space<vmem>>, vector<8x384xbf16>
    tpu.vector_store %arg6[%c24, %c0_12], %10 {strides = array<i32>} : memref<64x384xbf16, #tpu.memory_space<vmem>>, vector<8x384xbf16>,
    %c0_13 = arith.constant 0 : index
    %c0_14 = arith.constant 0 : index
    %c81 = arith.constant 81 : index
    %12 = vector.load %arg2[%c0_13, %c0_14, %c81] : memref<1x8x512xbf16, #tpu.memory_space<vmem>>, vector<1x8x384xbf16>
    %13 = vector.shape_cast %12 : vector<1x8x384xbf16> to vector<8x384xbf16>
    %c32 = arith.constant 32 : index
    %c0_15 = arith.constant 0 : index
    %14 = vector.load %arg6[%c32, %c0_15] : memref<64x384xbf16, #tpu.memory_space<vmem>>, vector<8x384xbf16>
    tpu.vector_store %arg6[%c32, %c0_15], %13 {strides = array<i32>} : memref<64x384xbf16, #tpu.memory_space<vmem>>, vector<8x384xbf16>,
    %c0_16 = arith.constant 0 : index
    %c0_17 = arith.constant 0 : index
    %c82 = arith.constant 82 : index
    %15 = vector.load %arg2[%c0_16, %c0_17, %c82] : memref<1x8x512xbf16, #tpu.memory_space<vmem>>, vector<1x8x384xbf16>
    %16 = vector.shape_cast %15 : vector<1x8x384xbf16> to vector<8x384xbf16>
    %c40 = arith.constant 40 : index
    %c0_18 = arith.constant 0 : index
    %17 = vector.load %arg6[%c40, %c0_18] : memref<64x384xbf16, #tpu.memory_space<vmem>>, vector<8x384xbf16>
    tpu.vector_store %arg6[%c40, %c0_18], %16 {strides = array<i32>} : memref<64x384xbf16, #tpu.memory_space<vmem>>, vector<8x384xbf16>,
    %c0_19 = arith.constant 0 : index
    %c0_20 = arith.constant 0 : index
    %c90 = arith.constant 90 : index
    %18 = vector.load %arg2[%c0_19, %c0_20, %c90] : memref<1x8x512xbf16, #tpu.memory_space<vmem>>, vector<1x8x384xbf16>
    %19 = vector.shape_cast %18 : vector<1x8x384xbf16> to vector<8x384xbf16>
    %c48 = arith.constant 48 : index
    %c0_21 = arith.constant 0 : index
    %20 = vector.load %arg6[%c48, %c0_21] : memref<64x384xbf16, #tpu.memory_space<vmem>>, vector<8x384xbf16>
    tpu.vector_store %arg6[%c48, %c0_21], %19 {strides = array<i32>} : memref<64x384xbf16, #tpu.memory_space<vmem>>, vector<8x384xbf16>,
    %c0_22 = arith.constant 0 : index
    %c0_23 = arith.constant 0 : index
    %c91 = arith.constant 91 : index
    %21 = vector.load %arg2[%c0_22, %c0_23, %c91] : memref<1x8x512xbf16, #tpu.memory_space<vmem>>, vector<1x8x384xbf16>
    %22 = vector.shape_cast %21 : vector<1x8x384xbf16> to vector<8x384xbf16>
    %c56 = arith.constant 56 : index
    %c0_24 = arith.constant 0 : index
    %23 = vector.load %arg6[%c56, %c0_24] : memref<64x384xbf16, #tpu.memory_space<vmem>>, vector<8x384xbf16>
    tpu.vector_store %arg6[%c56, %c0_24], %22 {strides = array<i32>} : memref<64x384xbf16, #tpu.memory_space<vmem>>, vector<8x384xbf16>,
    %c0_25 = arith.constant 0 : index
    %c0_26 = arith.constant 0 : index
    %24 = vector.load %arg6[%c0_25, %c0_26] : memref<64x384xbf16, #tpu.memory_space<vmem>>, vector<64x384xbf16>
    %c0_27 = arith.constant 0 : index
    %c0_28 = arith.constant 0 : index
    %25 = vector.load %arg4[%c0_27, %c0_28] : memref<8x1xf32, #tpu.memory_space<vmem>>, vector<8x1xf32>
    %c0_29 = arith.constant 0 : index
    %c0_30 = arith.constant 0 : index
    %c0_31 = arith.constant 0 : index
    %c0_32 = arith.constant 0 : index
    %26 = vector.load %arg3[%c0_29, %c0_30, %c0_31, %c0_32] : memref<1x4x8x64xbf16, #tpu.memory_space<vmem>>, vector<1x1x8x64xbf16>
    %27 = vector.shape_cast %26 : vector<1x1x8x64xbf16> to vector<8x64xbf16>
    %cst = arith.constant dense<0.000000e+00> : vector<8x384xf32>
    %28 = tpu.matmul %27, %24, %cst {dimension_numbers = #tpu.dot_dimension_numbers<[1], [0], [0], [1], [0, 0, 1, 1], [], []>} : vector<8x64xbf16>, vector<64x384xbf16>, vector<8x384xf32> -> vector<8x384xf32>
    %29 = vector.broadcast %25 : vector<8x1xf32> to vector<8x384xf32>
    %30 = arith.addf %28, %29 : vector<8x384xf32>
    %c0_33 = arith.constant 0 : index
    %c0_34 = arith.constant 0 : index
    %c0_35 = arith.constant 0 : index
    %31 = vector.load %arg5[%c0_33, %c0_34, %c0_35] : memref<1x8x1536xf32, #tpu.memory_space<vmem>>, vector<1x8x384xf32>
    %32 = vector.shape_cast %31 : vector<1x8x384xf32> to vector<8x384xf32>
    %33 = vector.shape_cast %30 : vector<8x384xf32> to vector<1x8x384xf32>
    tpu.vector_store %arg5[%c0_33, %c0_34, %c0_35], %33 {strides = array<i32>} : memref<1x8x1536xf32, #tpu.memory_space<vmem>>, vector<1x8x384xf32>,
    %c0_36 = arith.constant 0 : index
    %c1_37 = arith.constant 1 : index
    %c0_38 = arith.constant 0 : index
    %c0_39 = arith.constant 0 : index
    %34 = vector.load %arg3[%c0_36, %c1_37, %c0_38, %c0_39] : memref<1x4x8x64xbf16, #tpu.memory_space<vmem>>, vector<1x1x8x64xbf16>
    %35 = vector.shape_cast %34 : vector<1x1x8x64xbf16> to vector<8x64xbf16>
    %cst_40 = arith.constant dense<0.000000e+00> : vector<8x384xf32>
    %36 = tpu.matmul %35, %24, %cst_40 {dimension_numbers = #tpu.dot_dimension_numbers<[1], [0], [0], [1], [0, 0, 1, 1], [], []>} : vector<8x64xbf16>, vector<64x384xbf16>, vector<8x384xf32> -> vector<8x384xf32>
    %37 = vector.broadcast %25 : vector<8x1xf32> to vector<8x384xf32>
    %38 = arith.addf %36, %37 : vector<8x384xf32>
    %c0_41 = arith.constant 0 : index
    %c0_42 = arith.constant 0 : index
    %c384 = arith.constant 384 : index
    %39 = vector.load %arg5[%c0_41, %c0_42, %c384] : memref<1x8x1536xf32, #tpu.memory_space<vmem>>, vector<1x8x384xf32>
    %40 = vector.shape_cast %39 : vector<1x8x384xf32> to vector<8x384xf32>
    %41 = vector.shape_cast %38 : vector<8x384xf32> to vector<1x8x384xf32>
    tpu.vector_store %arg5[%c0_41, %c0_42, %c384], %41 {strides = array<i32>} : memref<1x8x1536xf32, #tpu.memory_space<vmem>>, vector<1x8x384xf32>,
    %c0_43 = arith.constant 0 : index
    %c2 = arith.constant 2 : index
    %c0_44 = arith.constant 0 : index
    %c0_45 = arith.constant 0 : index
    %42 = vector.load %arg3[%c0_43, %c2, %c0_44, %c0_45] : memref<1x4x8x64xbf16, #tpu.memory_space<vmem>>, vector<1x1x8x64xbf16>
    %43 = vector.shape_cast %42 : vector<1x1x8x64xbf16> to vector<8x64xbf16>
    %cst_46 = arith.constant dense<0.000000e+00> : vector<8x384xf32>
    %44 = tpu.matmul %43, %24, %cst_46 {dimension_numbers = #tpu.dot_dimension_numbers<[1], [0], [0], [1], [0, 0, 1, 1], [], []>} : vector<8x64xbf16>, vector<64x384xbf16>, vector<8x384xf32> -> vector<8x384xf32>
    %45 = vector.broadcast %25 : vector<8x1xf32> to vector<8x384xf32>
    %46 = arith.addf %44, %45 : vector<8x384xf32>
    %c0_47 = arith.constant 0 : index
    %c0_48 = arith.constant 0 : index
    %c768 = arith.constant 768 : index
    %47 = vector.load %arg5[%c0_47, %c0_48, %c768] : memref<1x8x1536xf32, #tpu.memory_space<vmem>>, vector<1x8x384xf32>
    %48 = vector.shape_cast %47 : vector<1x8x384xf32> to vector<8x384xf32>
    %49 = vector.shape_cast %46 : vector<8x384xf32> to vector<1x8x384xf32>
    tpu.vector_store %arg5[%c0_47, %c0_48, %c768], %49 {strides = array<i32>} : memref<1x8x1536xf32, #tpu.memory_space<vmem>>, vector<1x8x384xf32>,
    %c0_49 = arith.constant 0 : index
    %c3 = arith.constant 3 : index
    %c0_50 = arith.constant 0 : index
    %c0_51 = arith.constant 0 : index
    %50 = vector.load %arg3[%c0_49, %c3, %c0_50, %c0_51] : memref<1x4x8x64xbf16, #tpu.memory_space<vmem>>, vector<1x1x8x64xbf16>
    %51 = vector.shape_cast %50 : vector<1x1x8x64xbf16> to vector<8x64xbf16>
    %cst_52 = arith.constant dense<0.000000e+00> : vector<8x384xf32>
    %52 = tpu.matmul %51, %24, %cst_52 {dimension_numbers = #tpu.dot_dimension_numbers<[1], [0], [0], [1], [0, 0, 1, 1], [], []>} : vector<8x64xbf16>, vector<64x384xbf16>, vector<8x384xf32> -> vector<8x384xf32>
    %53 = vector.broadcast %25 : vector<8x1xf32> to vector<8x384xf32>
    %54 = arith.addf %52, %53 : vector<8x384xf32>
    %c0_53 = arith.constant 0 : index
    %c0_54 = arith.constant 0 : index
    %c1152 = arith.constant 1152 : index
    %55 = vector.load %arg5[%c0_53, %c0_54, %c1152] : memref<1x8x1536xf32, #tpu.memory_space<vmem>>, vector<1x8x384xf32>
    %56 = vector.shape_cast %55 : vector<1x8x384xf32> to vector<8x384xf32>
    %57 = vector.shape_cast %54 : vector<8x384xf32> to vector<1x8x384xf32>
    tpu.vector_store %arg5[%c0_53, %c0_54, %c1152], %57 {strides = array<i32>} : memref<1x8x1536xf32, #tpu.memory_space<vmem>>, vector<1x8x384xf32>,
    return
  }
  func.func @transform_0(%arg0: i32, %arg1: i32) -> (i32, i32, i32) {
    %c0_i32 = arith.constant 0 : i32
    %c0_i32_0 = arith.constant 0 : i32
    %c0_i32_1 = arith.constant 0 : i32
    return %arg0, %c0_i32, %c0_i32_0 : i32, i32, i32
  }
  func.func @transform_1(%arg0: i32, %arg1: i32) -> (i32, i32, i32, i32) {
    %c0_i32 = arith.constant 0 : i32
    %c0_i32_0 = arith.constant 0 : i32
    %c0_i32_1 = arith.constant 0 : i32
    %c0_i32_2 = arith.constant 0 : i32
    return %arg1, %c0_i32, %c0_i32_0, %c0_i32_1 : i32, i32, i32, i32
  }
  func.func @transform_2(%arg0: i32, %arg1: i32) -> (i32, i32) {
    %c0_i32 = arith.constant 0 : i32
    %c0_i32_0 = arith.constant 0 : i32
    %c0_i32_1 = arith.constant 0 : i32
    return %c0_i32, %c0_i32_0 : i32, i32
  }
  func.func @transform_3(%arg0: i32, %arg1: i32) -> (i32, i32, i32) {
    %c0_i32 = arith.constant 0 : i32
    %c0_i32_0 = arith.constant 0 : i32
    return %arg0, %c0_i32, %arg1 : i32, i32, i32
  }
}

</mosaic_0001>

<llo_original>
// kernel: hourglass_forward.6
$region0: #{hourglass_forward.6}
  #allocation0 [shape = 'u32[]', space=smem, size = 0x4, offset = 0x4, fixed_abs, tag = 'smem constant byte address 0x4 - core index']
  #allocation1 [shape = 'u32[144,128]{1,0:T(1,128)}', space=vmem, size = 0x12000, scoped, tag = 'internal scratch']
  #allocation2 [shape = 'bf16[108,384]{1,0:T(8,128)(2,1)}', space=vmem, size = 0x15000, scoped, tag = 'scratch operand']
  %s0 = inlined_call_operand.vmem [shape: bf16[1,32,512], index: 0, kind: input, shape index: {}]
  %s1 = inlined_call_operand.vmem [shape: bf16[1,1,8,108], index: 1, kind: input, shape index: {}]
  %s2 = inlined_call_operand.vmem [shape: f32[8,1], index: 2, kind: input, shape index: {}]
  %s3 = inlined_call_operand.vmem [shape: f32[1,8,384], index: 3, kind: output, shape index: {}]
  %s4 = sld [smem:[#allocation0]]
  $region22: #{hourglass_forward.6} parent=0
    _
  %s6 = ssub.s32 1, %s4
  %s7 = scalar_select 0, %s6, %s4
  // Predicated region
  $region2: #{hourglass_forward.6} parent=0 // pred_check
    _
  $region3: #{hourglass_forward.6} parent=0 // pred_check_branch
    %9 = sbr.rel (0) target = $region5
  $region4: #{hourglass_forward.6} parent=0 // pred_region
    _
  $region5: #{hourglass_forward.6} parent=0 // pred_fallthru
    _
  // Predicated region
  $region6: #{hourglass_forward.6} parent=0 // pred_check
    _
  $region7: #{hourglass_forward.6} parent=0 // pred_check_branch
    %11 = sbr.rel (0) target = $region9
  $region8: #{hourglass_forward.6} parent=0 // pred_region
    _
  $region9: #{hourglass_forward.6} parent=0 // pred_fallthru
    _
  // Predicated region
  $region10: #{hourglass_forward.6} parent=0 // pred_check
    _
  $region11: #{hourglass_forward.6} parent=0 // pred_check_branch
    %13 = sbr.rel (0) target = $region13
  $region12: #{hourglass_forward.6} parent=0 // pred_region
    _
  $region13: #{hourglass_forward.6} parent=0 // pred_fallthru
    _
  %v15 = vld [vmem:[%s0] sm:$0x33]
  %v16 = vld [vmem:[%s0 + $0x8] sm:$0x3]
  %17 = vst [vmem:[#allocation2] sm:$0x33] %v15
  %18 = vst [vmem:[#allocation2 + $0x8] sm:$0x3] %v16
  %v19 = vld [vmem:[%s0] sm:$0xcc]
  %v20 = vld [vmem:[%s0 + $0x8] sm:$0xc]
  %21 = vst [vmem:[#allocation2] sm:$0xcc] %v19
  %22 = vst [vmem:[#allocation2 + $0x8] sm:$0xc] %v20
  %v23 = vld [vmem:[%s0] sm:$0x33]
  %v24 = vld [vmem:[%s0 + $0x8] sm:$0x33]
  %27 = vrot.lane.b32.xlu0 %v23, 127
  %v28 = vpop.permute.xlu0 %27
  %29 = vrot.lane.b32.xlu0 %v24, 127
  %v30 = vpop.permute.xlu0 %29
  %v31 = vrot.slane %v28, 4
  %v32 = vrot.slane %v30, 4
  %vm33 = vcmask 1043456
  %v34 = vsel %vm33, %v31, %v32
  %vm35 = vcmask 1039360
  %v36 = vsel %vm35, %v28, %v34
  %v37 = vsel %vm35, %v30, %v32
  %40 = vst [vmem:[#allocation2 + $0xc] sm:$0x33] %v36
  %41 = vst [vmem:[#allocation2 + $0x14] sm:$0x3] %v37
  %v42 = vld [vmem:[%s0 + $0x10] sm:$0x33]
  %v43 = vld [vmem:[%s0 + $0x18] sm:$0x3]
  %v46 = vrot.slane %v42, 6
  %v47 = vrot.slane %v43, 6
  %50 = vst [vmem:[#allocation2 + $0xc] sm:$0xcc] %v46
  %51 = vst [vmem:[#allocation2 + $0x14] sm:$0xc] %v47
  %v52 = vld [vmem:[%s0 + $0x10] sm:$0xcc]
  %v53 = vld [vmem:[%s0 + $0x18] sm:$0xc]
  %v56 = vrot.slane %v52, 6
  %v57 = vrot.slane %v56, 4
  %v58 = vrot.slane %v53, 6
  %v59 = vrot.slane %v58, 4
  %62 = vst [vmem:[#allocation2 + $0x18] sm:$0x33] %v57
  %63 = vst [vmem:[#allocation2 + $0x20] sm:$0x3] %v59
  %v64 = vld [vmem:[%s0 + $0x10] sm:$0x33]
  %v65 = vld [vmem:[%s0 + $0x18] sm:$0x33]
  %v68 = vrot.slane %v64, 6
  %v69 = vrot.slane %v65, 6
  %70 = vrot.lane.b32.xlu0 %v68, 127
  %v71 = vpop.permute.xlu0 %70
  %72 = vrot.lane.b32.xlu0 %v69, 127
  %v73 = vpop.permute.xlu0 %72
  %v74 = vrot.slane %v71, 4
  %v75 = vrot.slane %v73, 4
  %v76 = vsel %vm33, %v74, %v75
  %v77 = vsel %vm35, %v71, %v76
  %v78 = vsel %vm35, %v73, %v75
  %81 = vst [vmem:[#allocation2 + $0x18] sm:$0xcc] %v77
  %82 = vst [vmem:[#allocation2 + $0x20] sm:$0xc] %v78
  %v83 = vld [vmem:[%s0] sm:$0x33]
  %v84 = vld [vmem:[%s0 + $0x8] sm:$0x33]
  %87 = vrot.lane.b32.xlu0 %v83, 119
  %v88 = vpop.permute.xlu0 %87
  %89 = vrot.lane.b32.xlu0 %v84, 119
  %v90 = vpop.permute.xlu0 %89
  %v91 = vrot.slane %v88, 4
  %v92 = vrot.slane %v90, 4
  %v93 = vsel %vm33, %v91, %v92
  %vm94 = vcmask 973824
  %v95 = vsel %vm94, %v88, %v93
  %v96 = vsel %vm94, %v90, %v92
  %99 = vst [vmem:[#allocation2 + $0x24] sm:$0x33] %v95
  %100 = vst [vmem:[#allocation2 + $0x2c] sm:$0x3] %v96
  %v101 = vld [vmem:[%s0] sm:$0xcc]
  %v102 = vld [vmem:[%s0 + $0x8] sm:$0xcc]
  %105 = vrot.lane.b32.xlu0 %v101, 119
  %v106 = vpop.permute.xlu0 %105
  %107 = vrot.lane.b32.xlu0 %v102, 119
  %v108 = vpop.permute.xlu0 %107
  %v109 = vrot.slane %v106, 4
  %v110 = vrot.slane %v108, 4
  %v111 = vsel %vm33, %v109, %v110
  %v112 = vsel %vm94, %v106, %v111
  %v113 = vsel %vm94, %v108, %v110
  %116 = vst [vmem:[#allocation2 + $0x24] sm:$0xcc] %v112
  %117 = vst [vmem:[#allocation2 + $0x2c] sm:$0xc] %v113
  %v118 = vld [vmem:[%s0] sm:$0x33]
  %v119 = vld [vmem:[%s0 + $0x8] sm:$0x33]
  %122 = vrot.lane.b32.xlu0 %v118, 118
  %v123 = vpop.permute.xlu0 %122
  %124 = vrot.lane.b32.xlu0 %v119, 118
  %v125 = vpop.permute.xlu0 %124
  %v126 = vrot.slane %v123, 4
  %v127 = vrot.slane %v125, 4
  %v128 = vsel %vm33, %v126, %v127
  %vm129 = vcmask 965632
  %v130 = vsel %vm129, %v123, %v128
  %v131 = vsel %vm129, %v125, %v127
  %134 = vst [vmem:[#allocation2 + $0x30] sm:$0x33] %v130
  %135 = vst [vmem:[#allocation2 + $0x38] sm:$0x3] %v131
  %v136 = vld [vmem:[%s0 + $0x20] sm:$0x33]
  %v137 = vld [vmem:[%s0 + $0x28] sm:$0x3]
  %v140 = vrot.slane %v136, 6
  %v141 = vrot.slane %v137, 6
  %144 = vst [vmem:[#allocation2 + $0x30] sm:$0xcc] %v140
  %145 = vst [vmem:[#allocation2 + $0x38] sm:$0xc] %v141
  %v146 = vld [vmem:[%s0 + $0x20] sm:$0xcc]
  %v147 = vld [vmem:[%s0 + $0x28] sm:$0xc]
  %v150 = vrot.slane %v146, 6
  %v151 = vrot.slane %v150, 4
  %v152 = vrot.slane %v147, 6
  %v153 = vrot.slane %v152, 4
  %156 = vst [vmem:[#allocation2 + $0x3c] sm:$0x33] %v151
  %157 = vst [vmem:[#allocation2 + $0x44] sm:$0x3] %v153
  %v158 = vld [vmem:[%s0 + $0x20] sm:$0x33]
  %v159 = vld [vmem:[%s0 + $0x28] sm:$0x33]
  %v162 = vrot.slane %v158, 6
  %v163 = vrot.slane %v159, 6
  %164 = vrot.lane.b32.xlu0 %v162, 127
  %v165 = vpop.permute.xlu0 %164
  %166 = vrot.lane.b32.xlu0 %v163, 127
  %v167 = vpop.permute.xlu0 %166
  %v168 = vrot.slane %v165, 4
  %v169 = vrot.slane %v167, 4
  %v170 = vsel %vm33, %v168, %v169
  %v171 = vsel %vm35, %v165, %v170
  %v172 = vsel %vm35, %v167, %v169
  %175 = vst [vmem:[#allocation2 + $0x3c] sm:$0xcc] %v171
  %176 = vst [vmem:[#allocation2 + $0x44] sm:$0xc] %v172
  %v177 = vld [vmem:[%s0 + $0x30] sm:$0x33]
  %v178 = vld [vmem:[%s0 + $0x38] sm:$0x3]
  %179 = vst [vmem:[#allocation2 + $0x48] sm:$0x33] %v177
  %180 = vst [vmem:[#allocation2 + $0x50] sm:$0x3] %v178
  %v181 = vld [vmem:[%s0 + $0x30] sm:$0xcc]
  %v182 = vld [vmem:[%s0 + $0x38] sm:$0xc]
  %183 = vst [vmem:[#allocation2 + $0x48] sm:$0xcc] %v181
  %184 = vst [vmem:[#allocation2 + $0x50] sm:$0xc] %v182
  %v185 = vld [vmem:[%s0 + $0x30] sm:$0x33]
  %v186 = vld [vmem:[%s0 + $0x38] sm:$0x33]
  %189 = vrot.lane.b32.xlu0 %v185, 127
  %v190 = vpop.permute.xlu0 %189
  %191 = vrot.lane.b32.xlu0 %v186, 127
  %v192 = vpop.permute.xlu0 %191
  %v193 = vrot.slane %v190, 4
  %v194 = vrot.slane %v192, 4
  %v195 = vsel %vm33, %v193, %v194
  %v196 = vsel %vm35, %v190, %v195
  %v197 = vsel %vm35, %v192, %v194
  %200 = vst [vmem:[#allocation2 + $0x54] sm:$0x33] %v196
  %201 = vst [vmem:[#allocation2 + $0x5c] sm:$0x3] %v197
  %v202 = vld [vmem:[%s0 + $0x20] sm:$0x33]
  %v203 = vld [vmem:[%s0 + $0x28] sm:$0x33]
  %v206 = vrot.slane %v202, 6
  %v207 = vrot.slane %v203, 6
  %208 = vrot.lane.b32.xlu0 %v206, 119
  %v209 = vpop.permute.xlu0 %208
  %210 = vrot.lane.b32.xlu0 %v207, 119
  %v211 = vpop.permute.xlu0 %210
  %v212 = vrot.slane %v209, 4
  %v213 = vrot.slane %v211, 4
  %v214 = vsel %vm33, %v212, %v213
  %v215 = vsel %vm94, %v209, %v214
  %v216 = vsel %vm94, %v211, %v213
  %219 = vst [vmem:[#allocation2 + $0x54] sm:$0xcc] %v215
  %220 = vst [vmem:[#allocation2 + $0x5c] sm:$0xc] %v216
  %v221 = vld [vmem:[%s0 + $0x20] sm:$0xcc]
  %v222 = vld [vmem:[%s0 + $0x28] sm:$0xcc]
  %v225 = vrot.slane %v221, 6
  %v226 = vrot.slane %v225, 4
  %v227 = vrot.slane %v222, 6
  %v228 = vrot.slane %v227, 4
  %229 = vrot.lane.b32.xlu0 %v226, 119
  %v230 = vpop.permute.xlu0 %229
  %231 = vrot.lane.b32.xlu0 %v228, 119
  %v232 = vpop.permute.xlu0 %231
  %v233 = vrot.slane %v230, 4
  %v234 = vrot.slane %v232, 4
  %v235 = vsel %vm33, %v233, %v234
  %v236 = vsel %vm94, %v230, %v235
  %v237 = vsel %vm94, %v232, %v234
  %240 = vst [vmem:[#allocation2 + $0x60] sm:$0x33] %v236
  %241 = vst [vmem:[#allocation2 + $0x68] sm:$0x3] %v237
  %v242 = vld [vmem:[%s0 + $0x20] sm:$0x33]
  %v243 = vld [vmem:[%s0 + $0x28] sm:$0x33]
  %v246 = vrot.slane %v242, 6
  %v247 = vrot.slane %v243, 6
  %248 = vrot.lane.b32.xlu0 %v246, 118
  %v249 = vpop.permute.xlu0 %248
  %250 = vrot.lane.b32.xlu0 %v247, 118
  %v251 = vpop.permute.xlu0 %250
  %v252 = vrot.slane %v249, 4
  %v253 = vrot.slane %v251, 4
  %v254 = vsel %vm33, %v252, %v253
  %v255 = vsel %vm129, %v249, %v254
  %v256 = vsel %vm129, %v251, %v253
  %259 = vst [vmem:[#allocation2 + $0x60] sm:$0xcc] %v255
  %260 = vst [vmem:[#allocation2 + $0x68] sm:$0xc] %v256
  %v261 = vld [vmem:[%s0] sm:$0x33]
  %v262 = vld [vmem:[%s0 + $0x8] sm:$0x33]
  %265 = vrot.lane.b32.xlu0 %v261, 47
  %v266 = vpop.permute.xlu0 %265
  %267 = vrot.lane.b32.xlu0 %v262, 47
  %v268 = vpop.permute.xlu0 %267
  %v269 = vrot.slane %v266, 4
  %v270 = vrot.slane %v268, 4
  %v271 = vsel %vm33, %v269, %v270
  %vm272 = vcmask 384000
  %v273 = vsel %vm272, %v266, %v271
  %v274 = vsel %vm272, %v268, %v270
  %277 = vst [vmem:[#allocation2 + $0x6c] sm:$0x33] %v273
  %278 = vst [vmem:[#allocation2 + $0x74] sm:$0x3] %v274
  %v279 = vld [vmem:[%s0] sm:$0xcc]
  %v280 = vld [vmem:[%s0 + $0x8] sm:$0xcc]
  %283 = vrot.lane.b32.xlu0 %v279, 47
  %v284 = vpop.permute.xlu0 %283
  %285 = vrot.lane.b32.xlu0 %v280, 47
  %v286 = vpop.permute.xlu0 %285
  %v287 = vrot.slane %v284, 4
  %v288 = vrot.slane %v286, 4
  %v289 = vsel %vm33, %v287, %v288
  %v290 = vsel %vm272, %v284, %v289
  %v291 = vsel %vm272, %v286, %v288
  %294 = vst [vmem:[#allocation2 + $0x6c] sm:$0xcc] %v290
  %295 = vst [vmem:[#allocation2 + $0x74] sm:$0xc] %v291
  %v296 = vld [vmem:[%s0] sm:$0x33]
  %v297 = vld [vmem:[%s0 + $0x8] sm:$0x33]
  %300 = vrot.lane.b32.xlu0 %v296, 46
  %v301 = vpop.permute.xlu0 %300
  %302 = vrot.lane.b32.xlu0 %v297, 46
  %v303 = vpop.permute.xlu0 %302
  %v304 = vrot.slane %v301, 4
  %v305 = vrot.slane %v303, 4
  %v306 = vsel %vm33, %v304, %v305
  %vm307 = vcmask 375808
  %v308 = vsel %vm307, %v301, %v306
  %v309 = vsel %vm307, %v303, %v305
  %312 = vst [vmem:[#allocation2 + $0x78] sm:$0x33] %v308
  %313 = vst [vmem:[#allocation2 + $0x80] sm:$0x3] %v309
  %v314 = vld [vmem:[%s0 + $0x10] sm:$0x33]
  %v315 = vld [vmem:[%s0 + $0x18] sm:$0x33]
  %v318 = vrot.slane %v314, 6
  %v319 = vrot.slane %v315, 6
  %320 = vrot.lane.b32.xlu0 %v318, 47
  %v321 = vpop.permute.xlu0 %320
  %322 = vrot.lane.b32.xlu0 %v319, 47
  %v323 = vpop.permute.xlu0 %322
  %v324 = vrot.slane %v321, 4
  %v325 = vrot.slane %v323, 4
  %v326 = vsel %vm33, %v324, %v325
  %v327 = vsel %vm272, %v321, %v326
  %v328 = vsel %vm272, %v323, %v325
  %331 = vst [vmem:[#allocation2 + $0x78] sm:$0xcc] %v327
  %332 = vst [vmem:[#allocation2 + $0x80] sm:$0xc] %v328
  %v333 = vld [vmem:[%s0 + $0x10] sm:$0xcc]
  %v334 = vld [vmem:[%s0 + $0x18] sm:$0xcc]
  %v337 = vrot.slane %v333, 6
  %v338 = vrot.slane %v337, 4
  %v339 = vrot.slane %v334, 6
  %v340 = vrot.slane %v339, 4
  %341 = vrot.lane.b32.xlu0 %v338, 47
  %v342 = vpop.permute.xlu0 %341
  %343 = vrot.lane.b32.xlu0 %v340, 47
  %v344 = vpop.permute.xlu0 %343
  %v345 = vrot.slane %v342, 4
  %v346 = vrot.slane %v344, 4
  %v347 = vsel %vm33, %v345, %v346
  %v348 = vsel %vm272, %v342, %v347
  %v349 = vsel %vm272, %v344, %v346
  %352 = vst [vmem:[#allocation2 + $0x84] sm:$0x33] %v348
  %353 = vst [vmem:[#allocation2 + $0x8c] sm:$0x3] %v349
  %v354 = vld [vmem:[%s0 + $0x10] sm:$0x33]
  %v355 = vld [vmem:[%s0 + $0x18] sm:$0x33]
  %v358 = vrot.slane %v354, 6
  %v359 = vrot.slane %v355, 6
  %360 = vrot.lane.b32.xlu0 %v358, 46
  %v361 = vpop.permute.xlu0 %360
  %362 = vrot.lane.b32.xlu0 %v359, 46
  %v363 = vpop.permute.xlu0 %362
  %v364 = vrot.slane %v361, 4
  %v365 = vrot.slane %v363, 4
  %v366 = vsel %vm33, %v364, %v365
  %v367 = vsel %vm307, %v361, %v366
  %v368 = vsel %vm307, %v363, %v365
  %371 = vst [vmem:[#allocation2 + $0x84] sm:$0xcc] %v367
  %372 = vst [vmem:[#allocation2 + $0x8c] sm:$0xc] %v368
  %v373 = vld [vmem:[%s0] sm:$0x33]
  %v374 = vld [vmem:[%s0 + $0x8] sm:$0x33]
  %377 = vrot.lane.b32.xlu0 %v373, 38
  %v378 = vpop.permute.xlu0 %377
  %379 = vrot.lane.b32.xlu0 %v374, 38
  %v380 = vpop.permute.xlu0 %379
  %v381 = vrot.slane %v378, 4
  %v382 = vrot.slane %v380, 4
  %v383 = vsel %vm33, %v381, %v382
  %vm384 = vcmask 310272
  %v385 = vsel %vm384, %v378, %v383
  %v386 = vsel %vm384, %v380, %v382
  %389 = vst [vmem:[#allocation2 + $0x90] sm:$0x33] %v385
  %390 = vst [vmem:[#allocation2 + $0x98] sm:$0x3] %v386
  %v391 = vld [vmem:[%s0] sm:$0xcc]
  %v392 = vld [vmem:[%s0 + $0x8] sm:$0xcc]
  %395 = vrot.lane.b32.xlu0 %v391, 38
  %v396 = vpop.permute.xlu0 %395
  %397 = vrot.lane.b32.xlu0 %v392, 38
  %v398 = vpop.permute.xlu0 %397
  %v399 = vrot.slane %v396, 4
  %v400 = vrot.slane %v398, 4
  %v401 = vsel %vm33, %v399, %v400
  %v402 = vsel %vm384, %v396, %v401
  %v403 = vsel %vm384, %v398, %v400
  %406 = vst [vmem:[#allocation2 + $0x90] sm:$0xcc] %v402
  %407 = vst [vmem:[#allocation2 + $0x98] sm:$0xc] %v403
  %v408 = vld [vmem:[%s0] sm:$0x33]
  %v409 = vld [vmem:[%s0 + $0x8] sm:$0x33]
  %412 = vrot.lane.b32.xlu0 %v408, 37
  %v413 = vpop.permute.xlu0 %412
  %414 = vrot.lane.b32.xlu0 %v409, 37
  %v415 = vpop.permute.xlu0 %414
  %v416 = vrot.slane %v413, 4
  %v417 = vrot.slane %v415, 4
  %v418 = vsel %vm33, %v416, %v417
  %vm419 = vcmask 302080
  %v420 = vsel %vm419, %v413, %v418
  %v421 = vsel %vm419, %v415, %v417
  %424 = vst [vmem:[#allocation2 + $0x9c] sm:$0x33] %v420
  %425 = vst [vmem:[#allocation2 + $0xa4] sm:$0x3] %v421
  %v426 = vld [vmem:[#allocation2] sm:$0xff]
  %v427 = vld [vmem:[#allocation2 + $0x8] sm:$0xf]
  %v428 = vld [vmem:[#allocation2 + $0xc] sm:$0xff]
  %v429 = vld [vmem:[#allocation2 + $0x14] sm:$0xf]
  %v430 = vld [vmem:[#allocation2 + $0x18] sm:$0xff]
  %v431 = vld [vmem:[#allocation2 + $0x20] sm:$0xf]
  %v432 = vld [vmem:[#allocation2 + $0x24] sm:$0xff]
  %v433 = vld [vmem:[#allocation2 + $0x2c] sm:$0xf]
  %v434 = vld [vmem:[#allocation2 + $0x30] sm:$0xff]
  %v435 = vld [vmem:[#allocation2 + $0x38] sm:$0xf]
  %v436 = vld [vmem:[#allocation2 + $0x3c] sm:$0xff]
  %v437 = vld [vmem:[#allocation2 + $0x44] sm:$0xf]
  %v438 = vld [vmem:[#allocation2 + $0x48] sm:$0xff]
  %v439 = vld [vmem:[#allocation2 + $0x50] sm:$0xf]
  %v440 = vld [vmem:[#allocation2 + $0x54] sm:$0xff]
  %v441 = vld [vmem:[#allocation2 + $0x5c] sm:$0xf]
  %v442 = vld [vmem:[#allocation2 + $0x60] sm:$0xff]
  %v443 = vld [vmem:[#allocation2 + $0x68] sm:$0xf]
  %v444 = vld [vmem:[#allocation2 + $0x6c] sm:$0xff]
  %v445 = vld [vmem:[#allocation2 + $0x74] sm:$0xf]
  %v446 = vld [vmem:[#allocation2 + $0x78] sm:$0xff]
  %v447 = vld [vmem:[#allocation2 + $0x80] sm:$0xf]
  %v448 = vld [vmem:[#allocation2 + $0x84] sm:$0xff]
  %v449 = vld [vmem:[#allocation2 + $0x8c] sm:$0xf]
  %v450 = vld [vmem:[#allocation2 + $0x90] sm:$0xff]
  %v451 = vld [vmem:[#allocation2 + $0x98] sm:$0xf]
  %v452 = vld [vmem:[#allocation2 + $0x9c] sm:$0x33]
  %v453 = vld [vmem:[#allocation2 + $0xa4] sm:$0x3]
  %v454 = vld [vmem:[%s2] sm:$0xff]
  %v455 = vld [vmem:[%s1] sm:$0xf]
  %457 = vset.pattern.permute.xlu0 0
  %458 = vperm.xlu0 %457, %v454
  %v459 = vpop.permute.xlu0 %458
  %v489 = vunpack.c.l.b16 %v426
  %v490 = vunpack.c.h.b16 %v426
  %v491 = vunpack.c.l.b16 %v427
  %v492 = vunpack.c.l.b16 %v428
  %v493 = vunpack.c.h.b16 %v428
  %v494 = vunpack.c.l.b16 %v429
  %v495 = vunpack.c.l.b16 %v430
  %v496 = vunpack.c.h.b16 %v430
  %v497 = vunpack.c.l.b16 %v431
  %v498 = vunpack.c.l.b16 %v432
  %v499 = vunpack.c.h.b16 %v432
  %v500 = vunpack.c.l.b16 %v433
  %v501 = vunpack.c.l.b16 %v434
  %v502 = vunpack.c.h.b16 %v434
  %v503 = vunpack.c.l.b16 %v435
  %v504 = vunpack.c.l.b16 %v436
  %v505 = vunpack.c.h.b16 %v436
  %v506 = vunpack.c.l.b16 %v437
  %v507 = vunpack.c.l.b16 %v438
  %v508 = vunpack.c.h.b16 %v438
  %v509 = vunpack.c.l.b16 %v439
  %v510 = vunpack.c.l.b16 %v440
  %v511 = vunpack.c.h.b16 %v440
  %v512 = vunpack.c.l.b16 %v441
  %v513 = vunpack.c.l.b16 %v442
  %v514 = vunpack.c.h.b16 %v442
  %v515 = vunpack.c.l.b16 %v443
  %v516 = vunpack.c.l.b16 %v444
  %v517 = vunpack.c.h.b16 %v444
  %v518 = vunpack.c.l.b16 %v445
  %v519 = vunpack.c.l.b16 %v446
  %v520 = vunpack.c.h.b16 %v446
  %v521 = vunpack.c.l.b16 %v447
  %v522 = vunpack.c.l.b16 %v448
  %v523 = vunpack.c.h.b16 %v448
  %v524 = vunpack.c.l.b16 %v449
  %v525 = vunpack.c.l.b16 %v450
  %v526 = vunpack.c.h.b16 %v450
  %v527 = vunpack.c.l.b16 %v451
  %v528 = vunpack.c.l.b16 %v452
  %v529 = vunpack.c.h.b16 %v452
  %v530 = vunpack.c.l.b16 %v453
  %v531 = vpack.c.b16 %v492, %v489
  %v532 = vpack.c.b16 %v493, %v490
  %v533 = vpack.c.b16 %v494, %v491
  %v534 = vpack.c.b16 %v498, %v495
  %v535 = vpack.c.b16 %v499, %v496
  %v536 = vpack.c.b16 %v500, %v497
  %v537 = vpack.c.b16 %v504, %v501
  %v538 = vpack.c.b16 %v505, %v502
  %v539 = vpack.c.b16 %v506, %v503
  %v540 = vpack.c.b16 %v510, %v507
  %v541 = vpack.c.b16 %v511, %v508
  %v542 = vpack.c.b16 %v512, %v509
  %v543 = vpack.c.b16 %v516, %v513
  %v544 = vpack.c.b16 %v517, %v514
  %v545 = vpack.c.b16 %v518, %v515
  %v546 = vpack.c.b16 %v522, %v519
  %v547 = vpack.c.b16 %v523, %v520
  %v548 = vpack.c.b16 %v524, %v521
  %v549 = vpack.c.b16 %v528, %v525
  %v550 = vpack.c.b16 %v529, %v526
  %v551 = vpack.c.b16 %v530, %v527
  %vm570 = vcmask 883712
  %v572 = vsel %vm570, %v455, 0
  %vm574 = vcmask 1045504
  %v576 = vsel %vm574, %v549, 0
  %v579 = vsel %vm574, %v550, 0
  %v582 = vsel %vm574, %v551, 0
  %584 = vmatprep.subr.bf16.mxu0 0
  %585 = vmatpush1.bf16.msra.mxu0 0
  %586 = vmatprep.subr.bf16.mxu0 %v579
  %587 = vmatpush1.bf16.msra.mxu0 %v576
  %588 = vmatprep.subr.bf16.mxu0 %v547
  %589 = vmatpush1.bf16.msra.mxu0 %v546
  %590 = vmatprep.subr.bf16.mxu0 %v544
  %591 = vmatpush1.bf16.msra.mxu0 %v543
  %592 = vmatprep.subr.bf16.mxu0 %v541
  %593 = vmatpush1.bf16.msra.mxu0 %v540
  %594 = vmatprep.subr.bf16.mxu0 %v538
  %595 = vmatpush1.bf16.msra.mxu0 %v537
  %596 = vmatprep.subr.bf16.mxu0 %v535
  %597 = vmatpush1.bf16.msra.mxu0 %v534
  %598 = vmatprep.subr.bf16.mxu0 %v532
  %599 = vmatpush1.bf16.msra.mxu0 %v531
  %600 = vmatprep.subr.bf16.mxu0 0
  %601 = vmatpush2.bf16.msra.mxu0 0
  %602 = vmatprep.subr.bf16.mxu0 0
  %603 = vmatpush2.bf16.msra.mxu0 0
  %604 = vmatprep.subr.bf16.mxu0 0
  %605 = vmatpush2.bf16.msra.mxu0 0
  %606 = vmatprep.subr.bf16.mxu0 0
  %607 = vmatpush2.bf16.msra.mxu0 0
  %608 = vmatprep.subr.bf16.mxu0 0
  %609 = vmatpush2.bf16.msra.mxu0 0
  %610 = vmatprep.subr.bf16.mxu0 0
  %611 = vmatpush2.bf16.msra.mxu0 0
  %612 = vmatprep.subr.bf16.mxu0 0
  %613 = vmatpush2.bf16.msra.mxu0 0
  %614 = vmatprep.subr.bf16.mxu0 0
  %615 = vmatpush2.bf16.msra.mxu0 0
  %616 = vmatprep.mubr.bf16.mxu0 0
  %617 = vmatmul.mubr.bf16.gmra.mxu0 %v572
  %v618 = vpop.f32.mrf.mxu0
  %v619 = vadd.f32 %v459, %v618
  %v620 = vpop.f32.mrf.mxu0
  %v621 = vadd.f32 %v459, %v620
  %v622 = vpop.f32.mrf.mxu0
  %v623 = vpop.f32.mrf.mxu0
  %624 = vdwg.mxu0
  %625 = vmatprep.subr.bf16.mxu0 0
  %626 = vmatpush1.bf16.msra.mxu0 0
  %627 = vmatprep.subr.bf16.mxu0 0
  %628 = vmatpush1.bf16.msra.mxu0 %v582
  %629 = vmatprep.subr.bf16.mxu0 0
  %630 = vmatpush1.bf16.msra.mxu0 %v548
  %631 = vmatprep.subr.bf16.mxu0 0
  %632 = vmatpush1.bf16.msra.mxu0 %v545
  %633 = vmatprep.subr.bf16.mxu0 0
  %634 = vmatpush1.bf16.msra.mxu0 %v542
  %635 = vmatprep.subr.bf16.mxu0 0
  %636 = vmatpush1.bf16.msra.mxu0 %v539
  %637 = vmatprep.subr.bf16.mxu0 0
  %638 = vmatpush1.bf16.msra.mxu0 %v536
  %639 = vmatprep.subr.bf16.mxu0 0
  %640 = vmatpush1.bf16.msra.mxu0 %v533
  %641 = vmatprep.subr.bf16.mxu0 0
  %642 = vmatpush2.bf16.msra.mxu0 0
  %643 = vmatprep.subr.bf16.mxu0 0
  %644 = vmatpush2.bf16.msra.mxu0 0
  %645 = vmatprep.subr.bf16.mxu0 0
  %646 = vmatpush2.bf16.msra.mxu0 0
  %647 = vmatprep.subr.bf16.mxu0 0
  %648 = vmatpush2.bf16.msra.mxu0 0
  %649 = vmatprep.subr.bf16.mxu0 0
  %650 = vmatpush2.bf16.msra.mxu0 0
  %651 = vmatprep.subr.bf16.mxu0 0
  %652 = vmatpush2.bf16.msra.mxu0 0
  %653 = vmatprep.subr.bf16.mxu0 0
  %654 = vmatpush2.bf16.msra.mxu0 0
  %655 = vmatprep.subr.bf16.mxu0 0
  %656 = vmatpush2.bf16.msra.mxu0 0
  %657 = vmatprep.mubr.bf16.mxu0 0
  %658 = vmatmul.mubr.bf16.gmra.mxu0 %v572
  %v659 = vpop.f32.mrf.mxu0
  %v660 = vadd.f32 %v459, %v659
  %v661 = vpop.f32.mrf.mxu0
  %v662 = vpop.f32.mrf.mxu0
  %v663 = vpop.f32.mrf.mxu0
  %664 = vdwg.mxu0
  %v665 = vmax.f32 %v619, 0.0
  %v666 = vmax.f32 %v621, 0.0
  %v667 = vmax.f32 %v660, 0.0
  %668 = vst [vmem:[%s3] sm:$0xff] %v665
  %669 = vst [vmem:[%s3 + $0x8] sm:$0xff] %v666
  %670 = vst [vmem:[%s3 + $0x10] sm:$0xff] %v667
  // Predicated region
  $region14: #{hourglass_forward.6} parent=0 // pred_check
    _
  $region15: #{hourglass_forward.6} parent=0 // pred_check_branch
    %672 = sbr.rel (0) target = $region17
  $region16: #{hourglass_forward.6} parent=0 // pred_region
    _
  $region17: #{hourglass_forward.6} parent=0 // pred_fallthru
    _
  // Predicated region
  $region18: #{hourglass_forward.6} parent=0 // pred_check
    _
  $region19: #{hourglass_forward.6} parent=0 // pred_check_branch
    %674 = sbr.rel (0) target = $region21
  $region20: #{hourglass_forward.6} parent=0 // pred_region
    _
  $region21: #{hourglass_forward.6} parent=0 // pred_fallthru
    _

// kernel: hourglass_forward.7
$region0: #{hourglass_forward.7}
  #allocation0 [shape = 'u32[]', space=smem, size = 0x4, offset = 0x4, fixed_abs, tag = 'smem constant byte address 0x4 - core index']
  #allocation1 [shape = 'u32[144,128]{1,0:T(1,128)}', space=vmem, size = 0x12000, scoped, tag = 'internal scratch']
  #allocation2 [shape = 'bf16[216,512]{1,0:T(8,128)(2,1)}', space=vmem, size = 0x36000, scoped, tag = 'scratch operand']
  %s0 = inlined_call_operand.vmem [shape: bf16[1,8,768], index: 0, kind: input, shape index: {}]
  %s1 = inlined_call_operand.vmem [shape: bf16[1,1,8,216], index: 1, kind: input, shape index: {}]
  %s2 = inlined_call_operand.vmem [shape: f32[8,1], index: 2, kind: input, shape index: {}]
  %s3 = inlined_call_operand.vmem [shape: f32[1,8,512], index: 3, kind: output, shape index: {}]
  %s4 = sld [smem:[#allocation0]]
  $region22: #{hourglass_forward.7} parent=0
    _
  %s6 = ssub.s32 1, %s4
  %s7 = scalar_select 0, %s6, %s4
  // Predicated region
  $region2: #{hourglass_forward.7} parent=0 // pred_check
    _
  $region3: #{hourglass_forward.7} parent=0 // pred_check_branch
    %9 = sbr.rel (0) target = $region5
  $region4: #{hourglass_forward.7} parent=0 // pred_region
    _
  $region5: #{hourglass_forward.7} parent=0 // pred_fallthru
    _
  // Predicated region
  $region6: #{hourglass_forward.7} parent=0 // pred_check
    _
  $region7: #{hourglass_forward.7} parent=0 // pred_check_branch
    %11 = sbr.rel (0) target = $region9
  $region8: #{hourglass_forward.7} parent=0 // pred_region
    _
  $region9: #{hourglass_forward.7} parent=0 // pred_fallthru
    _
  // Predicated region
  $region10: #{hourglass_forward.7} parent=0 // pred_check
    _
  $region11: #{hourglass_forward.7} parent=0 // pred_check_branch
    %13 = sbr.rel (0) target = $region13
  $region12: #{hourglass_forward.7} parent=0 // pred_region
    _
  $region13: #{hourglass_forward.7} parent=0 // pred_fallthru
    _
  %v15 = vld [vmem:[%s0] sm:$0xff]
  %v16 = vld [vmem:[%s0 + $0x8] sm:$0xff]
  %17 = vst [vmem:[#allocation2] sm:$0xff] %v15
  %18 = vst [vmem:[#allocation2 + $0x8] sm:$0xff] %v16
  %v19 = vld [vmem:[%s0] sm:$0xff]
  %v20 = vld [vmem:[%s0 + $0x8] sm:$0xff]
  %v21 = vld [vmem:[%s0 + $0x10] sm:$0xf]
  %25 = vrot.lane.b32.xlu0 %v19, 127
  %v26 = vpop.permute.xlu0 %25
  %27 = vrot.lane.b32.xlu0 %v20, 127
  %v28 = vpop.permute.xlu0 %27
  %29 = vrot.lane.b32.xlu0 %v21, 127
  %v30 = vpop.permute.xlu0 %29
  %v31 = vrot.slane %v26, 4
  %v32 = vrot.slane %v28, 4
  %v33 = vrot.slane %v30, 4
  %vm34 = vcmask 1043456
  %v35 = vsel %vm34, %v31, %v32
  %vm36 = vcmask 1039360
  %v37 = vsel %vm36, %v26, %v35
  %v38 = vsel %vm34, %v32, %v33
  %v39 = vsel %vm36, %v28, %v38
  %42 = vst [vmem:[#allocation2 + $0x10] sm:$0xff] %v37
  %43 = vst [vmem:[#allocation2 + $0x18] sm:$0xff] %v39
  %v44 = vld [vmem:[%s0] sm:$0xff]
  %v45 = vld [vmem:[%s0 + $0x8] sm:$0xff]
  %v46 = vld [vmem:[%s0 + $0x10] sm:$0xf]
  %50 = vrot.lane.b32.xlu0 %v44, 126
  %v51 = vpop.permute.xlu0 %50
  %52 = vrot.lane.b32.xlu0 %v45, 126
  %v53 = vpop.permute.xlu0 %52
  %54 = vrot.lane.b32.xlu0 %v46, 126
  %v55 = vpop.permute.xlu0 %54
  %v56 = vrot.slane %v51, 4
  %v57 = vrot.slane %v53, 4
  %v58 = vrot.slane %v55, 4
  %v59 = vsel %vm34, %v56, %v57
  %vm60 = vcmask 1031168
  %v61 = vsel %vm60, %v51, %v59
  %v62 = vsel %vm34, %v57, %v58
  %v63 = vsel %vm60, %v53, %v62
  %66 = vst [vmem:[#allocation2 + $0x20] sm:$0xff] %v61
  %67 = vst [vmem:[#allocation2 + $0x28] sm:$0xff] %v63
  %v68 = vld [vmem:[%s0] sm:$0xff]
  %v69 = vld [vmem:[%s0 + $0x8] sm:$0xff]
  %v70 = vld [vmem:[%s0 + $0x10] sm:$0xf]
  %74 = vrot.lane.b32.xlu0 %v68, 118
  %v75 = vpop.permute.xlu0 %74
  %76 = vrot.lane.b32.xlu0 %v69, 118
  %v77 = vpop.permute.xlu0 %76
  %78 = vrot.lane.b32.xlu0 %v70, 118
  %v79 = vpop.permute.xlu0 %78
  %v80 = vrot.slane %v75, 4
  %v81 = vrot.slane %v77, 4
  %v82 = vrot.slane %v79, 4
  %v83 = vsel %vm34, %v80, %v81
  %vm84 = vcmask 965632
  %v85 = vsel %vm84, %v75, %v83
  %v86 = vsel %vm34, %v81, %v82
  %v87 = vsel %vm84, %v77, %v86
  %90 = vst [vmem:[#allocation2 + $0x30] sm:$0xff] %v85
  %91 = vst [vmem:[#allocation2 + $0x38] sm:$0xff] %v87
  %v92 = vld [vmem:[%s0] sm:$0xff]
  %v93 = vld [vmem:[%s0 + $0x8] sm:$0xff]
  %v94 = vld [vmem:[%s0 + $0x10] sm:$0xf]
  %98 = vrot.lane.b32.xlu0 %v92, 117
  %v99 = vpop.permute.xlu0 %98
  %100 = vrot.lane.b32.xlu0 %v93, 117
  %v101 = vpop.permute.xlu0 %100
  %102 = vrot.lane.b32.xlu0 %v94, 117
  %v103 = vpop.permute.xlu0 %102
  %v104 = vrot.slane %v99, 4
  %v105 = vrot.slane %v101, 4
  %v106 = vrot.slane %v103, 4
  %v107 = vsel %vm34, %v104, %v105
  %vm108 = vcmask 957440
  %v109 = vsel %vm108, %v99, %v107
  %v110 = vsel %vm34, %v105, %v106
  %v111 = vsel %vm108, %v101, %v110
  %114 = vst [vmem:[#allocation2 + $0x40] sm:$0xff] %v109
  %115 = vst [vmem:[#allocation2 + $0x48] sm:$0xff] %v111
  %v116 = vld [vmem:[%s0] sm:$0xff]
  %v117 = vld [vmem:[%s0 + $0x8] sm:$0xff]
  %v118 = vld [vmem:[%s0 + $0x10] sm:$0xf]
  %122 = vrot.lane.b32.xlu0 %v116, 116
  %v123 = vpop.permute.xlu0 %122
  %124 = vrot.lane.b32.xlu0 %v117, 116
  %v125 = vpop.permute.xlu0 %124
  %126 = vrot.lane.b32.xlu0 %v118, 116
  %v127 = vpop.permute.xlu0 %126
  %v128 = vrot.slane %v123, 4
  %v129 = vrot.slane %v125, 4
  %v130 = vrot.slane %v127, 4
  %v131 = vsel %vm34, %v128, %v129
  %vm132 = vcmask 949248
  %v133 = vsel %vm132, %v123, %v131
  %v134 = vsel %vm34, %v129, %v130
  %v135 = vsel %vm132, %v125, %v134
  %138 = vst [vmem:[#allocation2 + $0x50] sm:$0xff] %v133
  %139 = vst [vmem:[#allocation2 + $0x58] sm:$0xff] %v135
  %v140 = vld [vmem:[%s0] sm:$0xff]
  %v141 = vld [vmem:[%s0 + $0x8] sm:$0xff]
  %v142 = vld [vmem:[%s0 + $0x10] sm:$0xf]
  %146 = vrot.lane.b32.xlu0 %v140, 108
  %v147 = vpop.permute.xlu0 %146
  %148 = vrot.lane.b32.xlu0 %v141, 108
  %v149 = vpop.permute.xlu0 %148
  %150 = vrot.lane.b32.xlu0 %v142, 108
  %v151 = vpop.permute.xlu0 %150
  %v152 = vrot.slane %v147, 4
  %v153 = vrot.slane %v149, 4
  %v154 = vrot.slane %v151, 4
  %v155 = vsel %vm34, %v152, %v153
  %vm156 = vcmask 883712
  %v157 = vsel %vm156, %v147, %v155
  %v158 = vsel %vm34, %v153, %v154
  %v159 = vsel %vm156, %v149, %v158
  %162 = vst [vmem:[#allocation2 + $0x60] sm:$0xff] %v157
  %163 = vst [vmem:[#allocation2 + $0x68] sm:$0xff] %v159
  %v164 = vld [vmem:[%s0] sm:$0xff]
  %v165 = vld [vmem:[%s0 + $0x8] sm:$0xff]
  %v166 = vld [vmem:[%s0 + $0x10] sm:$0xf]
  %170 = vrot.lane.b32.xlu0 %v164, 107
  %v171 = vpop.permute.xlu0 %170
  %172 = vrot.lane.b32.xlu0 %v165, 107
  %v173 = vpop.permute.xlu0 %172
  %174 = vrot.lane.b32.xlu0 %v166, 107
  %v175 = vpop.permute.xlu0 %174
  %v176 = vrot.slane %v171, 4
  %v177 = vrot.slane %v173, 4
  %v178 = vrot.slane %v175, 4
  %v179 = vsel %vm34, %v176, %v177
  %vm180 = vcmask 875520
  %v181 = vsel %vm180, %v171, %v179
  %v182 = vsel %vm34, %v177, %v178
  %v183 = vsel %vm180, %v173, %v182
  %186 = vst [vmem:[#allocation2 + $0x70] sm:$0xff] %v181
  %187 = vst [vmem:[#allocation2 + $0x78] sm:$0xff] %v183
  %v188 = vld [vmem:[%s0] sm:$0xff]
  %v189 = vld [vmem:[%s0 + $0x8] sm:$0xff]
  %v190 = vld [vmem:[%s0 + $0x10] sm:$0xf]
  %194 = vrot.lane.b32.xlu0 %v188, 106
  %v195 = vpop.permute.xlu0 %194
  %196 = vrot.lane.b32.xlu0 %v189, 106
  %v197 = vpop.permute.xlu0 %196
  %198 = vrot.lane.b32.xlu0 %v190, 106
  %v199 = vpop.permute.xlu0 %198
  %v200 = vrot.slane %v195, 4
  %v201 = vrot.slane %v197, 4
  %v202 = vrot.slane %v199, 4
  %v203 = vsel %vm34, %v200, %v201
  %vm204 = vcmask 867328
  %v205 = vsel %vm204, %v195, %v203
  %v206 = vsel %vm34, %v201, %v202
  %v207 = vsel %vm204, %v197, %v206
  %210 = vst [vmem:[#allocation2 + $0x80] sm:$0xff] %v205
  %211 = vst [vmem:[#allocation2 + $0x88] sm:$0xff] %v207
  %v212 = vld [vmem:[%s0] sm:$0xff]
  %v213 = vld [vmem:[%s0 + $0x8] sm:$0xff]
  %v214 = vld [vmem:[%s0 + $0x10] sm:$0xf]
  %218 = vrot.lane.b32.xlu0 %v212, 28
  %v219 = vpop.permute.xlu0 %218
  %220 = vrot.lane.b32.xlu0 %v213, 28
  %v221 = vpop.permute.xlu0 %220
  %222 = vrot.lane.b32.xlu0 %v214, 28
  %v223 = vpop.permute.xlu0 %222
  %v224 = vrot.slane %v219, 4
  %v225 = vrot.slane %v221, 4
  %v226 = vrot.slane %v223, 4
  %v227 = vsel %vm34, %v224, %v225
  %vm228 = vcmask 228352
  %v229 = vsel %vm228, %v219, %v227
  %v230 = vsel %vm34, %v225, %v226
  %v231 = vsel %vm228, %v221, %v230
  %234 = vst [vmem:[#allocation2 + $0x90] sm:$0xff] %v229
  %235 = vst [vmem:[#allocation2 + $0x98] sm:$0xff] %v231
  %v236 = vld [vmem:[%s0] sm:$0xff]
  %v237 = vld [vmem:[%s0 + $0x8] sm:$0xff]
  %v238 = vld [vmem:[%s0 + $0x10] sm:$0xf]
  %242 = vrot.lane.b32.xlu0 %v236, 27
  %v243 = vpop.permute.xlu0 %242
  %244 = vrot.lane.b32.xlu0 %v237, 27
  %v245 = vpop.permute.xlu0 %244
  %246 = vrot.lane.b32.xlu0 %v238, 27
  %v247 = vpop.permute.xlu0 %246
  %v248 = vrot.slane %v243, 4
  %v249 = vrot.slane %v245, 4
  %v250 = vrot.slane %v247, 4
  %v251 = vsel %vm34, %v248, %v249
  %vm252 = vcmask 220160
  %v253 = vsel %vm252, %v243, %v251
  %v254 = vsel %vm34, %v249, %v250
  %v255 = vsel %vm252, %v245, %v254
  %258 = vst [vmem:[#allocation2 + $0xa0] sm:$0xff] %v253
  %259 = vst [vmem:[#allocation2 + $0xa8] sm:$0xff] %v255
  %v260 = vld [vmem:[%s0] sm:$0xff]
  %v261 = vld [vmem:[%s0 + $0x8] sm:$0xff]
  %v262 = vld [vmem:[%s0 + $0x10] sm:$0xf]
  %266 = vrot.lane.b32.xlu0 %v260, 26
  %v267 = vpop.permute.xlu0 %266
  %268 = vrot.lane.b32.xlu0 %v261, 26
  %v269 = vpop.permute.xlu0 %268
  %270 = vrot.lane.b32.xlu0 %v262, 26
  %v271 = vpop.permute.xlu0 %270
  %v272 = vrot.slane %v267, 4
  %v273 = vrot.slane %v269, 4
  %v274 = vrot.slane %v271, 4
  %v275 = vsel %vm34, %v272, %v273
  %vm276 = vcmask 211968
  %v277 = vsel %vm276, %v267, %v275
  %v278 = vsel %vm34, %v273, %v274
  %v279 = vsel %vm276, %v269, %v278
  %282 = vst [vmem:[#allocation2 + $0xb0] sm:$0xff] %v277
  %283 = vst [vmem:[#allocation2 + $0xb8] sm:$0xff] %v279
  %v284 = vld [vmem:[%s0] sm:$0xff]
  %v285 = vld [vmem:[%s0 + $0x8] sm:$0xff]
  %v286 = vld [vmem:[%s0 + $0x10] sm:$0xf]
  %290 = vrot.lane.b32.xlu0 %v284, 18
  %v291 = vpop.permute.xlu0 %290
  %292 = vrot.lane.b32.xlu0 %v285, 18
  %v293 = vpop.permute.xlu0 %292
  %294 = vrot.lane.b32.xlu0 %v286, 18
  %v295 = vpop.permute.xlu0 %294
  %v296 = vrot.slane %v291, 4
  %v297 = vrot.slane %v293, 4
  %v298 = vrot.slane %v295, 4
  %v299 = vsel %vm34, %v296, %v297
  %vm300 = vcmask 146432
  %v301 = vsel %vm300, %v291, %v299
  %v302 = vsel %vm34, %v297, %v298
  %v303 = vsel %vm300, %v293, %v302
  %306 = vst [vmem:[#allocation2 + $0xc0] sm:$0xff] %v301
  %307 = vst [vmem:[#allocation2 + $0xc8] sm:$0xff] %v303
  %v308 = vld [vmem:[%s0] sm:$0xff]
  %v309 = vld [vmem:[%s0 + $0x8] sm:$0xff]
  %v310 = vld [vmem:[%s0 + $0x10] sm:$0xf]
  %314 = vrot.lane.b32.xlu0 %v308, 17
  %v315 = vpop.permute.xlu0 %314
  %316 = vrot.lane.b32.xlu0 %v309, 17
  %v317 = vpop.permute.xlu0 %316
  %318 = vrot.lane.b32.xlu0 %v310, 17
  %v319 = vpop.permute.xlu0 %318
  %v320 = vrot.slane %v315, 4
  %v321 = vrot.slane %v317, 4
  %v322 = vrot.slane %v319, 4
  %v323 = vsel %vm34, %v320, %v321
  %vm324 = vcmask 138240
  %v325 = vsel %vm324, %v315, %v323
  %v326 = vsel %vm34, %v321, %v322
  %v327 = vsel %vm324, %v317, %v326
  %330 = vst [vmem:[#allocation2 + $0xd0] sm:$0xff] %v325
  %331 = vst [vmem:[#allocation2 + $0xd8] sm:$0xff] %v327
  %v332 = vld [vmem:[%s0] sm:$0xff]
  %v333 = vld [vmem:[%s0 + $0x8] sm:$0xff]
  %v334 = vld [vmem:[%s0 + $0x10] sm:$0xf]
  %338 = vrot.lane.b32.xlu0 %v332, 16
  %v339 = vpop.permute.xlu0 %338
  %340 = vrot.lane.b32.xlu0 %v333, 16
  %v341 = vpop.permute.xlu0 %340
  %342 = vrot.lane.b32.xlu0 %v334, 16
  %v343 = vpop.permute.xlu0 %342
  %v344 = vrot.slane %v339, 4
  %v345 = vrot.slane %v341, 4
  %v346 = vrot.slane %v343, 4
  %v347 = vsel %vm34, %v344, %v345
  %vm348 = vcmask 130048
  %v349 = vsel %vm348, %v339, %v347
  %v350 = vsel %vm34, %v345, %v346
  %v351 = vsel %vm348, %v341, %v350
  %354 = vst [vmem:[#allocation2 + $0xe0] sm:$0xff] %v349
  %355 = vst [vmem:[#allocation2 + $0xe8] sm:$0xff] %v351
  %v356 = vld [vmem:[%s0] sm:$0xff]
  %v357 = vld [vmem:[%s0 + $0x8] sm:$0xff]
  %v358 = vld [vmem:[%s0 + $0x10] sm:$0xf]
  %362 = vrot.lane.b32.xlu0 %v356, 8
  %v363 = vpop.permute.xlu0 %362
  %364 = vrot.lane.b32.xlu0 %v357, 8
  %v365 = vpop.permute.xlu0 %364
  %366 = vrot.lane.b32.xlu0 %v358, 8
  %v367 = vpop.permute.xlu0 %366
  %v368 = vrot.slane %v363, 4
  %v369 = vrot.slane %v365, 4
  %v370 = vrot.slane %v367, 4
  %v371 = vsel %vm34, %v368, %v369
  %vm372 = vcmask 64512
  %v373 = vsel %vm372, %v363, %v371
  %v374 = vsel %vm34, %v369, %v370
  %v375 = vsel %vm372, %v365, %v374
  %378 = vst [vmem:[#allocation2 + $0xf0] sm:$0xff] %v373
  %379 = vst [vmem:[#allocation2 + $0xf8] sm:$0xff] %v375
  %v380 = vld [vmem:[%s0] sm:$0xff]
  %v381 = vld [vmem:[%s0 + $0x8] sm:$0xff]
  %v382 = vld [vmem:[%s0 + $0x10] sm:$0xf]
  %386 = vrot.lane.b32.xlu0 %v380, 7
  %v387 = vpop.permute.xlu0 %386
  %388 = vrot.lane.b32.xlu0 %v381, 7
  %v389 = vpop.permute.xlu0 %388
  %390 = vrot.lane.b32.xlu0 %v382, 7
  %v391 = vpop.permute.xlu0 %390
  %v392 = vrot.slane %v387, 4
  %v393 = vrot.slane %v389, 4
  %v394 = vrot.slane %v391, 4
  %v395 = vsel %vm34, %v392, %v393
  %vm396 = vcmask 56320
  %v397 = vsel %vm396, %v387, %v395
  %v398 = vsel %vm34, %v393, %v394
  %v399 = vsel %vm396, %v389, %v398
  %402 = vst [vmem:[#allocation2 + $0x100] sm:$0xff] %v397
  %403 = vst [vmem:[#allocation2 + $0x108] sm:$0xff] %v399
  %v404 = vld [vmem:[%s0] sm:$0xff]
  %v405 = vld [vmem:[%s0 + $0x8] sm:$0xff]
  %v406 = vld [vmem:[%s0 + $0x10] sm:$0xf]
  %410 = vrot.lane.b32.xlu0 %v404, 6
  %v411 = vpop.permute.xlu0 %410
  %412 = vrot.lane.b32.xlu0 %v405, 6
  %v413 = vpop.permute.xlu0 %412
  %414 = vrot.lane.b32.xlu0 %v406, 6
  %v415 = vpop.permute.xlu0 %414
  %v416 = vrot.slane %v411, 4
  %v417 = vrot.slane %v413, 4
  %v418 = vrot.slane %v415, 4
  %v419 = vsel %vm34, %v416, %v417
  %vm420 = vcmask 48128
  %v421 = vsel %vm420, %v411, %v419
  %v422 = vsel %vm34, %v417, %v418
  %v423 = vsel %vm420, %v413, %v422
  %426 = vst [vmem:[#allocation2 + $0x110] sm:$0xff] %v421
  %427 = vst [vmem:[#allocation2 + $0x118] sm:$0xff] %v423
  %v428 = vld [vmem:[%s0 + $0x4] sm:$0xff]
  %v429 = vld [vmem:[%s0 + $0xc] sm:$0xff]
  %v430 = vld [vmem:[%s0 + $0x14] sm:$0xf]
  %434 = vrot.lane.b32.xlu0 %v428, 56
  %v435 = vpop.permute.xlu0 %434
  %436 = vrot.lane.b32.xlu0 %v429, 56
  %v437 = vpop.permute.xlu0 %436
  %438 = vrot.lane.b32.xlu0 %v430, 56
  %v439 = vpop.permute.xlu0 %438
  %v440 = vrot.slane %v435, 4
  %v441 = vrot.slane %v437, 4
  %v442 = vrot.slane %v439, 4
  %v443 = vsel %vm34, %v440, %v441
  %vm444 = vcmask 457728
  %v445 = vsel %vm444, %v435, %v443
  %v446 = vsel %vm34, %v441, %v442
  %v447 = vsel %vm444, %v437, %v446
  %450 = vst [vmem:[#allocation2 + $0x120] sm:$0xff] %v445
  %451 = vst [vmem:[#allocation2 + $0x128] sm:$0xff] %v447
  %v452 = vld [vmem:[%s0 + $0x4] sm:$0xff]
  %v453 = vld [vmem:[%s0 + $0xc] sm:$0xff]
  %v454 = vld [vmem:[%s0 + $0x14] sm:$0xf]
  %458 = vrot.lane.b32.xlu0 %v452, 55
  %v459 = vpop.permute.xlu0 %458
  %460 = vrot.lane.b32.xlu0 %v453, 55
  %v461 = vpop.permute.xlu0 %460
  %462 = vrot.lane.b32.xlu0 %v454, 55
  %v463 = vpop.permute.xlu0 %462
  %v464 = vrot.slane %v459, 4
  %v465 = vrot.slane %v461, 4
  %v466 = vrot.slane %v463, 4
  %v467 = vsel %vm34, %v464, %v465
  %vm468 = vcmask 449536
  %v469 = vsel %vm468, %v459, %v467
  %v470 = vsel %vm34, %v465, %v466
  %v471 = vsel %vm468, %v461, %v470
  %474 = vst [vmem:[#allocation2 + $0x130] sm:$0xff] %v469
  %475 = vst [vmem:[#allocation2 + $0x138] sm:$0xff] %v471
  %v476 = vld [vmem:[%s0 + $0x4] sm:$0xff]
  %v477 = vld [vmem:[%s0 + $0xc] sm:$0xff]
  %v478 = vld [vmem:[%s0 + $0x14] sm:$0xf]
  %482 = vrot.lane.b32.xlu0 %v476, 54
  %v483 = vpop.permute.xlu0 %482
  %484 = vrot.lane.b32.xlu0 %v477, 54
  %v485 = vpop.permute.xlu0 %484
  %486 = vrot.lane.b32.xlu0 %v478, 54
  %v487 = vpop.permute.xlu0 %486
  %v488 = vrot.slane %v483, 4
  %v489 = vrot.slane %v485, 4
  %v490 = vrot.slane %v487, 4
  %v491 = vsel %vm34, %v488, %v489
  %vm492 = vcmask 441344
  %v493 = vsel %vm492, %v483, %v491
  %v494 = vsel %vm34, %v489, %v490
  %v495 = vsel %vm492, %v485, %v494
  %498 = vst [vmem:[#allocation2 + $0x140] sm:$0xff] %v493
  %499 = vst [vmem:[#allocation2 + $0x148] sm:$0xff] %v495
  %v500 = vld [vmem:[%s0 + $0x4] sm:$0xff]
  %v501 = vld [vmem:[%s0 + $0xc] sm:$0xff]
  %v502 = vld [vmem:[%s0 + $0x14] sm:$0xf]
  %506 = vrot.lane.b32.xlu0 %v500, 46
  %v507 = vpop.permute.xlu0 %506
  %508 = vrot.lane.b32.xlu0 %v501, 46
  %v509 = vpop.permute.xlu0 %508
  %510 = vrot.lane.b32.xlu0 %v502, 46
  %v511 = vpop.permute.xlu0 %510
  %v512 = vrot.slane %v507, 4
  %v513 = vrot.slane %v509, 4
  %v514 = vrot.slane %v511, 4
  %v515 = vsel %vm34, %v512, %v513
  %vm516 = vcmask 375808
  %v517 = vsel %vm516, %v507, %v515
  %v518 = vsel %vm34, %v513, %v514
  %v519 = vsel %vm516, %v509, %v518
  %522 = vst [vmem:[#allocation2 + $0x150] sm:$0xff] %v517
  %523 = vst [vmem:[#allocation2 + $0x158] sm:$0xff] %v519
  %v524 = vld [vmem:[%s0 + $0x4] sm:$0xff]
  %v525 = vld [vmem:[%s0 + $0xc] sm:$0xff]
  %v526 = vld [vmem:[%s0 + $0x14] sm:$0xf]
  %530 = vrot.lane.b32.xlu0 %v524, 45
  %v531 = vpop.permute.xlu0 %530
  %532 = vrot.lane.b32.xlu0 %v525, 45
  %v533 = vpop.permute.xlu0 %532
  %534 = vrot.lane.b32.xlu0 %v526, 45
  %v535 = vpop.permute.xlu0 %534
  %v536 = vrot.slane %v531, 4
  %v537 = vrot.slane %v533, 4
  %v538 = vrot.slane %v535, 4
  %v539 = vsel %vm34, %v536, %v537
  %vm540 = vcmask 367616
  %v541 = vsel %vm540, %v531, %v539
  %v542 = vsel %vm34, %v537, %v538
  %v543 = vsel %vm540, %v533, %v542
  %546 = vst [vmem:[#allocation2 + $0x160] sm:$0xff] %v541
  %547 = vst [vmem:[#allocation2 + $0x168] sm:$0xff] %v543
  %v548 = vld [vmem:[%s0 + $0x4] sm:$0xff]
  %v549 = vld [vmem:[%s0 + $0xc] sm:$0xff]
  %v550 = vld [vmem:[%s0 + $0x14] sm:$0xf]
  %554 = vrot.lane.b32.xlu0 %v548, 44
  %v555 = vpop.permute.xlu0 %554
  %556 = vrot.lane.b32.xlu0 %v549, 44
  %v557 = vpop.permute.xlu0 %556
  %558 = vrot.lane.b32.xlu0 %v550, 44
  %v559 = vpop.permute.xlu0 %558
  %v560 = vrot.slane %v555, 4
  %v561 = vrot.slane %v557, 4
  %v562 = vrot.slane %v559, 4
  %v563 = vsel %vm34, %v560, %v561
  %vm564 = vcmask 359424
  %v565 = vsel %vm564, %v555, %v563
  %v566 = vsel %vm34, %v561, %v562
  %v567 = vsel %vm564, %v557, %v566
  %570 = vst [vmem:[#allocation2 + $0x170] sm:$0xff] %v565
  %571 = vst [vmem:[#allocation2 + $0x178] sm:$0xff] %v567
  %v572 = vld [vmem:[%s0 + $0x4] sm:$0xff]
  %v573 = vld [vmem:[%s0 + $0xc] sm:$0xff]
  %v574 = vld [vmem:[%s0 + $0x14] sm:$0xf]
  %578 = vrot.lane.b32.xlu0 %v572, 36
  %v579 = vpop.permute.xlu0 %578
  %580 = vrot.lane.b32.xlu0 %v573, 36
  %v581 = vpop.permute.xlu0 %580
  %582 = vrot.lane.b32.xlu0 %v574, 36
  %v583 = vpop.permute.xlu0 %582
  %v584 = vrot.slane %v579, 4
  %v585 = vrot.slane %v581, 4
  %v586 = vrot.slane %v583, 4
  %v587 = vsel %vm34, %v584, %v585
  %vm588 = vcmask 293888
  %v589 = vsel %vm588, %v579, %v587
  %v590 = vsel %vm34, %v585, %v586
  %v591 = vsel %vm588, %v581, %v590
  %594 = vst [vmem:[#allocation2 + $0x180] sm:$0xff] %v589
  %595 = vst [vmem:[#allocation2 + $0x188] sm:$0xff] %v591
  %v596 = vld [vmem:[%s0 + $0x4] sm:$0xff]
  %v597 = vld [vmem:[%s0 + $0xc] sm:$0xff]
  %v598 = vld [vmem:[%s0 + $0x14] sm:$0xf]
  %602 = vrot.lane.b32.xlu0 %v596, 35
  %v603 = vpop.permute.xlu0 %602
  %604 = vrot.lane.b32.xlu0 %v597, 35
  %v605 = vpop.permute.xlu0 %604
  %606 = vrot.lane.b32.xlu0 %v598, 35
  %v607 = vpop.permute.xlu0 %606
  %v608 = vrot.slane %v603, 4
  %v609 = vrot.slane %v605, 4
  %v610 = vrot.slane %v607, 4
  %v611 = vsel %vm34, %v608, %v609
  %vm612 = vcmask 285696
  %v613 = vsel %vm612, %v603, %v611
  %v614 = vsel %vm34, %v609, %v610
  %v615 = vsel %vm612, %v605, %v614
  %618 = vst [vmem:[#allocation2 + $0x190] sm:$0xff] %v613
  %619 = vst [vmem:[#allocation2 + $0x198] sm:$0xff] %v615
  %v620 = vld [vmem:[%s0 + $0x4] sm:$0xff]
  %v621 = vld [vmem:[%s0 + $0xc] sm:$0xff]
  %v622 = vld [vmem:[%s0 + $0x14] sm:$0xf]
  %626 = vrot.lane.b32.xlu0 %v620, 34
  %v627 = vpop.permute.xlu0 %626
  %628 = vrot.lane.b32.xlu0 %v621, 34
  %v629 = vpop.permute.xlu0 %628
  %630 = vrot.lane.b32.xlu0 %v622, 34
  %v631 = vpop.permute.xlu0 %630
  %v632 = vrot.slane %v627, 4
  %v633 = vrot.slane %v629, 4
  %v634 = vrot.slane %v631, 4
  %v635 = vsel %vm34, %v632, %v633
  %vm636 = vcmask 277504
  %v637 = vsel %vm636, %v627, %v635
  %v638 = vsel %vm34, %v633, %v634
  %v639 = vsel %vm636, %v629, %v638
  %642 = vst [vmem:[#allocation2 + $0x1a0] sm:$0xff] %v637
  %643 = vst [vmem:[#allocation2 + $0x1a8] sm:$0xff] %v639
  %v644 = vld [vmem:[#allocation2] sm:$0xff]
  %v645 = vld [vmem:[#allocation2 + $0x8] sm:$0xff]
  %v646 = vld [vmem:[#allocation2 + $0x10] sm:$0xff]
  %v647 = vld [vmem:[#allocation2 + $0x18] sm:$0xff]
  %v648 = vld [vmem:[#allocation2 + $0x20] sm:$0xff]
  %v649 = vld [vmem:[#allocation2 + $0x28] sm:$0xff]
  %v650 = vld [vmem:[#allocation2 + $0x30] sm:$0xff]
  %v651 = vld [vmem:[#allocation2 + $0x38] sm:$0xff]
  %v652 = vld [vmem:[#allocation2 + $0x40] sm:$0xff]
  %v653 = vld [vmem:[#allocation2 + $0x48] sm:$0xff]
  %v654 = vld [vmem:[#allocation2 + $0x50] sm:$0xff]
  %v655 = vld [vmem:[#allocation2 + $0x58] sm:$0xff]
  %v656 = vld [vmem:[#allocation2 + $0x60] sm:$0xff]
  %v657 = vld [vmem:[#allocation2 + $0x68] sm:$0xff]
  %v658 = vld [vmem:[#allocation2 + $0x70] sm:$0xff]
  %v659 = vld [vmem:[#allocation2 + $0x78] sm:$0xff]
  %v660 = vld [vmem:[#allocation2 + $0x80] sm:$0xff]
  %v661 = vld [vmem:[#allocation2 + $0x88] sm:$0xff]
  %v662 = vld [vmem:[#allocation2 + $0x90] sm:$0xff]
  %v663 = vld [vmem:[#allocation2 + $0x98] sm:$0xff]
  %v664 = vld [vmem:[#allocation2 + $0xa0] sm:$0xff]
  %v665 = vld [vmem:[#allocation2 + $0xa8] sm:$0xff]
  %v666 = vld [vmem:[#allocation2 + $0xb0] sm:$0xff]
  %v667 = vld [vmem:[#allocation2 + $0xb8] sm:$0xff]
  %v668 = vld [vmem:[#allocation2 + $0xc0] sm:$0xff]
  %v669 = vld [vmem:[#allocation2 + $0xc8] sm:$0xff]
  %v670 = vld [vmem:[#allocation2 + $0xd0] sm:$0xff]
  %v671 = vld [vmem:[#allocation2 + $0xd8] sm:$0xff]
  %v672 = vld [vmem:[#allocation2 + $0xe0] sm:$0xff]
  %v673 = vld [vmem:[#allocation2 + $0xe8] sm:$0xff]
  %v674 = vld [vmem:[#allocation2 + $0xf0] sm:$0xff]
  %v675 = vld [vmem:[#allocation2 + $0xf8] sm:$0xff]
  %v676 = vld [vmem:[#allocation2 + $0x100] sm:$0xff]
  %v677 = vld [vmem:[#allocation2 + $0x108] sm:$0xff]
  %v678 = vld [vmem:[#allocation2 + $0x110] sm:$0xff]
  %v679 = vld [vmem:[#allocation2 + $0x118] sm:$0xff]
  %v680 = vld [vmem:[#allocation2 + $0x120] sm:$0xff]
  %v681 = vld [vmem:[#allocation2 + $0x128] sm:$0xff]
  %v682 = vld [vmem:[#allocation2 + $0x130] sm:$0xff]
  %v683 = vld [vmem:[#allocation2 + $0x138] sm:$0xff]
  %v684 = vld [vmem:[#allocation2 + $0x140] sm:$0xff]
  %v685 = vld [vmem:[#allocation2 + $0x148] sm:$0xff]
  %v686 = vld [vmem:[#allocation2 + $0x150] sm:$0xff]
  %v687 = vld [vmem:[#allocation2 + $0x158] sm:$0xff]
  %v688 = vld [vmem:[#allocation2 + $0x160] sm:$0xff]
  %v689 = vld [vmem:[#allocation2 + $0x168] sm:$0xff]
  %v690 = vld [vmem:[#allocation2 + $0x170] sm:$0xff]
  %v691 = vld [vmem:[#allocation2 + $0x178] sm:$0xff]
  %v692 = vld [vmem:[#allocation2 + $0x180] sm:$0xff]
  %v693 = vld [vmem:[#allocation2 + $0x188] sm:$0xff]
  %v694 = vld [vmem:[#allocation2 + $0x190] sm:$0xff]
  %v695 = vld [vmem:[#allocation2 + $0x198] sm:$0xff]
  %v696 = vld [vmem:[#allocation2 + $0x1a0] sm:$0xff]
  %v697 = vld [vmem:[#allocation2 + $0x1a8] sm:$0xff]
  %v698 = vld [vmem:[%s2] sm:$0xff]
  %v699 = vld [vmem:[%s1] sm:$0xff]
  %701 = vset.pattern.permute.xlu0 0
  %702 = vperm.xlu0 %701, %v698
  %v703 = vpop.permute.xlu0 %702
  %v706 = vunpack.c.l.b16 %v699
  %v707 = vunpack.c.h.b16 %v699
  %v708 = vpack.c.b16 %v706, %v706
  %v709 = vpack.c.b16 %v707, %v707
  %v765 = vunpack.c.l.b16 %v644
  %v766 = vunpack.c.h.b16 %v644
  %v767 = vunpack.c.l.b16 %v645
  %v768 = vunpack.c.h.b16 %v645
  %v769 = vunpack.c.l.b16 %v646
  %v770 = vunpack.c.h.b16 %v646
  %v771 = vunpack.c.l.b16 %v647
  %v772 = vunpack.c.h.b16 %v647
  %v773 = vunpack.c.l.b16 %v648
  %v774 = vunpack.c.h.b16 %v648
  %v775 = vunpack.c.l.b16 %v649
  %v776 = vunpack.c.h.b16 %v649
  %v777 = vunpack.c.l.b16 %v650
  %v778 = vunpack.c.h.b16 %v650
  %v779 = vunpack.c.l.b16 %v651
  %v780 = vunpack.c.h.b16 %v651
  %v781 = vunpack.c.l.b16 %v652
  %v782 = vunpack.c.h.b16 %v652
  %v783 = vunpack.c.l.b16 %v653
  %v784 = vunpack.c.h.b16 %v653
  %v785 = vunpack.c.l.b16 %v654
  %v786 = vunpack.c.h.b16 %v654
  %v787 = vunpack.c.l.b16 %v655
  %v788 = vunpack.c.h.b16 %v655
  %v789 = vunpack.c.l.b16 %v656
  %v790 = vunpack.c.h.b16 %v656
  %v791 = vunpack.c.l.b16 %v657
  %v792 = vunpack.c.h.b16 %v657
  %v793 = vunpack.c.l.b16 %v658
  %v794 = vunpack.c.h.b16 %v658
  %v795 = vunpack.c.l.b16 %v659
  %v796 = vunpack.c.h.b16 %v659
  %v797 = vunpack.c.l.b16 %v660
  %v798 = vunpack.c.h.b16 %v660
  %v799 = vunpack.c.l.b16 %v661
  %v800 = vunpack.c.h.b16 %v661
  %v801 = vunpack.c.l.b16 %v662
  %v802 = vunpack.c.h.b16 %v662
  %v803 = vunpack.c.l.b16 %v663
  %v804 = vunpack.c.h.b16 %v663
  %v805 = vunpack.c.l.b16 %v664
  %v806 = vunpack.c.h.b16 %v664
  %v807 = vunpack.c.l.b16 %v665
  %v808 = vunpack.c.h.b16 %v665
  %v809 = vunpack.c.l.b16 %v666
  %v810 = vunpack.c.h.b16 %v666
  %v811 = vunpack.c.l.b16 %v667
  %v812 = vunpack.c.h.b16 %v667
  %v813 = vunpack.c.l.b16 %v668
  %v814 = vunpack.c.h.b16 %v668
  %v815 = vunpack.c.l.b16 %v669
  %v816 = vunpack.c.h.b16 %v669
  %v817 = vunpack.c.l.b16 %v670
  %v818 = vunpack.c.h.b16 %v670
  %v819 = vunpack.c.l.b16 %v671
  %v820 = vunpack.c.h.b16 %v671
  %v821 = vunpack.c.l.b16 %v672
  %v822 = vunpack.c.h.b16 %v672
  %v823 = vunpack.c.l.b16 %v673
  %v824 = vunpack.c.h.b16 %v673
  %v825 = vunpack.c.l.b16 %v674
  %v826 = vunpack.c.h.b16 %v674
  %v827 = vunpack.c.l.b16 %v675
  %v828 = vunpack.c.h.b16 %v675
  %v829 = vunpack.c.l.b16 %v676
  %v830 = vunpack.c.h.b16 %v676
  %v831 = vunpack.c.l.b16 %v677
  %v832 = vunpack.c.h.b16 %v677
  %v833 = vunpack.c.l.b16 %v678
  %v834 = vunpack.c.h.b16 %v678
  %v835 = vunpack.c.l.b16 %v679
  %v836 = vunpack.c.h.b16 %v679
  %v837 = vunpack.c.l.b16 %v680
  %v838 = vunpack.c.h.b16 %v680
  %v839 = vunpack.c.l.b16 %v681
  %v840 = vunpack.c.h.b16 %v681
  %v841 = vunpack.c.l.b16 %v682
  %v842 = vunpack.c.h.b16 %v682
  %v843 = vunpack.c.l.b16 %v683
  %v844 = vunpack.c.h.b16 %v683
  %v845 = vunpack.c.l.b16 %v684
  %v846 = vunpack.c.h.b16 %v684
  %v847 = vunpack.c.l.b16 %v685
  %v848 = vunpack.c.h.b16 %v685
  %v849 = vunpack.c.l.b16 %v686
  %v850 = vunpack.c.h.b16 %v686
  %v851 = vunpack.c.l.b16 %v687
  %v852 = vunpack.c.h.b16 %v687
  %v853 = vunpack.c.l.b16 %v688
  %v854 = vunpack.c.h.b16 %v688
  %v855 = vunpack.c.l.b16 %v689
  %v856 = vunpack.c.h.b16 %v689
  %v857 = vunpack.c.l.b16 %v690
  %v858 = vunpack.c.h.b16 %v690
  %v859 = vunpack.c.l.b16 %v691
  %v860 = vunpack.c.h.b16 %v691
  %v861 = vunpack.c.l.b16 %v692
  %v862 = vunpack.c.h.b16 %v692
  %v863 = vunpack.c.l.b16 %v693
  %v864 = vunpack.c.h.b16 %v693
  %v865 = vunpack.c.l.b16 %v694
  %v866 = vunpack.c.h.b16 %v694
  %v867 = vunpack.c.l.b16 %v695
  %v868 = vunpack.c.h.b16 %v695
  %v869 = vunpack.c.l.b16 %v696
  %v870 = vunpack.c.h.b16 %v696
  %v871 = vunpack.c.l.b16 %v697
  %v872 = vunpack.c.h.b16 %v697
  %v873 = vpack.c.b16 %v769, %v765
  %v874 = vpack.c.b16 %v770, %v766
  %v875 = vpack.c.b16 %v771, %v767
  %v876 = vpack.c.b16 %v772, %v768
  %v877 = vpack.c.b16 %v777, %v773
  %v878 = vpack.c.b16 %v778, %v774
  %v879 = vpack.c.b16 %v779, %v775
  %v880 = vpack.c.b16 %v780, %v776
  %v881 = vpack.c.b16 %v785, %v781
  %v882 = vpack.c.b16 %v786, %v782
  %v883 = vpack.c.b16 %v787, %v783
  %v884 = vpack.c.b16 %v788, %v784
  %v885 = vpack.c.b16 %v793, %v789
  %v886 = vpack.c.b16 %v794, %v790
  %v887 = vpack.c.b16 %v795, %v791
  %v888 = vpack.c.b16 %v796, %v792
  %v889 = vpack.c.b16 %v801, %v797
  %v890 = vpack.c.b16 %v802, %v798
  %v891 = vpack.c.b16 %v803, %v799
  %v892 = vpack.c.b16 %v804, %v800
  %v893 = vpack.c.b16 %v809, %v805
  %v894 = vpack.c.b16 %v810, %v806
  %v895 = vpack.c.b16 %v811, %v807
  %v896 = vpack.c.b16 %v812, %v808
  %v897 = vpack.c.b16 %v817, %v813
  %v898 = vpack.c.b16 %v818, %v814
  %v899 = vpack.c.b16 %v819, %v815
  %v900 = vpack.c.b16 %v820, %v816
  %v901 = vpack.c.b16 %v825, %v821
  %v902 = vpack.c.b16 %v826, %v822
  %v903 = vpack.c.b16 %v827, %v823
  %v904 = vpack.c.b16 %v828, %v824
  %v905 = vpack.c.b16 %v833, %v829
  %v906 = vpack.c.b16 %v834, %v830
  %v907 = vpack.c.b16 %v835, %v831
  %v908 = vpack.c.b16 %v836, %v832
  %v909 = vpack.c.b16 %v841, %v837
  %v910 = vpack.c.b16 %v842, %v838
  %v911 = vpack.c.b16 %v843, %v839
  %v912 = vpack.c.b16 %v844, %v840
  %v913 = vpack.c.b16 %v849, %v845
  %v914 = vpack.c.b16 %v850, %v846
  %v915 = vpack.c.b16 %v851, %v847
  %v916 = vpack.c.b16 %v852, %v848
  %v917 = vpack.c.b16 %v857, %v853
  %v918 = vpack.c.b16 %v858, %v854
  %v919 = vpack.c.b16 %v859, %v855
  %v920 = vpack.c.b16 %v860, %v856
  %v921 = vpack.c.b16 %v865, %v861
  %v922 = vpack.c.b16 %v866, %v862
  %v923 = vpack.c.b16 %v867, %v863
  %v924 = vpack.c.b16 %v868, %v864
  %v925 = vpack.c.b16 %v869, %v869
  %v926 = vpack.c.b16 %v870, %v870
  %v927 = vpack.c.b16 %v871, %v871
  %v928 = vpack.c.b16 %v872, %v872
  %vm981 = vcmask 719872
  %v983 = vsel %vm981, %v709, 0
  %vm985 = vcmask 1043456
  %v987 = vsel %vm985, %v925, 0
  %v990 = vsel %vm985, %v926, 0
  %v993 = vsel %vm985, %v927, 0
  %v996 = vsel %vm985, %v928, 0
  %998 = vmatprep.subr.bf16.mxu0 %v902
  %999 = vmatpush1.bf16.msra.mxu0 %v901
  %1000 = vmatprep.subr.bf16.mxu0 %v898
  %1001 = vmatpush1.bf16.msra.mxu0 %v897
  %1002 = vmatprep.subr.bf16.mxu0 %v894
  %1003 = vmatpush1.bf16.msra.mxu0 %v893
  %1004 = vmatprep.subr.bf16.mxu0 %v890
  %1005 = vmatpush1.bf16.msra.mxu0 %v889
  %1006 = vmatprep.subr.bf16.mxu0 %v886
  %1007 = vmatpush1.bf16.msra.mxu0 %v885
  %1008 = vmatprep.subr.bf16.mxu0 %v882
  %1009 = vmatpush1.bf16.msra.mxu0 %v881
  %1010 = vmatprep.subr.bf16.mxu0 %v878
  %1011 = vmatpush1.bf16.msra.mxu0 %v877
  %1012 = vmatprep.subr.bf16.mxu0 %v874
  %1013 = vmatpush1.bf16.msra.mxu0 %v873
  %1014 = vmatprep.subr.bf16.mxu0 0
  %1015 = vmatpush2.bf16.msra.mxu0 0
  %1016 = vmatprep.subr.bf16.mxu0 0
  %1017 = vmatpush2.bf16.msra.mxu0 0
  %1018 = vmatprep.subr.bf16.mxu0 %v990
  %1019 = vmatpush2.bf16.msra.mxu0 %v987
  %1020 = vmatprep.subr.bf16.mxu0 %v922
  %1021 = vmatpush2.bf16.msra.mxu0 %v921
  %1022 = vmatprep.subr.bf16.mxu0 %v918
  %1023 = vmatpush2.bf16.msra.mxu0 %v917
  %1024 = vmatprep.subr.bf16.mxu0 %v914
  %1025 = vmatpush2.bf16.msra.mxu0 %v913
  %1026 = vmatprep.subr.bf16.mxu0 %v910
  %1027 = vmatpush2.bf16.msra.mxu0 %v909
  %1028 = vmatprep.subr.bf16.mxu0 %v906
  %1029 = vmatpush2.bf16.msra.mxu0 %v905
  %1030 = vmatprep.mubr.bf16.mxu0 %v983
  %1031 = vmatmul.mubr.bf16.gmra.mxu0 %v708
  %v1032 = vpop.f32.mrf.mxu0
  %v1033 = vadd.f32 %v703, %v1032
  %v1034 = vpop.f32.mrf.mxu0
  %v1035 = vadd.f32 %v703, %v1034
  %v1036 = vpop.f32.mrf.mxu0
  %v1037 = vpop.f32.mrf.mxu0
  %1038 = vdwg.mxu0
  %1039 = vmatprep.subr.bf16.mxu0 %v904
  %1040 = vmatpush1.bf16.msra.mxu0 %v903
  %1041 = vmatprep.subr.bf16.mxu0 %v900
  %1042 = vmatpush1.bf16.msra.mxu0 %v899
  %1043 = vmatprep.subr.bf16.mxu0 %v896
  %1044 = vmatpush1.bf16.msra.mxu0 %v895
  %1045 = vmatprep.subr.bf16.mxu0 %v892
  %1046 = vmatpush1.bf16.msra.mxu0 %v891
  %1047 = vmatprep.subr.bf16.mxu0 %v888
  %1048 = vmatpush1.bf16.msra.mxu0 %v887
  %1049 = vmatprep.subr.bf16.mxu0 %v884
  %1050 = vmatpush1.bf16.msra.mxu0 %v883
  %1051 = vmatprep.subr.bf16.mxu0 %v880
  %1052 = vmatpush1.bf16.msra.mxu0 %v879
  %1053 = vmatprep.subr.bf16.mxu0 %v876
  %1054 = vmatpush1.bf16.msra.mxu0 %v875
  %1055 = vmatprep.subr.bf16.mxu0 0
  %1056 = vmatpush2.bf16.msra.mxu0 0
  %1057 = vmatprep.subr.bf16.mxu0 0
  %1058 = vmatpush2.bf16.msra.mxu0 0
  %1059 = vmatprep.subr.bf16.mxu0 %v996
  %1060 = vmatpush2.bf16.msra.mxu0 %v993
  %1061 = vmatprep.subr.bf16.mxu0 %v924
  %1062 = vmatpush2.bf16.msra.mxu0 %v923
  %1063 = vmatprep.subr.bf16.mxu0 %v920
  %1064 = vmatpush2.bf16.msra.mxu0 %v919
  %1065 = vmatprep.subr.bf16.mxu0 %v916
  %1066 = vmatpush2.bf16.msra.mxu0 %v915
  %1067 = vmatprep.subr.bf16.mxu0 %v912
  %1068 = vmatpush2.bf16.msra.mxu0 %v911
  %1069 = vmatprep.subr.bf16.mxu0 %v908
  %1070 = vmatpush2.bf16.msra.mxu0 %v907
  %1071 = vmatprep.mubr.bf16.mxu0 %v983
  %1072 = vmatmul.mubr.bf16.gmra.mxu0 %v708
  %v1073 = vpop.f32.mrf.mxu0
  %v1074 = vadd.f32 %v703, %v1073
  %v1075 = vpop.f32.mrf.mxu0
  %v1076 = vadd.f32 %v703, %v1075
  %v1077 = vpop.f32.mrf.mxu0
  %v1078 = vpop.f32.mrf.mxu0
  %1079 = vdwg.mxu0
  %v1080 = vmax.f32 %v1033, 0.0
  %v1081 = vmax.f32 %v1035, 0.0
  %v1082 = vmax.f32 %v1074, 0.0
  %v1083 = vmax.f32 %v1076, 0.0
  %1084 = vst [vmem:[%s3] sm:$0xff] %v1080
  %1085 = vst [vmem:[%s3 + $0x8] sm:$0xff] %v1081
  %1086 = vst [vmem:[%s3 + $0x10] sm:$0xff] %v1082
  %1087 = vst [vmem:[%s3 + $0x18] sm:$0xff] %v1083
  // Predicated region
  $region14: #{hourglass_forward.7} parent=0 // pred_check
    _
  $region15: #{hourglass_forward.7} parent=0 // pred_check_branch
    %1089 = sbr.rel (0) target = $region17
  $region16: #{hourglass_forward.7} parent=0 // pred_region
    _
  $region17: #{hourglass_forward.7} parent=0 // pred_fallthru
    _
  // Predicated region
  $region18: #{hourglass_forward.7} parent=0 // pred_check
    _
  $region19: #{hourglass_forward.7} parent=0 // pred_check_branch
    %1091 = sbr.rel (0) target = $region21
  $region20: #{hourglass_forward.7} parent=0 // pred_region
    _
  $region21: #{hourglass_forward.7} parent=0 // pred_fallthru
    _

// kernel: hourglass_forward.8
$region0: #{hourglass_forward.8}
  #allocation0 [shape = 'u32[]', space=smem, size = 0x4, offset = 0x4, fixed_abs, tag = 'smem constant byte address 0x4 - core index']
  #allocation1 [shape = 'u32[144,128]{1,0:T(1,128)}', space=vmem, size = 0x12000, scoped, tag = 'internal scratch']
  #allocation2 [shape = 'bf16[216,128]{1,0:T(8,128)(2,1)}', space=vmem, size = 0xd800, scoped, tag = 'scratch operand']
  %s0 = inlined_call_operand.vmem [shape: bf16[1,64,256], index: 0, kind: input, shape index: {}]
  %s1 = inlined_call_operand.vmem [shape: bf16[1,1,8,216], index: 1, kind: input, shape index: {}]
  %s2 = inlined_call_operand.vmem [shape: f32[8,1], index: 2, kind: input, shape index: {}]
  %s3 = inlined_call_operand.vmem [shape: f32[1,8,128], index: 3, kind: output, shape index: {}]
  %s4 = sld [smem:[#allocation0]]
  $region22: #{hourglass_forward.8} parent=0
    _
  %s6 = ssub.s32 1, %s4
  %s7 = scalar_select 0, %s6, %s4
  // Predicated region
  $region2: #{hourglass_forward.8} parent=0 // pred_check
    _
  $region3: #{hourglass_forward.8} parent=0 // pred_check_branch
    %9 = sbr.rel (0) target = $region5
  $region4: #{hourglass_forward.8} parent=0 // pred_region
    _
  $region5: #{hourglass_forward.8} parent=0 // pred_fallthru
    _
  // Predicated region
  $region6: #{hourglass_forward.8} parent=0 // pred_check
    _
  $region7: #{hourglass_forward.8} parent=0 // pred_check_branch
    %11 = sbr.rel (0) target = $region9
  $region8: #{hourglass_forward.8} parent=0 // pred_region
    _
  $region9: #{hourglass_forward.8} parent=0 // pred_fallthru
    _
  // Predicated region
  $region10: #{hourglass_forward.8} parent=0 // pred_check
    _
  $region11: #{hourglass_forward.8} parent=0 // pred_check_branch
    %13 = sbr.rel (0) target = $region13
  $region12: #{hourglass_forward.8} parent=0 // pred_region
    _
  $region13: #{hourglass_forward.8} parent=0 // pred_fallthru
    _
  %v15 = vld [vmem:[%s0] sm:$0xf]
  %16 = vst [vmem:[#allocation2] sm:$0xf] %v15
  %v17 = vld [vmem:[%s0 + $0x8] sm:$0xf]
  %18 = vst [vmem:[#allocation2 + $0x4] sm:$0xf] %v17
  %v19 = vld [vmem:[%s0] sm:$0xff]
  %21 = vrot.lane.b32.xlu0 %v19, 127
  %v22 = vpop.permute.xlu0 %21
  %v23 = vrot.slane %v22, 4
  %vm24 = vcmask 1039360
  %v25 = vsel %vm24, %v22, %v23
  %27 = vst [vmem:[#allocation2 + $0x8] sm:$0xf] %v25
  %v28 = vld [vmem:[%s0 + $0x10] sm:$0xf]
  %29 = vst [vmem:[#allocation2 + $0xc] sm:$0xf] %v28
  %v30 = vld [vmem:[%s0 + $0x18] sm:$0xf]
  %31 = vst [vmem:[#allocation2 + $0x10] sm:$0xf] %v30
  %v32 = vld [vmem:[%s0 + $0x10] sm:$0xff]
  %34 = vrot.lane.b32.xlu0 %v32, 127
  %v35 = vpop.permute.xlu0 %34
  %v36 = vrot.slane %v35, 4
  %v37 = vsel %vm24, %v35, %v36
  %39 = vst [vmem:[#allocation2 + $0x14] sm:$0xf] %v37
  %v40 = vld [vmem:[%s0] sm:$0xff]
  %42 = vrot.lane.b32.xlu0 %v40, 123
  %v43 = vpop.permute.xlu0 %42
  %v44 = vrot.slane %v43, 4
  %vm45 = vcmask 1006592
  %v46 = vsel %vm45, %v43, %v44
  %48 = vst [vmem:[#allocation2 + $0x18] sm:$0xf] %v46
  %v49 = vld [vmem:[%s0 + $0x8] sm:$0xff]
  %51 = vrot.lane.b32.xlu0 %v49, 123
  %v52 = vpop.permute.xlu0 %51
  %v53 = vrot.slane %v52, 4
  %v54 = vsel %vm45, %v52, %v53
  %56 = vst [vmem:[#allocation2 + $0x1c] sm:$0xf] %v54
  %v57 = vld [vmem:[%s0] sm:$0xff]
  %59 = vrot.lane.b32.xlu0 %v57, 122
  %v60 = vpop.permute.xlu0 %59
  %v61 = vrot.slane %v60, 4
  %vm62 = vcmask 998400
  %v63 = vsel %vm62, %v60, %v61
  %65 = vst [vmem:[#allocation2 + $0x20] sm:$0xf] %v63
  %v66 = vld [vmem:[%s0 + $0x20] sm:$0xf]
  %67 = vst [vmem:[#allocation2 + $0x24] sm:$0xf] %v66
  %v68 = vld [vmem:[%s0 + $0x28] sm:$0xf]
  %69 = vst [vmem:[#allocation2 + $0x28] sm:$0xf] %v68
  %v70 = vld [vmem:[%s0 + $0x20] sm:$0xff]
  %72 = vrot.lane.b32.xlu0 %v70, 127
  %v73 = vpop.permute.xlu0 %72
  %v74 = vrot.slane %v73, 4
  %v75 = vsel %vm24, %v73, %v74
  %77 = vst [vmem:[#allocation2 + $0x2c] sm:$0xf] %v75
  %v78 = vld [vmem:[%s0 + $0x30] sm:$0xf]
  %79 = vst [vmem:[#allocation2 + $0x30] sm:$0xf] %v78
  %v80 = vld [vmem:[%s0 + $0x38] sm:$0xf]
  %81 = vst [vmem:[#allocation2 + $0x34] sm:$0xf] %v80
  %v82 = vld [vmem:[%s0 + $0x30] sm:$0xff]
  %84 = vrot.lane.b32.xlu0 %v82, 127
  %v85 = vpop.permute.xlu0 %84
  %v86 = vrot.slane %v85, 4
  %v87 = vsel %vm24, %v85, %v86
  %89 = vst [vmem:[#allocation2 + $0x38] sm:$0xf] %v87
  %v90 = vld [vmem:[%s0 + $0x20] sm:$0xff]
  %92 = vrot.lane.b32.xlu0 %v90, 123
  %v93 = vpop.permute.xlu0 %92
  %v94 = vrot.slane %v93, 4
  %v95 = vsel %vm45, %v93, %v94
  %97 = vst [vmem:[#allocation2 + $0x3c] sm:$0xf] %v95
  %v98 = vld [vmem:[%s0 + $0x28] sm:$0xff]
  %100 = vrot.lane.b32.xlu0 %v98, 123
  %v101 = vpop.permute.xlu0 %100
  %v102 = vrot.slane %v101, 4
  %v103 = vsel %vm45, %v101, %v102
  %105 = vst [vmem:[#allocation2 + $0x40] sm:$0xf] %v103
  %v106 = vld [vmem:[%s0 + $0x20] sm:$0xff]
  %108 = vrot.lane.b32.xlu0 %v106, 122
  %v109 = vpop.permute.xlu0 %108
  %v110 = vrot.slane %v109, 4
  %v111 = vsel %vm62, %v109, %v110
  %113 = vst [vmem:[#allocation2 + $0x44] sm:$0xf] %v111
  %v114 = vld [vmem:[%s0] sm:$0xff]
  %116 = vrot.lane.b32.xlu0 %v114, 103
  %v117 = vpop.permute.xlu0 %116
  %v118 = vrot.slane %v117, 4
  %vm119 = vcmask 842752
  %v120 = vsel %vm119, %v117, %v118
  %122 = vst [vmem:[#allocation2 + $0x48] sm:$0xf] %v120
  %v123 = vld [vmem:[%s0 + $0x8] sm:$0xff]
  %125 = vrot.lane.b32.xlu0 %v123, 103
  %v126 = vpop.permute.xlu0 %125
  %v127 = vrot.slane %v126, 4
  %v128 = vsel %vm119, %v126, %v127
  %130 = vst [vmem:[#allocation2 + $0x4c] sm:$0xf] %v128
  %v131 = vld [vmem:[%s0] sm:$0xff]
  %133 = vrot.lane.b32.xlu0 %v131, 102
  %v134 = vpop.permute.xlu0 %133
  %v135 = vrot.slane %v134, 4
  %vm136 = vcmask 834560
  %v137 = vsel %vm136, %v134, %v135
  %139 = vst [vmem:[#allocation2 + $0x50] sm:$0xf] %v137
  %v140 = vld [vmem:[%s0 + $0x10] sm:$0xff]
  %142 = vrot.lane.b32.xlu0 %v140, 103
  %v143 = vpop.permute.xlu0 %142
  %v144 = vrot.slane %v143, 4
  %v145 = vsel %vm119, %v143, %v144
  %147 = vst [vmem:[#allocation2 + $0x54] sm:$0xf] %v145
  %v148 = vld [vmem:[%s0 + $0x18] sm:$0xff]
  %150 = vrot.lane.b32.xlu0 %v148, 103
  %v151 = vpop.permute.xlu0 %150
  %v152 = vrot.slane %v151, 4
  %v153 = vsel %vm119, %v151, %v152
  %155 = vst [vmem:[#allocation2 + $0x58] sm:$0xf] %v153
  %v156 = vld [vmem:[%s0 + $0x10] sm:$0xff]
  %158 = vrot.lane.b32.xlu0 %v156, 102
  %v159 = vpop.permute.xlu0 %158
  %v160 = vrot.slane %v159, 4
  %v161 = vsel %vm136, %v159, %v160
  %163 = vst [vmem:[#allocation2 + $0x5c] sm:$0xf] %v161
  %v164 = vld [vmem:[%s0] sm:$0xff]
  %166 = vrot.lane.b32.xlu0 %v164, 98
  %v167 = vpop.permute.xlu0 %166
  %v168 = vrot.slane %v167, 4
  %vm169 = vcmask 801792
  %v170 = vsel %vm169, %v167, %v168
  %172 = vst [vmem:[#allocation2 + $0x60] sm:$0xf] %v170
  %v173 = vld [vmem:[%s0 + $0x8] sm:$0xff]
  %175 = vrot.lane.b32.xlu0 %v173, 98
  %v176 = vpop.permute.xlu0 %175
  %v177 = vrot.slane %v176, 4
  %v178 = vsel %vm169, %v176, %v177
  %180 = vst [vmem:[#allocation2 + $0x64] sm:$0xf] %v178
  %v181 = vld [vmem:[%s0] sm:$0xff]
  %183 = vrot.lane.b32.xlu0 %v181, 97
  %v184 = vpop.permute.xlu0 %183
  %v185 = vrot.slane %v184, 4
  %vm186 = vcmask 793600
  %v187 = vsel %vm186, %v184, %v185
  %189 = vst [vmem:[#allocation2 + $0x68] sm:$0xf] %v187
  %v190 = vld [vmem:[#allocation2] sm:$0xf]
  %v191 = vld [vmem:[#allocation2 + $0x4] sm:$0xf]
  %v192 = vld [vmem:[#allocation2 + $0x8] sm:$0xf]
  %v193 = vld [vmem:[#allocation2 + $0xc] sm:$0xf]
  %v194 = vld [vmem:[#allocation2 + $0x10] sm:$0xf]
  %v195 = vld [vmem:[#allocation2 + $0x14] sm:$0xf]
  %v196 = vld [vmem:[#allocation2 + $0x18] sm:$0xf]
  %v197 = vld [vmem:[#allocation2 + $0x1c] sm:$0xf]
  %v198 = vld [vmem:[#allocation2 + $0x20] sm:$0xf]
  %v199 = vld [vmem:[#allocation2 + $0x24] sm:$0xf]
  %v200 = vld [vmem:[#allocation2 + $0x28] sm:$0xf]
  %v201 = vld [vmem:[#allocation2 + $0x2c] sm:$0xf]
  %v202 = vld [vmem:[#allocation2 + $0x30] sm:$0xf]
  %v203 = vld [vmem:[#allocation2 + $0x34] sm:$0xf]
  %v204 = vld [vmem:[#allocation2 + $0x38] sm:$0xf]
  %v205 = vld [vmem:[#allocation2 + $0x3c] sm:$0xf]
  %v206 = vld [vmem:[#allocation2 + $0x40] sm:$0xf]
  %v207 = vld [vmem:[#allocation2 + $0x44] sm:$0xf]
  %v208 = vld [vmem:[#allocation2 + $0x48] sm:$0xf]
  %v209 = vld [vmem:[#allocation2 + $0x4c] sm:$0xf]
  %v210 = vld [vmem:[#allocation2 + $0x50] sm:$0xf]
  %v211 = vld [vmem:[#allocation2 + $0x54] sm:$0xf]
  %v212 = vld [vmem:[#allocation2 + $0x58] sm:$0xf]
  %v213 = vld [vmem:[#allocation2 + $0x5c] sm:$0xf]
  %v214 = vld [vmem:[#allocation2 + $0x60] sm:$0xf]
  %v215 = vld [vmem:[#allocation2 + $0x64] sm:$0xf]
  %v216 = vld [vmem:[#allocation2 + $0x68] sm:$0xf]
  %v217 = vld [vmem:[%s2] sm:$0xff]
  %v218 = vld [vmem:[%s1] sm:$0xff]
  %220 = vset.pattern.permute.xlu0 0
  %221 = vperm.xlu0 %220, %v217
  %v222 = vpop.permute.xlu0 %221
  %v225 = vunpack.c.l.b16 %v218
  %v226 = vunpack.c.h.b16 %v218
  %v227 = vpack.c.b16 %v225, %v225
  %v228 = vpack.c.b16 %v226, %v226
  %v257 = vunpack.c.l.b16 %v190
  %v258 = vunpack.c.l.b16 %v191
  %v259 = vunpack.c.l.b16 %v192
  %v260 = vunpack.c.l.b16 %v193
  %v261 = vunpack.c.l.b16 %v194
  %v262 = vunpack.c.l.b16 %v195
  %v263 = vunpack.c.l.b16 %v196
  %v264 = vunpack.c.l.b16 %v197
  %v265 = vunpack.c.l.b16 %v198
  %v266 = vunpack.c.l.b16 %v199
  %v267 = vunpack.c.l.b16 %v200
  %v268 = vunpack.c.l.b16 %v201
  %v269 = vunpack.c.l.b16 %v202
  %v270 = vunpack.c.l.b16 %v203
  %v271 = vunpack.c.l.b16 %v204
  %v272 = vunpack.c.l.b16 %v205
  %v273 = vunpack.c.l.b16 %v206
  %v274 = vunpack.c.l.b16 %v207
  %v275 = vunpack.c.l.b16 %v208
  %v276 = vunpack.c.l.b16 %v209
  %v277 = vunpack.c.l.b16 %v210
  %v278 = vunpack.c.l.b16 %v211
  %v279 = vunpack.c.l.b16 %v212
  %v280 = vunpack.c.l.b16 %v213
  %v281 = vunpack.c.l.b16 %v214
  %v282 = vunpack.c.l.b16 %v215
  %v283 = vunpack.c.l.b16 %v216
  %v284 = vpack.c.b16 %v258, %v257
  %v285 = vpack.c.b16 %v260, %v259
  %v286 = vpack.c.b16 %v262, %v261
  %v287 = vpack.c.b16 %v264, %v263
  %v288 = vpack.c.b16 %v266, %v265
  %v289 = vpack.c.b16 %v268, %v267
  %v290 = vpack.c.b16 %v270, %v269
  %v291 = vpack.c.b16 %v272, %v271
  %v292 = vpack.c.b16 %v274, %v273
  %v293 = vpack.c.b16 %v276, %v275
  %v294 = vpack.c.b16 %v278, %v277
  %v295 = vpack.c.b16 %v280, %v279
  %v296 = vpack.c.b16 %v282, %v281
  %v297 = vpack.c.b16 %v283, %v283
  %vm311 = vcmask 719872
  %v313 = vsel %vm311, %v228, 0
  %vm315 = vcmask 1043456
  %v317 = vsel %vm315, %v297, 0
  %319 = vmatprep.subr.bf16.mxu0 0
  %320 = vmatpush1.bf16.msra.mxu0 %v291
  %321 = vmatprep.subr.bf16.mxu0 0
  %322 = vmatpush1.bf16.msra.mxu0 %v290
  %323 = vmatprep.subr.bf16.mxu0 0
  %324 = vmatpush1.bf16.msra.mxu0 %v289
  %325 = vmatprep.subr.bf16.mxu0 0
  %326 = vmatpush1.bf16.msra.mxu0 %v288
  %327 = vmatprep.subr.bf16.mxu0 0
  %328 = vmatpush1.bf16.msra.mxu0 %v287
  %329 = vmatprep.subr.bf16.mxu0 0
  %330 = vmatpush1.bf16.msra.mxu0 %v286
  %331 = vmatprep.subr.bf16.mxu0 0
  %332 = vmatpush1.bf16.msra.mxu0 %v285
  %333 = vmatprep.subr.bf16.mxu0 0
  %334 = vmatpush1.bf16.msra.mxu0 %v284
  %335 = vmatprep.subr.bf16.mxu0 0
  %336 = vmatpush2.bf16.msra.mxu0 0
  %337 = vmatprep.subr.bf16.mxu0 0
  %338 = vmatpush2.bf16.msra.mxu0 0
  %339 = vmatprep.subr.bf16.mxu0 0
  %340 = vmatpush2.bf16.msra.mxu0 %v317
  %341 = vmatprep.subr.bf16.mxu0 0
  %342 = vmatpush2.bf16.msra.mxu0 %v296
  %343 = vmatprep.subr.bf16.mxu0 0
  %344 = vmatpush2.bf16.msra.mxu0 %v295
  %345 = vmatprep.subr.bf16.mxu0 0
  %346 = vmatpush2.bf16.msra.mxu0 %v294
  %347 = vmatprep.subr.bf16.mxu0 0
  %348 = vmatpush2.bf16.msra.mxu0 %v293
  %349 = vmatprep.subr.bf16.mxu0 0
  %350 = vmatpush2.bf16.msra.mxu0 %v292
  %351 = vmatprep.mubr.bf16.mxu0 %v313
  %352 = vmatmul.mubr.bf16.gmra.mxu0 %v227
  %v353 = vpop.f32.mrf.mxu0
  %v354 = vadd.f32 %v222, %v353
  %v355 = vpop.f32.mrf.mxu0
  %v356 = vpop.f32.mrf.mxu0
  %v357 = vpop.f32.mrf.mxu0
  %358 = vdwg.mxu0
  %v359 = vmax.f32 %v354, 0.0
  %360 = vst [vmem:[%s3] sm:$0xff] %v359
  // Predicated region
  $region14: #{hourglass_forward.8} parent=0 // pred_check
    _
  $region15: #{hourglass_forward.8} parent=0 // pred_check_branch
    %362 = sbr.rel (0) target = $region17
  $region16: #{hourglass_forward.8} parent=0 // pred_region
    _
  $region17: #{hourglass_forward.8} parent=0 // pred_fallthru
    _
  // Predicated region
  $region18: #{hourglass_forward.8} parent=0 // pred_check
    _
  $region19: #{hourglass_forward.8} parent=0 // pred_check_branch
    %364 = sbr.rel (0) target = $region21
  $region20: #{hourglass_forward.8} parent=0 // pred_region
    _
  $region21: #{hourglass_forward.8} parent=0 // pred_fallthru
    _

// kernel: hourglass_forward.9
$region0: #{hourglass_forward.9}
  #allocation0 [shape = 'u32[]', space=smem, size = 0x4, offset = 0x4, fixed_abs, tag = 'smem constant byte address 0x4 - core index']
  #allocation1 [shape = 'u32[144,128]{1,0:T(1,128)}', space=vmem, size = 0x12000, scoped, tag = 'internal scratch']
  #allocation2 [shape = 'bf16[216,128]{1,0:T(8,128)(2,1)}', space=vmem, size = 0xd800, scoped, tag = 'scratch operand']
  %s0 = inlined_call_operand.vmem [shape: bf16[1,8,256], index: 0, kind: input, shape index: {}]
  %s1 = inlined_call_operand.vmem [shape: bf16[1,1,8,216], index: 1, kind: input, shape index: {}]
  %s2 = inlined_call_operand.vmem [shape: f32[8,1], index: 2, kind: input, shape index: {}]
  %s3 = inlined_call_operand.vmem [shape: f32[1,8,128], index: 3, kind: output, shape index: {}]
  %s4 = sld [smem:[#allocation0]]
  $region22: #{hourglass_forward.9} parent=0
    _
  %s6 = ssub.s32 1, %s4
  %s7 = scalar_select 0, %s6, %s4
  // Predicated region
  $region2: #{hourglass_forward.9} parent=0 // pred_check
    _
  $region3: #{hourglass_forward.9} parent=0 // pred_check_branch
    %9 = sbr.rel (0) target = $region5
  $region4: #{hourglass_forward.9} parent=0 // pred_region
    _
  $region5: #{hourglass_forward.9} parent=0 // pred_fallthru
    _
  // Predicated region
  $region6: #{hourglass_forward.9} parent=0 // pred_check
    _
  $region7: #{hourglass_forward.9} parent=0 // pred_check_branch
    %11 = sbr.rel (0) target = $region9
  $region8: #{hourglass_forward.9} parent=0 // pred_region
    _
  $region9: #{hourglass_forward.9} parent=0 // pred_fallthru
    _
  // Predicated region
  $region10: #{hourglass_forward.9} parent=0 // pred_check
    _
  $region11: #{hourglass_forward.9} parent=0 // pred_check_branch
    %13 = sbr.rel (0) target = $region13
  $region12: #{hourglass_forward.9} parent=0 // pred_region
    _
  $region13: #{hourglass_forward.9} parent=0 // pred_fallthru
    _
  %v15 = vld [vmem:[%s0] sm:$0xf]
  %16 = vst [vmem:[#allocation2] sm:$0xf] %v15
  %v17 = vld [vmem:[%s0] sm:$0xff]
  %19 = vrot.lane.b32.xlu0 %v17, 127
  %v20 = vpop.permute.xlu0 %19
  %v21 = vrot.slane %v20, 4
  %vm22 = vcmask 1039360
  %v23 = vsel %vm22, %v20, %v21
  %25 = vst [vmem:[#allocation2 + $0x4] sm:$0xf] %v23
  %v26 = vld [vmem:[%s0] sm:$0xff]
  %28 = vrot.lane.b32.xlu0 %v26, 126
  %v29 = vpop.permute.xlu0 %28
  %v30 = vrot.slane %v29, 4
  %vm31 = vcmask 1031168
  %v32 = vsel %vm31, %v29, %v30
  %34 = vst [vmem:[#allocation2 + $0x8] sm:$0xf] %v32
  %v35 = vld [vmem:[%s0] sm:$0xff]
  %37 = vrot.lane.b32.xlu0 %v35, 122
  %v38 = vpop.permute.xlu0 %37
  %v39 = vrot.slane %v38, 4
  %vm40 = vcmask 998400
  %v41 = vsel %vm40, %v38, %v39
  %43 = vst [vmem:[#allocation2 + $0xc] sm:$0xf] %v41
  %v44 = vld [vmem:[%s0] sm:$0xff]
  %46 = vrot.lane.b32.xlu0 %v44, 121
  %v47 = vpop.permute.xlu0 %46
  %v48 = vrot.slane %v47, 4
  %vm49 = vcmask 990208
  %v50 = vsel %vm49, %v47, %v48
  %52 = vst [vmem:[#allocation2 + $0x10] sm:$0xf] %v50
  %v53 = vld [vmem:[%s0] sm:$0xff]
  %55 = vrot.lane.b32.xlu0 %v53, 120
  %v56 = vpop.permute.xlu0 %55
  %v57 = vrot.slane %v56, 4
  %vm58 = vcmask 982016
  %v59 = vsel %vm58, %v56, %v57
  %61 = vst [vmem:[#allocation2 + $0x14] sm:$0xf] %v59
  %v62 = vld [vmem:[%s0] sm:$0xff]
  %64 = vrot.lane.b32.xlu0 %v62, 116
  %v65 = vpop.permute.xlu0 %64
  %v66 = vrot.slane %v65, 4
  %vm67 = vcmask 949248
  %v68 = vsel %vm67, %v65, %v66
  %70 = vst [vmem:[#allocation2 + $0x18] sm:$0xf] %v68
  %v71 = vld [vmem:[%s0] sm:$0xff]
  %73 = vrot.lane.b32.xlu0 %v71, 115
  %v74 = vpop.permute.xlu0 %73
  %v75 = vrot.slane %v74, 4
  %vm76 = vcmask 941056
  %v77 = vsel %vm76, %v74, %v75
  %79 = vst [vmem:[#allocation2 + $0x1c] sm:$0xf] %v77
  %v80 = vld [vmem:[%s0] sm:$0xff]
  %82 = vrot.lane.b32.xlu0 %v80, 114
  %v83 = vpop.permute.xlu0 %82
  %v84 = vrot.slane %v83, 4
  %vm85 = vcmask 932864
  %v86 = vsel %vm85, %v83, %v84
  %88 = vst [vmem:[#allocation2 + $0x20] sm:$0xf] %v86
  %v89 = vld [vmem:[%s0] sm:$0xff]
  %91 = vrot.lane.b32.xlu0 %v89, 92
  %v92 = vpop.permute.xlu0 %91
  %v93 = vrot.slane %v92, 4
  %vm94 = vcmask 752640
  %v95 = vsel %vm94, %v92, %v93
  %97 = vst [vmem:[#allocation2 + $0x24] sm:$0xf] %v95
  %v98 = vld [vmem:[%s0] sm:$0xff]
  %100 = vrot.lane.b32.xlu0 %v98, 91
  %v101 = vpop.permute.xlu0 %100
  %v102 = vrot.slane %v101, 4
  %vm103 = vcmask 744448
  %v104 = vsel %vm103, %v101, %v102
  %106 = vst [vmem:[#allocation2 + $0x28] sm:$0xf] %v104
  %v107 = vld [vmem:[%s0] sm:$0xff]
  %109 = vrot.lane.b32.xlu0 %v107, 90
  %v110 = vpop.permute.xlu0 %109
  %v111 = vrot.slane %v110, 4
  %vm112 = vcmask 736256
  %v113 = vsel %vm112, %v110, %v111
  %115 = vst [vmem:[#allocation2 + $0x2c] sm:$0xf] %v113
  %v116 = vld [vmem:[%s0] sm:$0xff]
  %118 = vrot.lane.b32.xlu0 %v116, 86
  %v119 = vpop.permute.xlu0 %118
  %v120 = vrot.slane %v119, 4
  %vm121 = vcmask 703488
  %v122 = vsel %vm121, %v119, %v120
  %124 = vst [vmem:[#allocation2 + $0x30] sm:$0xf] %v122
  %v125 = vld [vmem:[%s0] sm:$0xff]
  %127 = vrot.lane.b32.xlu0 %v125, 85
  %v128 = vpop.permute.xlu0 %127
  %v129 = vrot.slane %v128, 4
  %vm130 = vcmask 695296
  %v131 = vsel %vm130, %v128, %v129
  %133 = vst [vmem:[#allocation2 + $0x34] sm:$0xf] %v131
  %v134 = vld [vmem:[%s0] sm:$0xff]
  %136 = vrot.lane.b32.xlu0 %v134, 84
  %v137 = vpop.permute.xlu0 %136
  %v138 = vrot.slane %v137, 4
  %vm139 = vcmask 687104
  %v140 = vsel %vm139, %v137, %v138
  %142 = vst [vmem:[#allocation2 + $0x38] sm:$0xf] %v140
  %v143 = vld [vmem:[%s0] sm:$0xff]
  %145 = vrot.lane.b32.xlu0 %v143, 80
  %v146 = vpop.permute.xlu0 %145
  %v147 = vrot.slane %v146, 4
  %vm148 = vcmask 654336
  %v149 = vsel %vm148, %v146, %v147
  %151 = vst [vmem:[#allocation2 + $0x3c] sm:$0xf] %v149
  %v152 = vld [vmem:[%s0] sm:$0xff]
  %154 = vrot.lane.b32.xlu0 %v152, 79
  %v155 = vpop.permute.xlu0 %154
  %v156 = vrot.slane %v155, 4
  %vm157 = vcmask 646144
  %v158 = vsel %vm157, %v155, %v156
  %160 = vst [vmem:[#allocation2 + $0x40] sm:$0xf] %v158
  %v161 = vld [vmem:[%s0] sm:$0xff]
  %163 = vrot.lane.b32.xlu0 %v161, 78
  %v164 = vpop.permute.xlu0 %163
  %v165 = vrot.slane %v164, 4
  %vm166 = vcmask 637952
  %v167 = vsel %vm166, %v164, %v165
  %169 = vst [vmem:[#allocation2 + $0x44] sm:$0xf] %v167
  %v170 = vld [vmem:[%s0] sm:$0xff]
  %172 = vrot.lane.b32.xlu0 %v170, 56
  %v173 = vpop.permute.xlu0 %172
  %v174 = vrot.slane %v173, 4
  %vm175 = vcmask 457728
  %v176 = vsel %vm175, %v173, %v174
  %178 = vst [vmem:[#allocation2 + $0x48] sm:$0xf] %v176
  %v179 = vld [vmem:[%s0] sm:$0xff]
  %181 = vrot.lane.b32.xlu0 %v179, 55
  %v182 = vpop.permute.xlu0 %181
  %v183 = vrot.slane %v182, 4
  %vm184 = vcmask 449536
  %v185 = vsel %vm184, %v182, %v183
  %187 = vst [vmem:[#allocation2 + $0x4c] sm:$0xf] %v185
  %v188 = vld [vmem:[%s0] sm:$0xff]
  %190 = vrot.lane.b32.xlu0 %v188, 54
  %v191 = vpop.permute.xlu0 %190
  %v192 = vrot.slane %v191, 4
  %vm193 = vcmask 441344
  %v194 = vsel %vm193, %v191, %v192
  %196 = vst [vmem:[#allocation2 + $0x50] sm:$0xf] %v194
  %v197 = vld [vmem:[%s0] sm:$0xff]
  %199 = vrot.lane.b32.xlu0 %v197, 50
  %v200 = vpop.permute.xlu0 %199
  %v201 = vrot.slane %v200, 4
  %vm202 = vcmask 408576
  %v203 = vsel %vm202, %v200, %v201
  %205 = vst [vmem:[#allocation2 + $0x54] sm:$0xf] %v203
  %v206 = vld [vmem:[%s0] sm:$0xff]
  %208 = vrot.lane.b32.xlu0 %v206, 49
  %v209 = vpop.permute.xlu0 %208
  %v210 = vrot.slane %v209, 4
  %vm211 = vcmask 400384
  %v212 = vsel %vm211, %v209, %v210
  %214 = vst [vmem:[#allocation2 + $0x58] sm:$0xf] %v212
  %v215 = vld [vmem:[%s0] sm:$0xff]
  %217 = vrot.lane.b32.xlu0 %v215, 48
  %v218 = vpop.permute.xlu0 %217
  %v219 = vrot.slane %v218, 4
  %vm220 = vcmask 392192
  %v221 = vsel %vm220, %v218, %v219
  %223 = vst [vmem:[#allocation2 + $0x5c] sm:$0xf] %v221
  %v224 = vld [vmem:[%s0] sm:$0xff]
  %226 = vrot.lane.b32.xlu0 %v224, 44
  %v227 = vpop.permute.xlu0 %226
  %v228 = vrot.slane %v227, 4
  %vm229 = vcmask 359424
  %v230 = vsel %vm229, %v227, %v228
  %232 = vst [vmem:[#allocation2 + $0x60] sm:$0xf] %v230
  %v233 = vld [vmem:[%s0] sm:$0xff]
  %235 = vrot.lane.b32.xlu0 %v233, 43
  %v236 = vpop.permute.xlu0 %235
  %v237 = vrot.slane %v236, 4
  %vm238 = vcmask 351232
  %v239 = vsel %vm238, %v236, %v237
  %241 = vst [vmem:[#allocation2 + $0x64] sm:$0xf] %v239
  %v242 = vld [vmem:[%s0] sm:$0xff]
  %244 = vrot.lane.b32.xlu0 %v242, 42
  %v245 = vpop.permute.xlu0 %244
  %v246 = vrot.slane %v245, 4
  %vm247 = vcmask 343040
  %v248 = vsel %vm247, %v245, %v246
  %250 = vst [vmem:[#allocation2 + $0x68] sm:$0xf] %v248
  %v251 = vld [vmem:[#allocation2] sm:$0xf]
  %v252 = vld [vmem:[#allocation2 + $0x4] sm:$0xf]
  %v253 = vld [vmem:[#allocation2 + $0x8] sm:$0xf]
  %v254 = vld [vmem:[#allocation2 + $0xc] sm:$0xf]
  %v255 = vld [vmem:[#allocation2 + $0x10] sm:$0xf]
  %v256 = vld [vmem:[#allocation2 + $0x14] sm:$0xf]
  %v257 = vld [vmem:[#allocation2 + $0x18] sm:$0xf]
  %v258 = vld [vmem:[#allocation2 + $0x1c] sm:$0xf]
  %v259 = vld [vmem:[#allocation2 + $0x20] sm:$0xf]
  %v260 = vld [vmem:[#allocation2 + $0x24] sm:$0xf]
  %v261 = vld [vmem:[#allocation2 + $0x28] sm:$0xf]
  %v262 = vld [vmem:[#allocation2 + $0x2c] sm:$0xf]
  %v263 = vld [vmem:[#allocation2 + $0x30] sm:$0xf]
  %v264 = vld [vmem:[#allocation2 + $0x34] sm:$0xf]
  %v265 = vld [vmem:[#allocation2 + $0x38] sm:$0xf]
  %v266 = vld [vmem:[#allocation2 + $0x3c] sm:$0xf]
  %v267 = vld [vmem:[#allocation2 + $0x40] sm:$0xf]
  %v268 = vld [vmem:[#allocation2 + $0x44] sm:$0xf]
  %v269 = vld [vmem:[#allocation2 + $0x48] sm:$0xf]
  %v270 = vld [vmem:[#allocation2 + $0x4c] sm:$0xf]
  %v271 = vld [vmem:[#allocation2 + $0x50] sm:$0xf]
  %v272 = vld [vmem:[#allocation2 + $0x54] sm:$0xf]
  %v273 = vld [vmem:[#allocation2 + $0x58] sm:$0xf]
  %v274 = vld [vmem:[#allocation2 + $0x5c] sm:$0xf]
  %v275 = vld [vmem:[#allocation2 + $0x60] sm:$0xf]
  %v276 = vld [vmem:[#allocation2 + $0x64] sm:$0xf]
  %v277 = vld [vmem:[#allocation2 + $0x68] sm:$0xf]
  %v278 = vld [vmem:[%s2] sm:$0xff]
  %v279 = vld [vmem:[%s1] sm:$0xff]
  %281 = vset.pattern.permute.xlu0 0
  %282 = vperm.xlu0 %281, %v278
  %v283 = vpop.permute.xlu0 %282
  %v286 = vunpack.c.l.b16 %v279
  %v287 = vunpack.c.h.b16 %v279
  %v288 = vpack.c.b16 %v286, %v286
  %v289 = vpack.c.b16 %v287, %v287
  %v318 = vunpack.c.l.b16 %v251
  %v319 = vunpack.c.l.b16 %v252
  %v320 = vunpack.c.l.b16 %v253
  %v321 = vunpack.c.l.b16 %v254
  %v322 = vunpack.c.l.b16 %v255
  %v323 = vunpack.c.l.b16 %v256
  %v324 = vunpack.c.l.b16 %v257
  %v325 = vunpack.c.l.b16 %v258
  %v326 = vunpack.c.l.b16 %v259
  %v327 = vunpack.c.l.b16 %v260
  %v328 = vunpack.c.l.b16 %v261
  %v329 = vunpack.c.l.b16 %v262
  %v330 = vunpack.c.l.b16 %v263
  %v331 = vunpack.c.l.b16 %v264
  %v332 = vunpack.c.l.b16 %v265
  %v333 = vunpack.c.l.b16 %v266
  %v334 = vunpack.c.l.b16 %v267
  %v335 = vunpack.c.l.b16 %v268
  %v336 = vunpack.c.l.b16 %v269
  %v337 = vunpack.c.l.b16 %v270
  %v338 = vunpack.c.l.b16 %v271
  %v339 = vunpack.c.l.b16 %v272
  %v340 = vunpack.c.l.b16 %v273
  %v341 = vunpack.c.l.b16 %v274
  %v342 = vunpack.c.l.b16 %v275
  %v343 = vunpack.c.l.b16 %v276
  %v344 = vunpack.c.l.b16 %v277
  %v345 = vpack.c.b16 %v319, %v318
  %v346 = vpack.c.b16 %v321, %v320
  %v347 = vpack.c.b16 %v323, %v322
  %v348 = vpack.c.b16 %v325, %v324
  %v349 = vpack.c.b16 %v327, %v326
  %v350 = vpack.c.b16 %v329, %v328
  %v351 = vpack.c.b16 %v331, %v330
  %v352 = vpack.c.b16 %v333, %v332
  %v353 = vpack.c.b16 %v335, %v334
  %v354 = vpack.c.b16 %v337, %v336
  %v355 = vpack.c.b16 %v339, %v338
  %v356 = vpack.c.b16 %v341, %v340
  %v357 = vpack.c.b16 %v343, %v342
  %v358 = vpack.c.b16 %v344, %v344
  %vm372 = vcmask 719872
  %v374 = vsel %vm372, %v289, 0
  %vm376 = vcmask 1043456
  %v378 = vsel %vm376, %v358, 0
  %380 = vmatprep.subr.bf16.mxu0 0
  %381 = vmatpush1.bf16.msra.mxu0 %v352
  %382 = vmatprep.subr.bf16.mxu0 0
  %383 = vmatpush1.bf16.msra.mxu0 %v351
  %384 = vmatprep.subr.bf16.mxu0 0
  %385 = vmatpush1.bf16.msra.mxu0 %v350
  %386 = vmatprep.subr.bf16.mxu0 0
  %387 = vmatpush1.bf16.msra.mxu0 %v349
  %388 = vmatprep.subr.bf16.mxu0 0
  %389 = vmatpush1.bf16.msra.mxu0 %v348
  %390 = vmatprep.subr.bf16.mxu0 0
  %391 = vmatpush1.bf16.msra.mxu0 %v347
  %392 = vmatprep.subr.bf16.mxu0 0
  %393 = vmatpush1.bf16.msra.mxu0 %v346
  %394 = vmatprep.subr.bf16.mxu0 0
  %395 = vmatpush1.bf16.msra.mxu0 %v345
  %396 = vmatprep.subr.bf16.mxu0 0
  %397 = vmatpush2.bf16.msra.mxu0 0
  %398 = vmatprep.subr.bf16.mxu0 0
  %399 = vmatpush2.bf16.msra.mxu0 0
  %400 = vmatprep.subr.bf16.mxu0 0
  %401 = vmatpush2.bf16.msra.mxu0 %v378
  %402 = vmatprep.subr.bf16.mxu0 0
  %403 = vmatpush2.bf16.msra.mxu0 %v357
  %404 = vmatprep.subr.bf16.mxu0 0
  %405 = vmatpush2.bf16.msra.mxu0 %v356
  %406 = vmatprep.subr.bf16.mxu0 0
  %407 = vmatpush2.bf16.msra.mxu0 %v355
  %408 = vmatprep.subr.bf16.mxu0 0
  %409 = vmatpush2.bf16.msra.mxu0 %v354
  %410 = vmatprep.subr.bf16.mxu0 0
  %411 = vmatpush2.bf16.msra.mxu0 %v353
  %412 = vmatprep.mubr.bf16.mxu0 %v374
  %413 = vmatmul.mubr.bf16.gmra.mxu0 %v288
  %v414 = vpop.f32.mrf.mxu0
  %v415 = vadd.f32 %v283, %v414
  %v416 = vpop.f32.mrf.mxu0
  %v417 = vpop.f32.mrf.mxu0
  %v418 = vpop.f32.mrf.mxu0
  %419 = vdwg.mxu0
  %v420 = vmax.f32 %v415, 0.0
  %421 = vst [vmem:[%s3] sm:$0xff] %v420
  // Predicated region
  $region14: #{hourglass_forward.9} parent=0 // pred_check
    _
  $region15: #{hourglass_forward.9} parent=0 // pred_check_branch
    %423 = sbr.rel (0) target = $region17
  $region16: #{hourglass_forward.9} parent=0 // pred_region
    _
  $region17: #{hourglass_forward.9} parent=0 // pred_fallthru
    _
  // Predicated region
  $region18: #{hourglass_forward.9} parent=0 // pred_check
    _
  $region19: #{hourglass_forward.9} parent=0 // pred_check_branch
    %425 = sbr.rel (0) target = $region21
  $region20: #{hourglass_forward.9} parent=0 // pred_region
    _
  $region21: #{hourglass_forward.9} parent=0 // pred_fallthru
    _

// kernel: hourglass_forward.10
$region0: #{hourglass_forward.10}
  #allocation0 [shape = 'u32[]', space=smem, size = 0x4, offset = 0x4, fixed_abs, tag = 'smem constant byte address 0x4 - core index']
  #allocation1 [shape = 'u32[144,128]{1,0:T(1,128)}', space=vmem, size = 0x12000, scoped, tag = 'internal scratch']
  #allocation2 [shape = 'bf16[64,128]{1,0:T(8,128)(2,1)}', space=vmem, size = 0x4000, scoped, tag = 'scratch operand']
  %s0 = inlined_call_operand.vmem [shape: bf16[1,8,256], index: 0, kind: input, shape index: {}]
  %s1 = inlined_call_operand.vmem [shape: bf16[2,4,8,64], index: 1, kind: input, shape index: {}]
  %s2 = inlined_call_operand.vmem [shape: f32[8,1], index: 2, kind: input, shape index: {}]
  %s3 = inlined_call_operand.vmem [shape: bf16[1,8,1024], index: 3, kind: input, shape index: {}]
  %s4 = inlined_call_operand.vmem [shape: f32[1,8,1024], index: 4, kind: output, shape index: {}]
  %s5 = sld [smem:[#allocation0]]
  $region49: #{hourglass_forward.10} parent=0
    _
  %s7 = ssub.s32 1, %s5
  %s8 = scalar_select 0, %s7, %s5
  loop: start=0, step=1, limit=4
  $region2: #{hourglass_forward.10} parent=0 // loop_pre_header
    _
  $region3: #{hourglass_forward.10} parent=0 // loop_header
    %s10 = sphi 0, %s14
    %p11 = scmp.ge.s32.totalorder %s10, 4
    %s17 = sphi 0, %s29
    %s18 = sphi 0, %s25
    %s19 = sphi 0, %s17
    %s20 = sphi 0, %s18
    %s21 = sphi 0, %s19
    %s22 = sphi 0, %s20
    %s32 = sphi 0, %s34
    %s35 = sphi 0, %s32
    %s36 = sphi 0, %s35
    %s52 = sphi 0, %s36
    %s58 = sphi 0, %s60
    %s61 = sphi 0, %s58
    %s62 = sphi 0, %s61
    %s78 = sphi 0, %s62
    %s82 = sphi 0, %s82
    %s84 = sphi 0, %s82
    %s85 = sphi 0, %s84
    %s99 = sphi 0, %s85
    %s107 = sphi 0, %s109
    %s110 = sphi 0, %s107
    %s111 = sphi 0, %s110
    %s127 = sphi 0, %s111
    %s135 = sphi 0, %s137
    %s138 = sphi 0, %s135
    %s139 = sphi 0, %s138
    %s155 = sphi 0, %s139
  $region4: #{hourglass_forward.10} parent=0 // loop_header_branch
    %13 = sbr.rel (%p11) target = $region8
  $region5: #{hourglass_forward.10} parent=0 // loop_body
    %s15 = ssub.s32 %s10, 1
    %s16 = ssub.s32 %s10, 2
    %s23 = sadd.s32 1, %s18
    %p24 = scmp.ge.s32.totalorder %s23, 2
    %s25 = scalar_select %p24, 0, %s23
    %s26 = sadd.s32 1, %s17
    %s27 = scalar_select %p24, %s26, %s17
    %p28 = scmp.ge.s32.totalorder %s27, 1
    %s29 = scalar_select %p28, 0, %s27
    %s30 = ssub.s32 %s17, %s29
    %p31 = scmp.eq.s32.totalorder %s30, 0
    %s33 = sadd.s32 %s32, 1
    %s34 = scalar_select %p31, %s32, %s33
    %p37 = pneg %p31
    %p38 = scmp.eq.s32.totalorder %s10, 1
    %p39 = por %p37, %p38
    %p40 = scmp.ne.s32.totalorder %s32, %s35
    %p41 = scmp.eq.s32.totalorder %s10, 0
    %p42 = por %p40, %p41
    %p43 = scmp.ne.s32.totalorder %s32, %s35
    %p44 = scmp.eq.s32.totalorder %s15, 1
    %p45 = por %p43, %p44
    %p46 = scmp.ne.s32.totalorder %s35, %s36
    %p47 = scmp.eq.s32.totalorder %s15, 0
    %p48 = por %p46, %p47
    %p49 = scmp.ne.s32.totalorder %s35, %s36
    %p50 = scmp.eq.s32.totalorder %s16, 1
    %p51 = por %p49, %p50
    %p53 = scmp.ne.s32.totalorder %s36, %s52
    %p54 = scmp.eq.s32.totalorder %s16, 0
    %p55 = por %p53, %p54
    %s56 = ssub.s32 %s18, %s25
    %p57 = scmp.eq.s32.totalorder %s56, 0
    %s59 = sadd.s32 %s58, 1
    %s60 = scalar_select %p57, %s58, %s59
    %p63 = pneg %p57
    %p64 = scmp.eq.s32.totalorder %s10, 1
    %p65 = por %p63, %p64
    %p66 = scmp.ne.s32.totalorder %s58, %s61
    %p67 = scmp.eq.s32.totalorder %s10, 0
    %p68 = por %p66, %p67
    %p69 = scmp.ne.s32.totalorder %s58, %s61
    %p70 = scmp.eq.s32.totalorder %s15, 1
    %p71 = por %p69, %p70
    %p72 = scmp.ne.s32.totalorder %s61, %s62
    %p73 = scmp.eq.s32.totalorder %s15, 0
    %p74 = por %p72, %p73
    %p75 = scmp.ne.s32.totalorder %s61, %s62
    %p76 = scmp.eq.s32.totalorder %s16, 1
    %p77 = por %p75, %p76
    %p79 = scmp.ne.s32.totalorder %s62, %s78
    %p80 = scmp.eq.s32.totalorder %s16, 0
    %p81 = por %p79, %p80
    %s83 = sadd.s32 %s82, 1
    %p86 = scmp.eq.s32.totalorder %s10, 1
    %p87 = scmp.ne.s32.totalorder %s82, %s84
    %p88 = scmp.eq.s32.totalorder %s10, 0
    %p89 = por %p87, %p88
    %p90 = scmp.ne.s32.totalorder %s82, %s84
    %p91 = scmp.eq.s32.totalorder %s15, 1
    %p92 = por %p90, %p91
    %p93 = scmp.ne.s32.totalorder %s84, %s85
    %p94 = scmp.eq.s32.totalorder %s15, 0
    %p95 = por %p93, %p94
    %p96 = scmp.ne.s32.totalorder %s84, %s85
    %p97 = scmp.eq.s32.totalorder %s16, 1
    %p98 = por %p96, %p97
    %p100 = scmp.ne.s32.totalorder %s85, %s99
    %p101 = scmp.eq.s32.totalorder %s16, 0
    %p102 = por %p100, %p101
    %s103 = ssub.s32 %s17, %s29
    %s104 = ssub.s32 %s18, %s25
    %s105 = sor.u32 %s103, %s104
    %p106 = scmp.eq.s32.totalorder %s105, 0
    %s108 = sadd.s32 %s107, 1
    %s109 = scalar_select %p106, %s107, %s108
    %p112 = pneg %p106
    %p113 = scmp.eq.s32.totalorder %s10, 1
    %p114 = por %p112, %p113
    %p115 = scmp.ne.s32.totalorder %s107, %s110
    %p116 = scmp.eq.s32.totalorder %s10, 0
    %p117 = por %p115, %p116
    %p118 = scmp.ne.s32.totalorder %s107, %s110
    %p119 = scmp.eq.s32.totalorder %s15, 1
    %p120 = por %p118, %p119
    %p121 = scmp.ne.s32.totalorder %s110, %s111
    %p122 = scmp.eq.s32.totalorder %s15, 0
    %p123 = por %p121, %p122
    %p124 = scmp.ne.s32.totalorder %s110, %s111
    %p125 = scmp.eq.s32.totalorder %s16, 1
    %p126 = por %p124, %p125
    %p128 = scmp.ne.s32.totalorder %s111, %s127
    %p129 = scmp.eq.s32.totalorder %s16, 0
    %p130 = por %p128, %p129
    %s131 = ssub.s32 %s17, %s29
    %s132 = ssub.s32 %s18, %s25
    %s133 = sor.u32 %s131, %s132
    %p134 = scmp.eq.s32.totalorder %s133, 0
    %s136 = sadd.s32 %s135, 1
    %s137 = scalar_select %p134, %s135, %s136
    %p140 = pneg %p134
    %p141 = scmp.eq.s32.totalorder %s10, 1
    %p142 = por %p140, %p141
    %p143 = scmp.ne.s32.totalorder %s135, %s138
    %p144 = scmp.eq.s32.totalorder %s10, 0
    %p145 = por %p143, %p144
    %p146 = scmp.ne.s32.totalorder %s135, %s138
    %p147 = scmp.eq.s32.totalorder %s15, 1
    %p148 = por %p146, %p147
    %p149 = scmp.ne.s32.totalorder %s138, %s139
    %p150 = scmp.eq.s32.totalorder %s15, 0
    %p151 = por %p149, %p150
    %p152 = scmp.ne.s32.totalorder %s138, %s139
    %p153 = scmp.eq.s32.totalorder %s16, 1
    %p154 = por %p152, %p153
    %p156 = scmp.ne.s32.totalorder %s139, %s155
    %p157 = scmp.eq.s32.totalorder %s16, 0
    %p158 = por %p156, %p157
    %p159 = scmp.le.s32.totalorder 1, %s10
    %p160 = scmp.lt.s32.totalorder %s10, 3
    %p161 = pnand %p159, %p160
    %p162 = pneg %p161
    // Predicated region
    $region9: #{hourglass_forward.10} parent=5 // pred_check
      _
    $region10: #{hourglass_forward.10} parent=5 // pred_check_branch
      %164 = sbr.rel (%p161) target = $region12
    $region11: #{hourglass_forward.10} parent=5 // pred_region
      %s165 = ssub.s32 %s10, 1
      // Predicated region
      $region13: #{hourglass_forward.10} parent=11 // pred_check
        %p166 = pneg %p48
      $region14: #{hourglass_forward.10} parent=11 // pred_check_branch
        %168 = sbr.rel (%p166) target = $region16
      $region15: #{hourglass_forward.10} parent=11 // pred_region
        %p169 = scmp.lt.s32.totalorder %s19, 0
        %s170 = scalar_select %p169, %s19, 0
        %s171 = smul.addr %s170, 2
        %s172 = smul.addr %s171, 4
        %s173 = scalar_lea.vmem %s0, %s172
      $region16: #{hourglass_forward.10} parent=11 // pred_fallthru
        _
      // Predicated region
      $region17: #{hourglass_forward.10} parent=11 // pred_check
        %p174 = pneg %p95
      $region18: #{hourglass_forward.10} parent=11 // pred_check_branch
        %176 = sbr.rel (%p174) target = $region20
      $region19: #{hourglass_forward.10} parent=11 // pred_region
        _
      $region20: #{hourglass_forward.10} parent=11 // pred_fallthru
        _
    $region12: #{hourglass_forward.10} parent=5 // pred_fallthru
      _
    %p177 = scmp.lt.s32.totalorder %s10, 2
    // Predicated region
    $region21: #{hourglass_forward.10} parent=5 // pred_check
      %p178 = pneg %p177
    $region22: #{hourglass_forward.10} parent=5 // pred_check_branch
      %180 = sbr.rel (%p178) target = $region24
    $region23: #{hourglass_forward.10} parent=5 // pred_region
      // Predicated region
      $region25: #{hourglass_forward.10} parent=23 // pred_check
        %p181 = pneg %p68
      $region26: #{hourglass_forward.10} parent=23 // pred_check_branch
        %183 = sbr.rel (%p181) target = $region28
      $region27: #{hourglass_forward.10} parent=23 // pred_region
        %p184 = scmp.lt.s32.totalorder %s18, 1
        %s185 = scalar_select %p184, %s18, 1
        %s186 = smul.addr %s185, 4
        %s187 = smul.addr %s186, 4
        %s188 = scalar_lea.vmem %s1, %s187
      $region28: #{hourglass_forward.10} parent=23 // pred_fallthru
        _
      // Predicated region
      $region29: #{hourglass_forward.10} parent=23 // pred_check
        %p189 = pneg %p117
      $region30: #{hourglass_forward.10} parent=23 // pred_check_branch
        %191 = sbr.rel (%p189) target = $region32
      $region31: #{hourglass_forward.10} parent=23 // pred_region
        %s192 = smul.u32 4, %s18
        %p193 = scmp.lt.s32.totalorder %s17, 0
        %s194 = scalar_select %p193, %s17, 0
        %p195 = scmp.lt.s32.totalorder %s192, 7
        %s196 = scalar_select %p195, %s192, 7
        %s197 = smul.addr %s194, 8
        %s198 = sadd.s32 %s196, %s197
        %s199 = smul.addr %s198, 4
        %s200 = scalar_lea.vmem %s3, %s199
        %s201 = smul.u32 4, %s18
      $region32: #{hourglass_forward.10} parent=23 // pred_fallthru
        _
    $region24: #{hourglass_forward.10} parent=5 // pred_fallthru
      _
    %p202 = scmp.le.s32.totalorder 1, %s10
    %p203 = scmp.lt.s32.totalorder %s10, 3
    %p204 = pnand %p202, %p203
    %p205 = pneg %p204
    // Predicated region
    $region33: #{hourglass_forward.10} parent=5 // pred_check
      _
    $region34: #{hourglass_forward.10} parent=5 // pred_check_branch
      %207 = sbr.rel (%p204) target = $region36
    $region35: #{hourglass_forward.10} parent=5 // pred_region
      %s208 = ssub.s32 %s10, 1
      %p209 = scmp.lt.s32.totalorder %s19, 0
      %s210 = scalar_select %p209, %s19, 0
      %s211 = smul.addr %s210, 2
      %s212 = smul.addr %s211, 4
      %s213 = scalar_lea.vmem %s0, %s212
      %p214 = pneg %p48
      %p215 = pneg %p45
      %p216 = scmp.lt.s32.totalorder %s20, 1
      %s217 = scalar_select %p216, %s20, 1
      %s218 = smul.addr %s217, 4
      %s219 = smul.addr %s218, 4
      %s220 = scalar_lea.vmem %s1, %s219
      %p221 = pneg %p74
      %p222 = pneg %p71
      %p223 = pneg %p95
      %p224 = pneg %p92
      %s225 = smul.u32 4, %s20
      %p226 = scmp.lt.s32.totalorder %s19, 0
      %s227 = scalar_select %p226, %s19, 0
      %p228 = scmp.lt.s32.totalorder %s225, 7
      %s229 = scalar_select %p228, %s225, 7
      %s230 = smul.addr %s227, 8
      %s231 = sadd.s32 %s229, %s230
      %s232 = smul.addr %s231, 4
      %s233 = scalar_lea.vmem %s3, %s232
      %p234 = pneg %p123
      %p235 = pneg %p120
      %p236 = pneg %p151
      %p237 = pneg %p148
      %s238 = smul.u32 4, %s20
      %p239 = scmp.lt.s32.totalorder %s19, 0
      %s240 = scalar_select %p239, %s19, 0
      %p241 = scmp.lt.s32.totalorder %s238, 7
      %s242 = scalar_select %p241, %s238, 7
      %s243 = smul.addr %s240, 8
      %s244 = sadd.s32 %s242, %s243
      %s245 = smul.addr %s244, 8
      %s246 = scalar_lea.vmem %s4, %s245
      %p247 = scmp.lt.s32.totalorder %s19, 0
      %s248 = scalar_select %p247, %s19, 0
      %s249 = smul.addr %s248, 2
      %s250 = smul.addr %s249, 4
      %s251 = scalar_lea.vmem %s0, %s250
      %p252 = scmp.lt.s32.totalorder %s20, 1
      %s253 = scalar_select %p252, %s20, 1
      %s254 = smul.addr %s253, 4
      %s255 = smul.addr %s254, 4
      %s256 = scalar_lea.vmem %s1, %s255
      %s257 = smul.u32 4, %s20
      %p258 = scmp.lt.s32.totalorder %s19, 0
      %s259 = scalar_select %p258, %s19, 0
      %p260 = scmp.lt.s32.totalorder %s257, 7
      %s261 = scalar_select %p260, %s257, 7
      %s262 = smul.addr %s259, 8
      %s263 = sadd.s32 %s261, %s262
      %s264 = smul.addr %s263, 4
      %s265 = scalar_lea.vmem %s3, %s264
      %s266 = smul.u32 4, %s20
      %s267 = smul.u32 4, %s20
      %p268 = scmp.lt.s32.totalorder %s19, 0
      %s269 = scalar_select %p268, %s19, 0
      %p270 = scmp.lt.s32.totalorder %s267, 7
      %s271 = scalar_select %p270, %s267, 7
      %s272 = smul.addr %s269, 8
      %s273 = sadd.s32 %s271, %s272
      %s274 = smul.addr %s273, 8
      %s275 = scalar_lea.vmem %s4, %s274
      %s276 = smul.u32 4, %s20
      %v278 = vld [vmem:[%s251] sm:$0xf]
      %279 = vst [vmem:[#allocation2] sm:$0xf] %v278
      %v280 = vld [vmem:[%s251] sm:$0xff]
      %282 = vrot.lane.b32.xlu0 %v280, 127
      %v283 = vpop.permute.xlu0 %282
      %v284 = vrot.slane %v283, 4
      %vm285 = vcmask 1039360
      %v286 = vsel %vm285, %v283, %v284
      %288 = vst [vmem:[#allocation2 + $0x4] sm:$0xf] %v286
      %v289 = vld [vmem:[%s251] sm:$0xff]
      %291 = vrot.lane.b32.xlu0 %v289, 123
      %v292 = vpop.permute.xlu0 %291
      %v293 = vrot.slane %v292, 4
      %vm294 = vcmask 1006592
      %v295 = vsel %vm294, %v292, %v293
      %297 = vst [vmem:[#allocation2 + $0x8] sm:$0xf] %v295
      %v298 = vld [vmem:[%s251] sm:$0xff]
      %300 = vrot.lane.b32.xlu0 %v298, 122
      %v301 = vpop.permute.xlu0 %300
      %v302 = vrot.slane %v301, 4
      %vm303 = vcmask 998400
      %v304 = vsel %vm303, %v301, %v302
      %306 = vst [vmem:[#allocation2 + $0xc] sm:$0xf] %v304
      %v307 = vld [vmem:[%s251] sm:$0xff]
      %309 = vrot.lane.b32.xlu0 %v307, 103
      %v310 = vpop.permute.xlu0 %309
      %v311 = vrot.slane %v310, 4
      %vm312 = vcmask 842752
      %v313 = vsel %vm312, %v310, %v311
      %315 = vst [vmem:[#allocation2 + $0x10] sm:$0xf] %v313
      %v316 = vld [vmem:[%s251] sm:$0xff]
      %318 = vrot.lane.b32.xlu0 %v316, 102
      %v319 = vpop.permute.xlu0 %318
      %v320 = vrot.slane %v319, 4
      %vm321 = vcmask 834560
      %v322 = vsel %vm321, %v319, %v320
      %324 = vst [vmem:[#allocation2 + $0x14] sm:$0xf] %v322
      %v325 = vld [vmem:[%s251] sm:$0xff]
      %327 = vrot.lane.b32.xlu0 %v325, 98
      %v328 = vpop.permute.xlu0 %327
      %v329 = vrot.slane %v328, 4
      %vm330 = vcmask 801792
      %v331 = vsel %vm330, %v328, %v329
      %333 = vst [vmem:[#allocation2 + $0x18] sm:$0xf] %v331
      %v334 = vld [vmem:[%s251] sm:$0xff]
      %336 = vrot.lane.b32.xlu0 %v334, 97
      %v337 = vpop.permute.xlu0 %336
      %v338 = vrot.slane %v337, 4
      %vm339 = vcmask 793600
      %v340 = vsel %vm339, %v337, %v338
      %342 = vst [vmem:[#allocation2 + $0x1c] sm:$0xf] %v340
      %v343 = vld [vmem:[#allocation2] sm:$0xf]
      %v344 = vld [vmem:[#allocation2 + $0x4] sm:$0xf]
      %v345 = vld [vmem:[#allocation2 + $0x8] sm:$0xf]
      %v346 = vld [vmem:[#allocation2 + $0xc] sm:$0xf]
      %v347 = vld [vmem:[#allocation2 + $0x10] sm:$0xf]
      %v348 = vld [vmem:[#allocation2 + $0x14] sm:$0xf]
      %v349 = vld [vmem:[#allocation2 + $0x18] sm:$0xf]
      %v350 = vld [vmem:[#allocation2 + $0x1c] sm:$0xf]
      %v351 = vld [vmem:[%s2] sm:$0xff]
      %v352 = vld [vmem:[%s256] sm:$0xf]
      %354 = vset.pattern.permute.xlu0 0
      %355 = vperm.xlu0 %354, %v351
      %v356 = vpop.permute.xlu0 %355
      %v366 = vunpack.c.l.b16 %v343
      %v367 = vunpack.c.l.b16 %v344
      %v368 = vunpack.c.l.b16 %v345
      %v369 = vunpack.c.l.b16 %v346
      %v370 = vunpack.c.l.b16 %v347
      %v371 = vunpack.c.l.b16 %v348
      %v372 = vunpack.c.l.b16 %v349
      %v373 = vunpack.c.l.b16 %v350
      %v374 = vpack.c.b16 %v367, %v366
      %v375 = vpack.c.b16 %v369, %v368
      %v376 = vpack.c.b16 %v371, %v370
      %v377 = vpack.c.b16 %v373, %v372
      %vm382 = vcmask 523264
      %v384 = vsel %vm382, %v352, 0
      %386 = vmatprep.subr.bf16.mxu0 0
      %387 = vmatpush1.bf16.msra.mxu0 0
      %388 = vmatprep.subr.bf16.mxu0 0
      %389 = vmatpush1.bf16.msra.mxu0 0
      %390 = vmatprep.subr.bf16.mxu0 0
      %391 = vmatpush1.bf16.msra.mxu0 0
      %392 = vmatprep.subr.bf16.mxu0 0
      %393 = vmatpush1.bf16.msra.mxu0 0
      %394 = vmatprep.subr.bf16.mxu0 0
      %395 = vmatpush1.bf16.msra.mxu0 %v377
      %396 = vmatprep.subr.bf16.mxu0 0
      %397 = vmatpush1.bf16.msra.mxu0 %v376
      %398 = vmatprep.subr.bf16.mxu0 0
      %399 = vmatpush1.bf16.msra.mxu0 %v375
      %400 = vmatprep.subr.bf16.mxu0 0
      %401 = vmatpush1.bf16.msra.mxu0 %v374
      %402 = vmatprep.subr.bf16.mxu0 0
      %403 = vmatpush2.bf16.msra.mxu0 0
      %404 = vmatprep.subr.bf16.mxu0 0
      %405 = vmatpush2.bf16.msra.mxu0 0
      %406 = vmatprep.subr.bf16.mxu0 0
      %407 = vmatpush2.bf16.msra.mxu0 0
      %408 = vmatprep.subr.bf16.mxu0 0
      %409 = vmatpush2.bf16.msra.mxu0 0
      %410 = vmatprep.subr.bf16.mxu0 0
      %411 = vmatpush2.bf16.msra.mxu0 0
      %412 = vmatprep.subr.bf16.mxu0 0
      %413 = vmatpush2.bf16.msra.mxu0 0
      %414 = vmatprep.subr.bf16.mxu0 0
      %415 = vmatpush2.bf16.msra.mxu0 0
      %416 = vmatprep.subr.bf16.mxu0 0
      %417 = vmatpush2.bf16.msra.mxu0 0
      %418 = vmatprep.mubr.bf16.mxu0 0
      %419 = vmatmul.mubr.bf16.gmra.mxu0 %v384
      %v420 = vpop.f32.mrf.mxu0
      %v421 = vadd.f32 %v356, %v420
      %v422 = vpop.f32.mrf.mxu0
      %v423 = vpop.f32.mrf.mxu0
      %v424 = vpop.f32.mrf.mxu0
      %425 = vdwg.mxu0
      %v426 = vld [vmem:[%s265] sm:$0xf]
      %v427 = vunpack.c.l.bf16 %v426
      %v428 = vadd.f32 %v421, %v427
      %v429 = vmax.f32 %v428, 0.0
      %430 = vst [vmem:[%s275] sm:$0xff] %v429
      %s431 = scalar_lea.vmem %s256, 4
      %v432 = vld [vmem:[%s431] sm:$0xf]
      %v434 = vsel %vm382, %v432, 0
      %436 = vmatprep.subr.bf16.mxu0 0
      %437 = vmatpush1.bf16.msra.mxu0 0
      %438 = vmatprep.subr.bf16.mxu0 0
      %439 = vmatpush1.bf16.msra.mxu0 0
      %440 = vmatprep.subr.bf16.mxu0 0
      %441 = vmatpush1.bf16.msra.mxu0 0
      %442 = vmatprep.subr.bf16.mxu0 0
      %443 = vmatpush1.bf16.msra.mxu0 0
      %444 = vmatprep.subr.bf16.mxu0 0
      %445 = vmatpush1.bf16.msra.mxu0 %v377
      %446 = vmatprep.subr.bf16.mxu0 0
      %447 = vmatpush1.bf16.msra.mxu0 %v376
      %448 = vmatprep.subr.bf16.mxu0 0
      %449 = vmatpush1.bf16.msra.mxu0 %v375
      %450 = vmatprep.subr.bf16.mxu0 0
      %451 = vmatpush1.bf16.msra.mxu0 %v374
      %452 = vmatprep.subr.bf16.mxu0 0
      %453 = vmatpush2.bf16.msra.mxu0 0
      %454 = vmatprep.subr.bf16.mxu0 0
      %455 = vmatpush2.bf16.msra.mxu0 0
      %456 = vmatprep.subr.bf16.mxu0 0
      %457 = vmatpush2.bf16.msra.mxu0 0
      %458 = vmatprep.subr.bf16.mxu0 0
      %459 = vmatpush2.bf16.msra.mxu0 0
      %460 = vmatprep.subr.bf16.mxu0 0
      %461 = vmatpush2.bf16.msra.mxu0 0
      %462 = vmatprep.subr.bf16.mxu0 0
      %463 = vmatpush2.bf16.msra.mxu0 0
      %464 = vmatprep.subr.bf16.mxu0 0
      %465 = vmatpush2.bf16.msra.mxu0 0
      %466 = vmatprep.subr.bf16.mxu0 0
      %467 = vmatpush2.bf16.msra.mxu0 0
      %468 = vmatprep.mubr.bf16.mxu0 0
      %469 = vmatmul.mubr.bf16.gmra.mxu0 %v434
      %v470 = vpop.f32.mrf.mxu0
      %v471 = vadd.f32 %v356, %v470
      %v472 = vpop.f32.mrf.mxu0
      %v473 = vpop.f32.mrf.mxu0
      %v474 = vpop.f32.mrf.mxu0
      %475 = vdwg.mxu0
      %v476 = vld [vmem:[%s265 + $0x4] sm:$0xf]
      %v477 = vunpack.c.l.bf16 %v476
      %v478 = vadd.f32 %v471, %v477
      %v479 = vmax.f32 %v478, 0.0
      %480 = vst [vmem:[%s275 + $0x8] sm:$0xff] %v479
      %s481 = scalar_lea.vmem %s256, 8
      %v482 = vld [vmem:[%s481] sm:$0xf]
      %v484 = vsel %vm382, %v482, 0
      %486 = vmatprep.subr.bf16.mxu0 0
      %487 = vmatpush1.bf16.msra.mxu0 0
      %488 = vmatprep.subr.bf16.mxu0 0
      %489 = vmatpush1.bf16.msra.mxu0 0
      %490 = vmatprep.subr.bf16.mxu0 0
      %491 = vmatpush1.bf16.msra.mxu0 0
      %492 = vmatprep.subr.bf16.mxu0 0
      %493 = vmatpush1.bf16.msra.mxu0 0
      %494 = vmatprep.subr.bf16.mxu0 0
      %495 = vmatpush1.bf16.msra.mxu0 %v377
      %496 = vmatprep.subr.bf16.mxu0 0
      %497 = vmatpush1.bf16.msra.mxu0 %v376
      %498 = vmatprep.subr.bf16.mxu0 0
      %499 = vmatpush1.bf16.msra.mxu0 %v375
      %500 = vmatprep.subr.bf16.mxu0 0
      %501 = vmatpush1.bf16.msra.mxu0 %v374
      %502 = vmatprep.subr.bf16.mxu0 0
      %503 = vmatpush2.bf16.msra.mxu0 0
      %504 = vmatprep.subr.bf16.mxu0 0
      %505 = vmatpush2.bf16.msra.mxu0 0
      %506 = vmatprep.subr.bf16.mxu0 0
      %507 = vmatpush2.bf16.msra.mxu0 0
      %508 = vmatprep.subr.bf16.mxu0 0
      %509 = vmatpush2.bf16.msra.mxu0 0
      %510 = vmatprep.subr.bf16.mxu0 0
      %511 = vmatpush2.bf16.msra.mxu0 0
      %512 = vmatprep.subr.bf16.mxu0 0
      %513 = vmatpush2.bf16.msra.mxu0 0
      %514 = vmatprep.subr.bf16.mxu0 0
      %515 = vmatpush2.bf16.msra.mxu0 0
      %516 = vmatprep.subr.bf16.mxu0 0
      %517 = vmatpush2.bf16.msra.mxu0 0
      %518 = vmatprep.mubr.bf16.mxu0 0
      %519 = vmatmul.mubr.bf16.gmra.mxu0 %v484
      %v520 = vpop.f32.mrf.mxu0
      %v521 = vadd.f32 %v356, %v520
      %v522 = vpop.f32.mrf.mxu0
      %v523 = vpop.f32.mrf.mxu0
      %v524 = vpop.f32.mrf.mxu0
      %525 = vdwg.mxu0
      %v526 = vld [vmem:[%s265 + $0x8] sm:$0xf]
      %v527 = vunpack.c.l.bf16 %v526
      %v528 = vadd.f32 %v521, %v527
      %v529 = vmax.f32 %v528, 0.0
      %530 = vst [vmem:[%s275 + $0x10] sm:$0xff] %v529
      %s531 = scalar_lea.vmem %s256, 12
      %v532 = vld [vmem:[%s531] sm:$0xf]
      %v534 = vsel %vm382, %v532, 0
      %536 = vmatprep.subr.bf16.mxu0 0
      %537 = vmatpush1.bf16.msra.mxu0 0
      %538 = vmatprep.subr.bf16.mxu0 0
      %539 = vmatpush1.bf16.msra.mxu0 0
      %540 = vmatprep.subr.bf16.mxu0 0
      %541 = vmatpush1.bf16.msra.mxu0 0
      %542 = vmatprep.subr.bf16.mxu0 0
      %543 = vmatpush1.bf16.msra.mxu0 0
      %544 = vmatprep.subr.bf16.mxu0 0
      %545 = vmatpush1.bf16.msra.mxu0 %v377
      %546 = vmatprep.subr.bf16.mxu0 0
      %547 = vmatpush1.bf16.msra.mxu0 %v376
      %548 = vmatprep.subr.bf16.mxu0 0
      %549 = vmatpush1.bf16.msra.mxu0 %v375
      %550 = vmatprep.subr.bf16.mxu0 0
      %551 = vmatpush1.bf16.msra.mxu0 %v374
      %552 = vmatprep.subr.bf16.mxu0 0
      %553 = vmatpush2.bf16.msra.mxu0 0
      %554 = vmatprep.subr.bf16.mxu0 0
      %555 = vmatpush2.bf16.msra.mxu0 0
      %556 = vmatprep.subr.bf16.mxu0 0
      %557 = vmatpush2.bf16.msra.mxu0 0
      %558 = vmatprep.subr.bf16.mxu0 0
      %559 = vmatpush2.bf16.msra.mxu0 0
      %560 = vmatprep.subr.bf16.mxu0 0
      %561 = vmatpush2.bf16.msra.mxu0 0
      %562 = vmatprep.subr.bf16.mxu0 0
      %563 = vmatpush2.bf16.msra.mxu0 0
      %564 = vmatprep.subr.bf16.mxu0 0
      %565 = vmatpush2.bf16.msra.mxu0 0
      %566 = vmatprep.subr.bf16.mxu0 0
      %567 = vmatpush2.bf16.msra.mxu0 0
      %568 = vmatprep.mubr.bf16.mxu0 0
      %569 = vmatmul.mubr.bf16.gmra.mxu0 %v534
      %v570 = vpop.f32.mrf.mxu0
      %v571 = vadd.f32 %v356, %v570
      %v572 = vpop.f32.mrf.mxu0
      %v573 = vpop.f32.mrf.mxu0
      %v574 = vpop.f32.mrf.mxu0
      %575 = vdwg.mxu0
      %v576 = vld [vmem:[%s265 + $0xc] sm:$0xf]
      %v577 = vunpack.c.l.bf16 %v576
      %v578 = vadd.f32 %v571, %v577
      %v579 = vmax.f32 %v578, 0.0
      %580 = vst [vmem:[%s275 + $0x18] sm:$0xff] %v579
      %s581 = smul.u32 4, %s20
      %p582 = scmp.lt.s32.totalorder %s19, 0
      %s583 = scalar_select %p582, %s19, 0
      %p584 = scmp.lt.s32.totalorder %s581, 7
      %s585 = scalar_select %p584, %s581, 7
      %s586 = smul.addr %s583, 8
      %s587 = sadd.s32 %s585, %s586
      %s588 = smul.addr %s587, 8
      %s589 = scalar_lea.vmem %s4, %s588
      // Predicated region
      $region37: #{hourglass_forward.10} parent=35 // pred_check
        %p590 = pneg %p148
      $region38: #{hourglass_forward.10} parent=35 // pred_check_branch
        %592 = sbr.rel (%p590) target = $region40
      $region39: #{hourglass_forward.10} parent=35 // pred_region
        %s593 = smul.u32 4, %s20
      $region40: #{hourglass_forward.10} parent=35 // pred_fallthru
        _
    $region36: #{hourglass_forward.10} parent=5 // pred_fallthru
      _
    %p594 = scmp.le.s32.totalorder 2, %s10
    // Predicated region
    $region41: #{hourglass_forward.10} parent=5 // pred_check
      %p595 = pneg %p594
    $region42: #{hourglass_forward.10} parent=5 // pred_check_branch
      %597 = sbr.rel (%p595) target = $region44
    $region43: #{hourglass_forward.10} parent=5 // pred_region
      %s598 = ssub.s32 %s10, 2
      // Predicated region
      $region45: #{hourglass_forward.10} parent=43 // pred_check
        %p599 = pneg %p154
      $region46: #{hourglass_forward.10} parent=43 // pred_check_branch
        %601 = sbr.rel (%p599) target = $region48
      $region47: #{hourglass_forward.10} parent=43 // pred_region
        %s602 = smul.u32 4, %s22
        %p603 = scmp.lt.s32.totalorder %s21, 0
        %s604 = scalar_select %p603, %s21, 0
        %p605 = scmp.lt.s32.totalorder %s602, 7
        %s606 = scalar_select %p605, %s602, 7
        %s607 = smul.addr %s604, 8
        %s608 = sadd.s32 %s606, %s607
        %s609 = smul.addr %s608, 8
        %s610 = scalar_lea.vmem %s4, %s609
      $region48: #{hourglass_forward.10} parent=43 // pred_fallthru
        _
    $region44: #{hourglass_forward.10} parent=5 // pred_fallthru
      _
  $region6: #{hourglass_forward.10} parent=0 // loop_footer
    %s14 = sadd.s32 1, %s10
  $region7: #{hourglass_forward.10} parent=0 // loop_footer_branch
    %9 = sbr.rel target = $region3
  $region8: #{hourglass_forward.10} parent=0 // loop_exit
    _

// kernel: hourglass_forward.11
$region0: #{hourglass_forward.11}
  #allocation0 [shape = 'u32[]', space=smem, size = 0x4, offset = 0x4, fixed_abs, tag = 'smem constant byte address 0x4 - core index']
  #allocation1 [shape = 'u32[144,128]{1,0:T(1,128)}', space=vmem, size = 0x12000, scoped, tag = 'internal scratch']
  #allocation2 [shape = 'bf16[64,384]{1,0:T(8,128)(2,1)}', space=vmem, size = 0xc000, scoped, tag = 'scratch operand']
  %s0 = inlined_call_operand.vmem [shape: bf16[1,8,512], index: 0, kind: input, shape index: {}]
  %s1 = inlined_call_operand.vmem [shape: bf16[2,4,8,64], index: 1, kind: input, shape index: {}]
  %s2 = inlined_call_operand.vmem [shape: f32[8,1], index: 2, kind: input, shape index: {}]
  %s3 = inlined_call_operand.vmem [shape: f32[1,8,3072], index: 3, kind: output, shape index: {}]
  %s4 = sld [smem:[#allocation0]]
  $region45: #{hourglass_forward.11} parent=0
    _
  %s6 = ssub.s32 1, %s4
  %s7 = scalar_select 0, %s6, %s4
  loop: start=0, step=1, limit=4
  $region2: #{hourglass_forward.11} parent=0 // loop_pre_header
    _
  $region3: #{hourglass_forward.11} parent=0 // loop_header
    %s9 = sphi 0, %s13
    %p10 = scmp.ge.s32.totalorder %s9, 4
    %s16 = sphi 0, %s28
    %s17 = sphi 0, %s24
    %s18 = sphi 0, %s16
    %s19 = sphi 0, %s17
    %s20 = sphi 0, %s18
    %s21 = sphi 0, %s19
    %s31 = sphi 0, %s33
    %s34 = sphi 0, %s31
    %s35 = sphi 0, %s34
    %s51 = sphi 0, %s35
    %s57 = sphi 0, %s59
    %s60 = sphi 0, %s57
    %s61 = sphi 0, %s60
    %s77 = sphi 0, %s61
    %s81 = sphi 0, %s81
    %s83 = sphi 0, %s81
    %s84 = sphi 0, %s83
    %s98 = sphi 0, %s84
    %s106 = sphi 0, %s108
    %s109 = sphi 0, %s106
    %s110 = sphi 0, %s109
    %s126 = sphi 0, %s110
  $region4: #{hourglass_forward.11} parent=0 // loop_header_branch
    %12 = sbr.rel (%p10) target = $region8
  $region5: #{hourglass_forward.11} parent=0 // loop_body
    %s14 = ssub.s32 %s9, 1
    %s15 = ssub.s32 %s9, 2
    %s22 = sadd.s32 1, %s17
    %p23 = scmp.ge.s32.totalorder %s22, 2
    %s24 = scalar_select %p23, 0, %s22
    %s25 = sadd.s32 1, %s16
    %s26 = scalar_select %p23, %s25, %s16
    %p27 = scmp.ge.s32.totalorder %s26, 1
    %s28 = scalar_select %p27, 0, %s26
    %s29 = ssub.s32 %s16, %s28
    %p30 = scmp.eq.s32.totalorder %s29, 0
    %s32 = sadd.s32 %s31, 1
    %s33 = scalar_select %p30, %s31, %s32
    %p36 = pneg %p30
    %p37 = scmp.eq.s32.totalorder %s9, 1
    %p38 = por %p36, %p37
    %p39 = scmp.ne.s32.totalorder %s31, %s34
    %p40 = scmp.eq.s32.totalorder %s9, 0
    %p41 = por %p39, %p40
    %p42 = scmp.ne.s32.totalorder %s31, %s34
    %p43 = scmp.eq.s32.totalorder %s14, 1
    %p44 = por %p42, %p43
    %p45 = scmp.ne.s32.totalorder %s34, %s35
    %p46 = scmp.eq.s32.totalorder %s14, 0
    %p47 = por %p45, %p46
    %p48 = scmp.ne.s32.totalorder %s34, %s35
    %p49 = scmp.eq.s32.totalorder %s15, 1
    %p50 = por %p48, %p49
    %p52 = scmp.ne.s32.totalorder %s35, %s51
    %p53 = scmp.eq.s32.totalorder %s15, 0
    %p54 = por %p52, %p53
    %s55 = ssub.s32 %s17, %s24
    %p56 = scmp.eq.s32.totalorder %s55, 0
    %s58 = sadd.s32 %s57, 1
    %s59 = scalar_select %p56, %s57, %s58
    %p62 = pneg %p56
    %p63 = scmp.eq.s32.totalorder %s9, 1
    %p64 = por %p62, %p63
    %p65 = scmp.ne.s32.totalorder %s57, %s60
    %p66 = scmp.eq.s32.totalorder %s9, 0
    %p67 = por %p65, %p66
    %p68 = scmp.ne.s32.totalorder %s57, %s60
    %p69 = scmp.eq.s32.totalorder %s14, 1
    %p70 = por %p68, %p69
    %p71 = scmp.ne.s32.totalorder %s60, %s61
    %p72 = scmp.eq.s32.totalorder %s14, 0
    %p73 = por %p71, %p72
    %p74 = scmp.ne.s32.totalorder %s60, %s61
    %p75 = scmp.eq.s32.totalorder %s15, 1
    %p76 = por %p74, %p75
    %p78 = scmp.ne.s32.totalorder %s61, %s77
    %p79 = scmp.eq.s32.totalorder %s15, 0
    %p80 = por %p78, %p79
    %s82 = sadd.s32 %s81, 1
    %p85 = scmp.eq.s32.totalorder %s9, 1
    %p86 = scmp.ne.s32.totalorder %s81, %s83
    %p87 = scmp.eq.s32.totalorder %s9, 0
    %p88 = por %p86, %p87
    %p89 = scmp.ne.s32.totalorder %s81, %s83
    %p90 = scmp.eq.s32.totalorder %s14, 1
    %p91 = por %p89, %p90
    %p92 = scmp.ne.s32.totalorder %s83, %s84
    %p93 = scmp.eq.s32.totalorder %s14, 0
    %p94 = por %p92, %p93
    %p95 = scmp.ne.s32.totalorder %s83, %s84
    %p96 = scmp.eq.s32.totalorder %s15, 1
    %p97 = por %p95, %p96
    %p99 = scmp.ne.s32.totalorder %s84, %s98
    %p100 = scmp.eq.s32.totalorder %s15, 0
    %p101 = por %p99, %p100
    %s102 = ssub.s32 %s16, %s28
    %s103 = ssub.s32 %s17, %s24
    %s104 = sor.u32 %s102, %s103
    %p105 = scmp.eq.s32.totalorder %s104, 0
    %s107 = sadd.s32 %s106, 1
    %s108 = scalar_select %p105, %s106, %s107
    %p111 = pneg %p105
    %p112 = scmp.eq.s32.totalorder %s9, 1
    %p113 = por %p111, %p112
    %p114 = scmp.ne.s32.totalorder %s106, %s109
    %p115 = scmp.eq.s32.totalorder %s9, 0
    %p116 = por %p114, %p115
    %p117 = scmp.ne.s32.totalorder %s106, %s109
    %p118 = scmp.eq.s32.totalorder %s14, 1
    %p119 = por %p117, %p118
    %p120 = scmp.ne.s32.totalorder %s109, %s110
    %p121 = scmp.eq.s32.totalorder %s14, 0
    %p122 = por %p120, %p121
    %p123 = scmp.ne.s32.totalorder %s109, %s110
    %p124 = scmp.eq.s32.totalorder %s15, 1
    %p125 = por %p123, %p124
    %p127 = scmp.ne.s32.totalorder %s110, %s126
    %p128 = scmp.eq.s32.totalorder %s15, 0
    %p129 = por %p127, %p128
    %p130 = scmp.le.s32.totalorder 1, %s9
    %p131 = scmp.lt.s32.totalorder %s9, 3
    %p132 = pnand %p130, %p131
    %p133 = pneg %p132
    // Predicated region
    $region9: #{hourglass_forward.11} parent=5 // pred_check
      _
    $region10: #{hourglass_forward.11} parent=5 // pred_check_branch
      %135 = sbr.rel (%p132) target = $region12
    $region11: #{hourglass_forward.11} parent=5 // pred_region
      %s136 = ssub.s32 %s9, 1
      // Predicated region
      $region13: #{hourglass_forward.11} parent=11 // pred_check
        %p137 = pneg %p47
      $region14: #{hourglass_forward.11} parent=11 // pred_check_branch
        %139 = sbr.rel (%p137) target = $region16
      $region15: #{hourglass_forward.11} parent=11 // pred_region
        %p140 = scmp.lt.s32.totalorder %s18, 0
        %s141 = scalar_select %p140, %s18, 0
        %s142 = smul.addr %s141, 4
        %s143 = smul.addr %s142, 4
        %s144 = scalar_lea.vmem %s0, %s143
      $region16: #{hourglass_forward.11} parent=11 // pred_fallthru
        _
      // Predicated region
      $region17: #{hourglass_forward.11} parent=11 // pred_check
        %p145 = pneg %p94
      $region18: #{hourglass_forward.11} parent=11 // pred_check_branch
        %147 = sbr.rel (%p145) target = $region20
      $region19: #{hourglass_forward.11} parent=11 // pred_region
        _
      $region20: #{hourglass_forward.11} parent=11 // pred_fallthru
        _
    $region12: #{hourglass_forward.11} parent=5 // pred_fallthru
      _
    %p148 = scmp.lt.s32.totalorder %s9, 2
    // Predicated region
    $region21: #{hourglass_forward.11} parent=5 // pred_check
      %p149 = pneg %p148
    $region22: #{hourglass_forward.11} parent=5 // pred_check_branch
      %151 = sbr.rel (%p149) target = $region24
    $region23: #{hourglass_forward.11} parent=5 // pred_region
      // Predicated region
      $region25: #{hourglass_forward.11} parent=23 // pred_check
        %p152 = pneg %p67
      $region26: #{hourglass_forward.11} parent=23 // pred_check_branch
        %154 = sbr.rel (%p152) target = $region28
      $region27: #{hourglass_forward.11} parent=23 // pred_region
        %p155 = scmp.lt.s32.totalorder %s17, 1
        %s156 = scalar_select %p155, %s17, 1
        %s157 = smul.addr %s156, 4
        %s158 = smul.addr %s157, 4
        %s159 = scalar_lea.vmem %s1, %s158
      $region28: #{hourglass_forward.11} parent=23 // pred_fallthru
        _
    $region24: #{hourglass_forward.11} parent=5 // pred_fallthru
      _
    %p160 = scmp.le.s32.totalorder 1, %s9
    %p161 = scmp.lt.s32.totalorder %s9, 3
    %p162 = pnand %p160, %p161
    %p163 = pneg %p162
    // Predicated region
    $region29: #{hourglass_forward.11} parent=5 // pred_check
      _
    $region30: #{hourglass_forward.11} parent=5 // pred_check_branch
      %165 = sbr.rel (%p162) target = $region32
    $region31: #{hourglass_forward.11} parent=5 // pred_region
      %s166 = ssub.s32 %s9, 1
      %p167 = scmp.lt.s32.totalorder %s18, 0
      %s168 = scalar_select %p167, %s18, 0
      %s169 = smul.addr %s168, 4
      %s170 = smul.addr %s169, 4
      %s171 = scalar_lea.vmem %s0, %s170
      %p172 = pneg %p47
      %p173 = pneg %p44
      %p174 = scmp.lt.s32.totalorder %s19, 1
      %s175 = scalar_select %p174, %s19, 1
      %s176 = smul.addr %s175, 4
      %s177 = smul.addr %s176, 4
      %s178 = scalar_lea.vmem %s1, %s177
      %p179 = pneg %p73
      %p180 = pneg %p70
      %p181 = pneg %p94
      %p182 = pneg %p91
      %p183 = pneg %p122
      %p184 = pneg %p119
      %s185 = smul.u32 12, %s19
      %p186 = scmp.lt.s32.totalorder %s18, 0
      %s187 = scalar_select %p186, %s18, 0
      %p188 = scmp.lt.s32.totalorder %s185, 23
      %s189 = scalar_select %p188, %s185, 23
      %s190 = smul.addr %s187, 24
      %s191 = sadd.s32 %s189, %s190
      %s192 = smul.addr %s191, 8
      %s193 = scalar_lea.vmem %s3, %s192
      %p194 = scmp.lt.s32.totalorder %s18, 0
      %s195 = scalar_select %p194, %s18, 0
      %s196 = smul.addr %s195, 4
      %s197 = smul.addr %s196, 4
      %s198 = scalar_lea.vmem %s0, %s197
      %p199 = scmp.lt.s32.totalorder %s19, 1
      %s200 = scalar_select %p199, %s19, 1
      %s201 = smul.addr %s200, 4
      %s202 = smul.addr %s201, 4
      %s203 = scalar_lea.vmem %s1, %s202
      %s204 = smul.u32 12, %s19
      %p205 = scmp.lt.s32.totalorder %s18, 0
      %s206 = scalar_select %p205, %s18, 0
      %p207 = scmp.lt.s32.totalorder %s204, 23
      %s208 = scalar_select %p207, %s204, 23
      %s209 = smul.addr %s206, 24
      %s210 = sadd.s32 %s208, %s209
      %s211 = smul.addr %s210, 8
      %s212 = scalar_lea.vmem %s3, %s211
      %s213 = smul.u32 12, %s19
      %v215 = vld [vmem:[%s198] sm:$0xff]
      %v216 = vld [vmem:[%s198 + $0x8] sm:$0xf]
      %217 = vst [vmem:[#allocation2] sm:$0xff] %v215
      %218 = vst [vmem:[#allocation2 + $0x8] sm:$0xf] %v216
      %v219 = vld [vmem:[%s198] sm:$0xff]
      %v220 = vld [vmem:[%s198 + $0x8] sm:$0xff]
      %223 = vrot.lane.b32.xlu0 %v219, 127
      %v224 = vpop.permute.xlu0 %223
      %225 = vrot.lane.b32.xlu0 %v220, 127
      %v226 = vpop.permute.xlu0 %225
      %v227 = vrot.slane %v224, 4
      %v228 = vrot.slane %v226, 4
      %vm229 = vcmask 1043456
      %v230 = vsel %vm229, %v227, %v228
      %vm231 = vcmask 1039360
      %v232 = vsel %vm231, %v224, %v230
      %v233 = vsel %vm231, %v226, %v228
      %236 = vst [vmem:[#allocation2 + $0xc] sm:$0xff] %v232
      %237 = vst [vmem:[#allocation2 + $0x14] sm:$0xf] %v233
      %v238 = vld [vmem:[%s198] sm:$0xff]
      %v239 = vld [vmem:[%s198 + $0x8] sm:$0xff]
      %242 = vrot.lane.b32.xlu0 %v238, 119
      %v243 = vpop.permute.xlu0 %242
      %244 = vrot.lane.b32.xlu0 %v239, 119
      %v245 = vpop.permute.xlu0 %244
      %v246 = vrot.slane %v243, 4
      %v247 = vrot.slane %v245, 4
      %v248 = vsel %vm229, %v246, %v247
      %vm249 = vcmask 973824
      %v250 = vsel %vm249, %v243, %v248
      %v251 = vsel %vm249, %v245, %v247
      %254 = vst [vmem:[#allocation2 + $0x18] sm:$0xff] %v250
      %255 = vst [vmem:[#allocation2 + $0x20] sm:$0xf] %v251
      %v256 = vld [vmem:[%s198] sm:$0xff]
      %v257 = vld [vmem:[%s198 + $0x8] sm:$0xff]
      %260 = vrot.lane.b32.xlu0 %v256, 118
      %v261 = vpop.permute.xlu0 %260
      %262 = vrot.lane.b32.xlu0 %v257, 118
      %v263 = vpop.permute.xlu0 %262
      %v264 = vrot.slane %v261, 4
      %v265 = vrot.slane %v263, 4
      %v266 = vsel %vm229, %v264, %v265
      %vm267 = vcmask 965632
      %v268 = vsel %vm267, %v261, %v266
      %v269 = vsel %vm267, %v263, %v265
      %272 = vst [vmem:[#allocation2 + $0x24] sm:$0xff] %v268
      %273 = vst [vmem:[#allocation2 + $0x2c] sm:$0xf] %v269
      %v274 = vld [vmem:[%s198] sm:$0xff]
      %v275 = vld [vmem:[%s198 + $0x8] sm:$0xff]
      %278 = vrot.lane.b32.xlu0 %v274, 47
      %v279 = vpop.permute.xlu0 %278
      %280 = vrot.lane.b32.xlu0 %v275, 47
      %v281 = vpop.permute.xlu0 %280
      %v282 = vrot.slane %v279, 4
      %v283 = vrot.slane %v281, 4
      %v284 = vsel %vm229, %v282, %v283
      %vm285 = vcmask 384000
      %v286 = vsel %vm285, %v279, %v284
      %v287 = vsel %vm285, %v281, %v283
      %290 = vst [vmem:[#allocation2 + $0x30] sm:$0xff] %v286
      %291 = vst [vmem:[#allocation2 + $0x38] sm:$0xf] %v287
      %v292 = vld [vmem:[%s198] sm:$0xff]
      %v293 = vld [vmem:[%s198 + $0x8] sm:$0xff]
      %296 = vrot.lane.b32.xlu0 %v292, 46
      %v297 = vpop.permute.xlu0 %296
      %298 = vrot.lane.b32.xlu0 %v293, 46
      %v299 = vpop.permute.xlu0 %298
      %v300 = vrot.slane %v297, 4
      %v301 = vrot.slane %v299, 4
      %v302 = vsel %vm229, %v300, %v301
      %vm303 = vcmask 375808
      %v304 = vsel %vm303, %v297, %v302
      %v305 = vsel %vm303, %v299, %v301
      %308 = vst [vmem:[#allocation2 + $0x3c] sm:$0xff] %v304
      %309 = vst [vmem:[#allocation2 + $0x44] sm:$0xf] %v305
      %v310 = vld [vmem:[%s198] sm:$0xff]
      %v311 = vld [vmem:[%s198 + $0x8] sm:$0xff]
      %314 = vrot.lane.b32.xlu0 %v310, 38
      %v315 = vpop.permute.xlu0 %314
      %316 = vrot.lane.b32.xlu0 %v311, 38
      %v317 = vpop.permute.xlu0 %316
      %v318 = vrot.slane %v315, 4
      %v319 = vrot.slane %v317, 4
      %v320 = vsel %vm229, %v318, %v319
      %vm321 = vcmask 310272
      %v322 = vsel %vm321, %v315, %v320
      %v323 = vsel %vm321, %v317, %v319
      %326 = vst [vmem:[#allocation2 + $0x48] sm:$0xff] %v322
      %327 = vst [vmem:[#allocation2 + $0x50] sm:$0xf] %v323
      %v328 = vld [vmem:[%s198] sm:$0xff]
      %v329 = vld [vmem:[%s198 + $0x8] sm:$0xff]
      %332 = vrot.lane.b32.xlu0 %v328, 37
      %v333 = vpop.permute.xlu0 %332
      %334 = vrot.lane.b32.xlu0 %v329, 37
      %v335 = vpop.permute.xlu0 %334
      %v336 = vrot.slane %v333, 4
      %v337 = vrot.slane %v335, 4
      %v338 = vsel %vm229, %v336, %v337
      %vm339 = vcmask 302080
      %v340 = vsel %vm339, %v333, %v338
      %v341 = vsel %vm339, %v335, %v337
      %344 = vst [vmem:[#allocation2 + $0x54] sm:$0xff] %v340
      %345 = vst [vmem:[#allocation2 + $0x5c] sm:$0xf] %v341
      %v346 = vld [vmem:[#allocation2] sm:$0xff]
      %v347 = vld [vmem:[#allocation2 + $0x8] sm:$0xf]
      %v348 = vld [vmem:[#allocation2 + $0xc] sm:$0xff]
      %v349 = vld [vmem:[#allocation2 + $0x14] sm:$0xf]
      %v350 = vld [vmem:[#allocation2 + $0x18] sm:$0xff]
      %v351 = vld [vmem:[#allocation2 + $0x20] sm:$0xf]
      %v352 = vld [vmem:[#allocation2 + $0x24] sm:$0xff]
      %v353 = vld [vmem:[#allocation2 + $0x2c] sm:$0xf]
      %v354 = vld [vmem:[#allocation2 + $0x30] sm:$0xff]
      %v355 = vld [vmem:[#allocation2 + $0x38] sm:$0xf]
      %v356 = vld [vmem:[#allocation2 + $0x3c] sm:$0xff]
      %v357 = vld [vmem:[#allocation2 + $0x44] sm:$0xf]
      %v358 = vld [vmem:[#allocation2 + $0x48] sm:$0xff]
      %v359 = vld [vmem:[#allocation2 + $0x50] sm:$0xf]
      %v360 = vld [vmem:[#allocation2 + $0x54] sm:$0xff]
      %v361 = vld [vmem:[#allocation2 + $0x5c] sm:$0xf]
      %v362 = vld [vmem:[%s2] sm:$0xff]
      %v363 = vld [vmem:[%s203] sm:$0xf]
      %365 = vset.pattern.permute.xlu0 0
      %366 = vperm.xlu0 %365, %v362
      %v367 = vpop.permute.xlu0 %366
      %v385 = vunpack.c.l.b16 %v346
      %v386 = vunpack.c.h.b16 %v346
      %v387 = vunpack.c.l.b16 %v347
      %v388 = vunpack.c.l.b16 %v348
      %v389 = vunpack.c.h.b16 %v348
      %v390 = vunpack.c.l.b16 %v349
      %v391 = vunpack.c.l.b16 %v350
      %v392 = vunpack.c.h.b16 %v350
      %v393 = vunpack.c.l.b16 %v351
      %v394 = vunpack.c.l.b16 %v352
      %v395 = vunpack.c.h.b16 %v352
      %v396 = vunpack.c.l.b16 %v353
      %v397 = vunpack.c.l.b16 %v354
      %v398 = vunpack.c.h.b16 %v354
      %v399 = vunpack.c.l.b16 %v355
      %v400 = vunpack.c.l.b16 %v356
      %v401 = vunpack.c.h.b16 %v356
      %v402 = vunpack.c.l.b16 %v357
      %v403 = vunpack.c.l.b16 %v358
      %v404 = vunpack.c.h.b16 %v358
      %v405 = vunpack.c.l.b16 %v359
      %v406 = vunpack.c.l.b16 %v360
      %v407 = vunpack.c.h.b16 %v360
      %v408 = vunpack.c.l.b16 %v361
      %v409 = vpack.c.b16 %v388, %v385
      %v410 = vpack.c.b16 %v389, %v386
      %v411 = vpack.c.b16 %v390, %v387
      %v412 = vpack.c.b16 %v394, %v391
      %v413 = vpack.c.b16 %v395, %v392
      %v414 = vpack.c.b16 %v396, %v393
      %v415 = vpack.c.b16 %v400, %v397
      %v416 = vpack.c.b16 %v401, %v398
      %v417 = vpack.c.b16 %v402, %v399
      %v418 = vpack.c.b16 %v406, %v403
      %v419 = vpack.c.b16 %v407, %v404
      %v420 = vpack.c.b16 %v408, %v405
      %vm433 = vcmask 523264
      %v435 = vsel %vm433, %v363, 0
      %437 = vmatprep.subr.bf16.mxu0 0
      %438 = vmatpush1.bf16.msra.mxu0 0
      %439 = vmatprep.subr.bf16.mxu0 0
      %440 = vmatpush1.bf16.msra.mxu0 0
      %441 = vmatprep.subr.bf16.mxu0 0
      %442 = vmatpush1.bf16.msra.mxu0 0
      %443 = vmatprep.subr.bf16.mxu0 0
      %444 = vmatpush1.bf16.msra.mxu0 0
      %445 = vmatprep.subr.bf16.mxu0 %v419
      %446 = vmatpush1.bf16.msra.mxu0 %v418
      %447 = vmatprep.subr.bf16.mxu0 %v416
      %448 = vmatpush1.bf16.msra.mxu0 %v415
      %449 = vmatprep.subr.bf16.mxu0 %v413
      %450 = vmatpush1.bf16.msra.mxu0 %v412
      %451 = vmatprep.subr.bf16.mxu0 %v410
      %452 = vmatpush1.bf16.msra.mxu0 %v409
      %453 = vmatprep.subr.bf16.mxu0 0
      %454 = vmatpush2.bf16.msra.mxu0 0
      %455 = vmatprep.subr.bf16.mxu0 0
      %456 = vmatpush2.bf16.msra.mxu0 0
      %457 = vmatprep.subr.bf16.mxu0 0
      %458 = vmatpush2.bf16.msra.mxu0 0
      %459 = vmatprep.subr.bf16.mxu0 0
      %460 = vmatpush2.bf16.msra.mxu0 0
      %461 = vmatprep.subr.bf16.mxu0 0
      %462 = vmatpush2.bf16.msra.mxu0 0
      %463 = vmatprep.subr.bf16.mxu0 0
      %464 = vmatpush2.bf16.msra.mxu0 0
      %465 = vmatprep.subr.bf16.mxu0 0
      %466 = vmatpush2.bf16.msra.mxu0 0
      %467 = vmatprep.subr.bf16.mxu0 0
      %468 = vmatpush2.bf16.msra.mxu0 0
      %469 = vmatprep.mubr.bf16.mxu0 0
      %470 = vmatmul.mubr.bf16.gmra.mxu0 %v435
      %v471 = vpop.f32.mrf.mxu0
      %v472 = vadd.f32 %v367, %v471
      %v473 = vpop.f32.mrf.mxu0
      %v474 = vadd.f32 %v367, %v473
      %v475 = vpop.f32.mrf.mxu0
      %v476 = vpop.f32.mrf.mxu0
      %477 = vdwg.mxu0
      %478 = vmatprep.subr.bf16.mxu0 0
      %479 = vmatpush1.bf16.msra.mxu0 0
      %480 = vmatprep.subr.bf16.mxu0 0
      %481 = vmatpush1.bf16.msra.mxu0 0
      %482 = vmatprep.subr.bf16.mxu0 0
      %483 = vmatpush1.bf16.msra.mxu0 0
      %484 = vmatprep.subr.bf16.mxu0 0
      %485 = vmatpush1.bf16.msra.mxu0 0
      %486 = vmatprep.subr.bf16.mxu0 0
      %487 = vmatpush1.bf16.msra.mxu0 %v420
      %488 = vmatprep.subr.bf16.mxu0 0
      %489 = vmatpush1.bf16.msra.mxu0 %v417
      %490 = vmatprep.subr.bf16.mxu0 0
      %491 = vmatpush1.bf16.msra.mxu0 %v414
      %492 = vmatprep.subr.bf16.mxu0 0
      %493 = vmatpush1.bf16.msra.mxu0 %v411
      %494 = vmatprep.subr.bf16.mxu0 0
      %495 = vmatpush2.bf16.msra.mxu0 0
      %496 = vmatprep.subr.bf16.mxu0 0
      %497 = vmatpush2.bf16.msra.mxu0 0
      %498 = vmatprep.subr.bf16.mxu0 0
      %499 = vmatpush2.bf16.msra.mxu0 0
      %500 = vmatprep.subr.bf16.mxu0 0
      %501 = vmatpush2.bf16.msra.mxu0 0
      %502 = vmatprep.subr.bf16.mxu0 0
      %503 = vmatpush2.bf16.msra.mxu0 0
      %504 = vmatprep.subr.bf16.mxu0 0
      %505 = vmatpush2.bf16.msra.mxu0 0
      %506 = vmatprep.subr.bf16.mxu0 0
      %507 = vmatpush2.bf16.msra.mxu0 0
      %508 = vmatprep.subr.bf16.mxu0 0
      %509 = vmatpush2.bf16.msra.mxu0 0
      %510 = vmatprep.mubr.bf16.mxu0 0
      %511 = vmatmul.mubr.bf16.gmra.mxu0 %v435
      %v512 = vpop.f32.mrf.mxu0
      %v513 = vadd.f32 %v367, %v512
      %v514 = vpop.f32.mrf.mxu0
      %v515 = vpop.f32.mrf.mxu0
      %v516 = vpop.f32.mrf.mxu0
      %517 = vdwg.mxu0
      %518 = vst [vmem:[%s212] sm:$0xff] %v472
      %519 = vst [vmem:[%s212 + $0x8] sm:$0xff] %v474
      %520 = vst [vmem:[%s212 + $0x10] sm:$0xff] %v513
      %s521 = scalar_lea.vmem %s203, 4
      %v522 = vld [vmem:[%s521] sm:$0xf]
      %v524 = vsel %vm433, %v522, 0
      %526 = vmatprep.subr.bf16.mxu0 0
      %527 = vmatpush1.bf16.msra.mxu0 0
      %528 = vmatprep.subr.bf16.mxu0 0
      %529 = vmatpush1.bf16.msra.mxu0 0
      %530 = vmatprep.subr.bf16.mxu0 0
      %531 = vmatpush1.bf16.msra.mxu0 0
      %532 = vmatprep.subr.bf16.mxu0 0
      %533 = vmatpush1.bf16.msra.mxu0 0
      %534 = vmatprep.subr.bf16.mxu0 %v419
      %535 = vmatpush1.bf16.msra.mxu0 %v418
      %536 = vmatprep.subr.bf16.mxu0 %v416
      %537 = vmatpush1.bf16.msra.mxu0 %v415
      %538 = vmatprep.subr.bf16.mxu0 %v413
      %539 = vmatpush1.bf16.msra.mxu0 %v412
      %540 = vmatprep.subr.bf16.mxu0 %v410
      %541 = vmatpush1.bf16.msra.mxu0 %v409
      %542 = vmatprep.subr.bf16.mxu0 0
      %543 = vmatpush2.bf16.msra.mxu0 0
      %544 = vmatprep.subr.bf16.mxu0 0
      %545 = vmatpush2.bf16.msra.mxu0 0
      %546 = vmatprep.subr.bf16.mxu0 0
      %547 = vmatpush2.bf16.msra.mxu0 0
      %548 = vmatprep.subr.bf16.mxu0 0
      %549 = vmatpush2.bf16.msra.mxu0 0
      %550 = vmatprep.subr.bf16.mxu0 0
      %551 = vmatpush2.bf16.msra.mxu0 0
      %552 = vmatprep.subr.bf16.mxu0 0
      %553 = vmatpush2.bf16.msra.mxu0 0
      %554 = vmatprep.subr.bf16.mxu0 0
      %555 = vmatpush2.bf16.msra.mxu0 0
      %556 = vmatprep.subr.bf16.mxu0 0
      %557 = vmatpush2.bf16.msra.mxu0 0
      %558 = vmatprep.mubr.bf16.mxu0 0
      %559 = vmatmul.mubr.bf16.gmra.mxu0 %v524
      %v560 = vpop.f32.mrf.mxu0
      %v561 = vadd.f32 %v367, %v560
      %v562 = vpop.f32.mrf.mxu0
      %v563 = vadd.f32 %v367, %v562
      %v564 = vpop.f32.mrf.mxu0
      %v565 = vpop.f32.mrf.mxu0
      %566 = vdwg.mxu0
      %567 = vmatprep.subr.bf16.mxu0 0
      %568 = vmatpush1.bf16.msra.mxu0 0
      %569 = vmatprep.subr.bf16.mxu0 0
      %570 = vmatpush1.bf16.msra.mxu0 0
      %571 = vmatprep.subr.bf16.mxu0 0
      %572 = vmatpush1.bf16.msra.mxu0 0
      %573 = vmatprep.subr.bf16.mxu0 0
      %574 = vmatpush1.bf16.msra.mxu0 0
      %575 = vmatprep.subr.bf16.mxu0 0
      %576 = vmatpush1.bf16.msra.mxu0 %v420
      %577 = vmatprep.subr.bf16.mxu0 0
      %578 = vmatpush1.bf16.msra.mxu0 %v417
      %579 = vmatprep.subr.bf16.mxu0 0
      %580 = vmatpush1.bf16.msra.mxu0 %v414
      %581 = vmatprep.subr.bf16.mxu0 0
      %582 = vmatpush1.bf16.msra.mxu0 %v411
      %583 = vmatprep.subr.bf16.mxu0 0
      %584 = vmatpush2.bf16.msra.mxu0 0
      %585 = vmatprep.subr.bf16.mxu0 0
      %586 = vmatpush2.bf16.msra.mxu0 0
      %587 = vmatprep.subr.bf16.mxu0 0
      %588 = vmatpush2.bf16.msra.mxu0 0
      %589 = vmatprep.subr.bf16.mxu0 0
      %590 = vmatpush2.bf16.msra.mxu0 0
      %591 = vmatprep.subr.bf16.mxu0 0
      %592 = vmatpush2.bf16.msra.mxu0 0
      %593 = vmatprep.subr.bf16.mxu0 0
      %594 = vmatpush2.bf16.msra.mxu0 0
      %595 = vmatprep.subr.bf16.mxu0 0
      %596 = vmatpush2.bf16.msra.mxu0 0
      %597 = vmatprep.subr.bf16.mxu0 0
      %598 = vmatpush2.bf16.msra.mxu0 0
      %599 = vmatprep.mubr.bf16.mxu0 0
      %600 = vmatmul.mubr.bf16.gmra.mxu0 %v524
      %v601 = vpop.f32.mrf.mxu0
      %v602 = vadd.f32 %v367, %v601
      %v603 = vpop.f32.mrf.mxu0
      %v604 = vpop.f32.mrf.mxu0
      %v605 = vpop.f32.mrf.mxu0
      %606 = vdwg.mxu0
      %607 = vst [vmem:[%s212 + $0x18] sm:$0xff] %v561
      %608 = vst [vmem:[%s212 + $0x20] sm:$0xff] %v563
      %609 = vst [vmem:[%s212 + $0x28] sm:$0xff] %v602
      %s610 = scalar_lea.vmem %s203, 8
      %v611 = vld [vmem:[%s610] sm:$0xf]
      %v613 = vsel %vm433, %v611, 0
      %615 = vmatprep.subr.bf16.mxu0 0
      %616 = vmatpush1.bf16.msra.mxu0 0
      %617 = vmatprep.subr.bf16.mxu0 0
      %618 = vmatpush1.bf16.msra.mxu0 0
      %619 = vmatprep.subr.bf16.mxu0 0
      %620 = vmatpush1.bf16.msra.mxu0 0
      %621 = vmatprep.subr.bf16.mxu0 0
      %622 = vmatpush1.bf16.msra.mxu0 0
      %623 = vmatprep.subr.bf16.mxu0 %v419
      %624 = vmatpush1.bf16.msra.mxu0 %v418
      %625 = vmatprep.subr.bf16.mxu0 %v416
      %626 = vmatpush1.bf16.msra.mxu0 %v415
      %627 = vmatprep.subr.bf16.mxu0 %v413
      %628 = vmatpush1.bf16.msra.mxu0 %v412
      %629 = vmatprep.subr.bf16.mxu0 %v410
      %630 = vmatpush1.bf16.msra.mxu0 %v409
      %631 = vmatprep.subr.bf16.mxu0 0
      %632 = vmatpush2.bf16.msra.mxu0 0
      %633 = vmatprep.subr.bf16.mxu0 0
      %634 = vmatpush2.bf16.msra.mxu0 0
      %635 = vmatprep.subr.bf16.mxu0 0
      %636 = vmatpush2.bf16.msra.mxu0 0
      %637 = vmatprep.subr.bf16.mxu0 0
      %638 = vmatpush2.bf16.msra.mxu0 0
      %639 = vmatprep.subr.bf16.mxu0 0
      %640 = vmatpush2.bf16.msra.mxu0 0
      %641 = vmatprep.subr.bf16.mxu0 0
      %642 = vmatpush2.bf16.msra.mxu0 0
      %643 = vmatprep.subr.bf16.mxu0 0
      %644 = vmatpush2.bf16.msra.mxu0 0
      %645 = vmatprep.subr.bf16.mxu0 0
      %646 = vmatpush2.bf16.msra.mxu0 0
      %647 = vmatprep.mubr.bf16.mxu0 0
      %648 = vmatmul.mubr.bf16.gmra.mxu0 %v613
      %v649 = vpop.f32.mrf.mxu0
      %v650 = vadd.f32 %v367, %v649
      %v651 = vpop.f32.mrf.mxu0
      %v652 = vadd.f32 %v367, %v651
      %v653 = vpop.f32.mrf.mxu0
      %v654 = vpop.f32.mrf.mxu0
      %655 = vdwg.mxu0
      %656 = vmatprep.subr.bf16.mxu0 0
      %657 = vmatpush1.bf16.msra.mxu0 0
      %658 = vmatprep.subr.bf16.mxu0 0
      %659 = vmatpush1.bf16.msra.mxu0 0
      %660 = vmatprep.subr.bf16.mxu0 0
      %661 = vmatpush1.bf16.msra.mxu0 0
      %662 = vmatprep.subr.bf16.mxu0 0
      %663 = vmatpush1.bf16.msra.mxu0 0
      %664 = vmatprep.subr.bf16.mxu0 0
      %665 = vmatpush1.bf16.msra.mxu0 %v420
      %666 = vmatprep.subr.bf16.mxu0 0
      %667 = vmatpush1.bf16.msra.mxu0 %v417
      %668 = vmatprep.subr.bf16.mxu0 0
      %669 = vmatpush1.bf16.msra.mxu0 %v414
      %670 = vmatprep.subr.bf16.mxu0 0
      %671 = vmatpush1.bf16.msra.mxu0 %v411
      %672 = vmatprep.subr.bf16.mxu0 0
      %673 = vmatpush2.bf16.msra.mxu0 0
      %674 = vmatprep.subr.bf16.mxu0 0
      %675 = vmatpush2.bf16.msra.mxu0 0
      %676 = vmatprep.subr.bf16.mxu0 0
      %677 = vmatpush2.bf16.msra.mxu0 0
      %678 = vmatprep.subr.bf16.mxu0 0
      %679 = vmatpush2.bf16.msra.mxu0 0
      %680 = vmatprep.subr.bf16.mxu0 0
      %681 = vmatpush2.bf16.msra.mxu0 0
      %682 = vmatprep.subr.bf16.mxu0 0
      %683 = vmatpush2.bf16.msra.mxu0 0
      %684 = vmatprep.subr.bf16.mxu0 0
      %685 = vmatpush2.bf16.msra.mxu0 0
      %686 = vmatprep.subr.bf16.mxu0 0
      %687 = vmatpush2.bf16.msra.mxu0 0
      %688 = vmatprep.mubr.bf16.mxu0 0
      %689 = vmatmul.mubr.bf16.gmra.mxu0 %v613
      %v690 = vpop.f32.mrf.mxu0
      %v691 = vadd.f32 %v367, %v690
      %v692 = vpop.f32.mrf.mxu0
      %v693 = vpop.f32.mrf.mxu0
      %v694 = vpop.f32.mrf.mxu0
      %695 = vdwg.mxu0
      %696 = vst [vmem:[%s212 + $0x30] sm:$0xff] %v650
      %697 = vst [vmem:[%s212 + $0x38] sm:$0xff] %v652
      %698 = vst [vmem:[%s212 + $0x40] sm:$0xff] %v691
      %s699 = scalar_lea.vmem %s203, 12
      %v700 = vld [vmem:[%s699] sm:$0xf]
      %v702 = vsel %vm433, %v700, 0
      %704 = vmatprep.subr.bf16.mxu0 0
      %705 = vmatpush1.bf16.msra.mxu0 0
      %706 = vmatprep.subr.bf16.mxu0 0
      %707 = vmatpush1.bf16.msra.mxu0 0
      %708 = vmatprep.subr.bf16.mxu0 0
      %709 = vmatpush1.bf16.msra.mxu0 0
      %710 = vmatprep.subr.bf16.mxu0 0
      %711 = vmatpush1.bf16.msra.mxu0 0
      %712 = vmatprep.subr.bf16.mxu0 %v419
      %713 = vmatpush1.bf16.msra.mxu0 %v418
      %714 = vmatprep.subr.bf16.mxu0 %v416
      %715 = vmatpush1.bf16.msra.mxu0 %v415
      %716 = vmatprep.subr.bf16.mxu0 %v413
      %717 = vmatpush1.bf16.msra.mxu0 %v412
      %718 = vmatprep.subr.bf16.mxu0 %v410
      %719 = vmatpush1.bf16.msra.mxu0 %v409
      %720 = vmatprep.subr.bf16.mxu0 0
      %721 = vmatpush2.bf16.msra.mxu0 0
      %722 = vmatprep.subr.bf16.mxu0 0
      %723 = vmatpush2.bf16.msra.mxu0 0
      %724 = vmatprep.subr.bf16.mxu0 0
      %725 = vmatpush2.bf16.msra.mxu0 0
      %726 = vmatprep.subr.bf16.mxu0 0
      %727 = vmatpush2.bf16.msra.mxu0 0
      %728 = vmatprep.subr.bf16.mxu0 0
      %729 = vmatpush2.bf16.msra.mxu0 0
      %730 = vmatprep.subr.bf16.mxu0 0
      %731 = vmatpush2.bf16.msra.mxu0 0
      %732 = vmatprep.subr.bf16.mxu0 0
      %733 = vmatpush2.bf16.msra.mxu0 0
      %734 = vmatprep.subr.bf16.mxu0 0
      %735 = vmatpush2.bf16.msra.mxu0 0
      %736 = vmatprep.mubr.bf16.mxu0 0
      %737 = vmatmul.mubr.bf16.gmra.mxu0 %v702
      %v738 = vpop.f32.mrf.mxu0
      %v739 = vadd.f32 %v367, %v738
      %v740 = vpop.f32.mrf.mxu0
      %v741 = vadd.f32 %v367, %v740
      %v742 = vpop.f32.mrf.mxu0
      %v743 = vpop.f32.mrf.mxu0
      %744 = vdwg.mxu0
      %745 = vmatprep.subr.bf16.mxu0 0
      %746 = vmatpush1.bf16.msra.mxu0 0
      %747 = vmatprep.subr.bf16.mxu0 0
      %748 = vmatpush1.bf16.msra.mxu0 0
      %749 = vmatprep.subr.bf16.mxu0 0
      %750 = vmatpush1.bf16.msra.mxu0 0
      %751 = vmatprep.subr.bf16.mxu0 0
      %752 = vmatpush1.bf16.msra.mxu0 0
      %753 = vmatprep.subr.bf16.mxu0 0
      %754 = vmatpush1.bf16.msra.mxu0 %v420
      %755 = vmatprep.subr.bf16.mxu0 0
      %756 = vmatpush1.bf16.msra.mxu0 %v417
      %757 = vmatprep.subr.bf16.mxu0 0
      %758 = vmatpush1.bf16.msra.mxu0 %v414
      %759 = vmatprep.subr.bf16.mxu0 0
      %760 = vmatpush1.bf16.msra.mxu0 %v411
      %761 = vmatprep.subr.bf16.mxu0 0
      %762 = vmatpush2.bf16.msra.mxu0 0
      %763 = vmatprep.subr.bf16.mxu0 0
      %764 = vmatpush2.bf16.msra.mxu0 0
      %765 = vmatprep.subr.bf16.mxu0 0
      %766 = vmatpush2.bf16.msra.mxu0 0
      %767 = vmatprep.subr.bf16.mxu0 0
      %768 = vmatpush2.bf16.msra.mxu0 0
      %769 = vmatprep.subr.bf16.mxu0 0
      %770 = vmatpush2.bf16.msra.mxu0 0
      %771 = vmatprep.subr.bf16.mxu0 0
      %772 = vmatpush2.bf16.msra.mxu0 0
      %773 = vmatprep.subr.bf16.mxu0 0
      %774 = vmatpush2.bf16.msra.mxu0 0
      %775 = vmatprep.subr.bf16.mxu0 0
      %776 = vmatpush2.bf16.msra.mxu0 0
      %777 = vmatprep.mubr.bf16.mxu0 0
      %778 = vmatmul.mubr.bf16.gmra.mxu0 %v702
      %v779 = vpop.f32.mrf.mxu0
      %v780 = vadd.f32 %v367, %v779
      %v781 = vpop.f32.mrf.mxu0
      %v782 = vpop.f32.mrf.mxu0
      %v783 = vpop.f32.mrf.mxu0
      %784 = vdwg.mxu0
      %785 = vst [vmem:[%s212 + $0x48] sm:$0xff] %v739
      %786 = vst [vmem:[%s212 + $0x50] sm:$0xff] %v741
      %787 = vst [vmem:[%s212 + $0x58] sm:$0xff] %v780
      %s788 = smul.u32 12, %s19
      %p789 = scmp.lt.s32.totalorder %s18, 0
      %s790 = scalar_select %p789, %s18, 0
      %p791 = scmp.lt.s32.totalorder %s788, 23
      %s792 = scalar_select %p791, %s788, 23
      %s793 = smul.addr %s790, 24
      %s794 = sadd.s32 %s792, %s793
      %s795 = smul.addr %s794, 8
      %s796 = scalar_lea.vmem %s3, %s795
      // Predicated region
      $region33: #{hourglass_forward.11} parent=31 // pred_check
        %p797 = pneg %p119
      $region34: #{hourglass_forward.11} parent=31 // pred_check_branch
        %799 = sbr.rel (%p797) target = $region36
      $region35: #{hourglass_forward.11} parent=31 // pred_region
        %s800 = smul.u32 12, %s19
      $region36: #{hourglass_forward.11} parent=31 // pred_fallthru
        _
    $region32: #{hourglass_forward.11} parent=5 // pred_fallthru
      _
    %p801 = scmp.le.s32.totalorder 2, %s9
    // Predicated region
    $region37: #{hourglass_forward.11} parent=5 // pred_check
      %p802 = pneg %p801
    $region38: #{hourglass_forward.11} parent=5 // pred_check_branch
      %804 = sbr.rel (%p802) target = $region40
    $region39: #{hourglass_forward.11} parent=5 // pred_region
      %s805 = ssub.s32 %s9, 2
      // Predicated region
      $region41: #{hourglass_forward.11} parent=39 // pred_check
        %p806 = pneg %p125
      $region42: #{hourglass_forward.11} parent=39 // pred_check_branch
        %808 = sbr.rel (%p806) target = $region44
      $region43: #{hourglass_forward.11} parent=39 // pred_region
        %s809 = smul.u32 12, %s21
        %p810 = scmp.lt.s32.totalorder %s20, 0
        %s811 = scalar_select %p810, %s20, 0
        %p812 = scmp.lt.s32.totalorder %s809, 23
        %s813 = scalar_select %p812, %s809, 23
        %s814 = smul.addr %s811, 24
        %s815 = sadd.s32 %s813, %s814
        %s816 = smul.addr %s815, 8
        %s817 = scalar_lea.vmem %s3, %s816
      $region44: #{hourglass_forward.11} parent=39 // pred_fallthru
        _
    $region40: #{hourglass_forward.11} parent=5 // pred_fallthru
      _
  $region6: #{hourglass_forward.11} parent=0 // loop_footer
    %s13 = sadd.s32 1, %s9
  $region7: #{hourglass_forward.11} parent=0 // loop_footer_branch
    %8 = sbr.rel target = $region3
  $region8: #{hourglass_forward.11} parent=0 // loop_exit
    _

</llo_original>
